<compile_context>
chip_gen: v7x
topology: tpu7x:2x2x1
jax: 0.10.0
libtpu: 0.0.40
codegen_flags: <defaults>
</compile_context>

<pallas_src>
import functools

import jax
import jax.numpy as jnp
from jax.experimental import pallas as pl
from jax.experimental.pallas import tpu as pltpu

_RO = 8     # sublane-aligned zero pad above the data in the scratch planes
_CO = 128   # lane-aligned zero pad left of the data in the scratch planes


def _round_up(x, m):
    return ((x + m - 1) // m) * m


def _retinex_loss_kernel(q1l_ref, q2l_ref, q1h_ref, q2h_ref, inl_ref, inh_ref,
                         out_ref, pad_i, pad_r, pad_g, *, H, W, OH, OW):
    f32 = jnp.float32

    # ------------- reconstruction / equal_R partial sums (per batch) -------------
    def sum11(x):
        return jnp.sum(jnp.sum(x, axis=1, keepdims=True), axis=0, keepdims=True)

    def chans(ref, n):
        return [ref[0, c] for c in range(n)]

    q1l = chans(q1l_ref, 4)
    q2l = chans(q2l_ref, 4)
    q1h = chans(q1h_ref, 4)
    q2h = chans(q2h_ref, 4)
    inl = chans(inl_ref, 3)
    inh = chans(inh_ref, 3)

    def ham_l1(a, b, t):
        # TODO(synk): hamilton_product is not defined in the provided source;
        # this assumes the standard quaternion Hamilton product (channel 0 is
        # the real part) and keeps only the imaginary (i, j, k) components.
        ar, ai, aj, ak = a
        br, bi, bj, bk = b
        x = ar * bi + ai * br + aj * bk - ak * bj
        y = ar * bj - ai * bk + aj * br + ak * bi
        z = ar * bk + ai * bj - aj * bi + ak * br
        e = jnp.abs(x - t[0]) + jnp.abs(y - t[1]) + jnp.abs(z - t[2])
        return sum11(e)

    recon_low = ham_l1(q1l, q2l, inl)
    recon_high = ham_l1(q1h, q2h, inh)
    mutal_low = ham_l1(q1h, q2l, inl)
    mutal_high = ham_l1(q1l, q2h, inh)
    eqr = sum11(jnp.abs(q1l[1] - q1h[1]) + jnp.abs(q1l[2] - q1h[2])
                + jnp.abs(q1l[3] - q1h[3]))

    # ------------- smoothness partial sums (per batch) -------------
    # Scratch planes keep a zero border so every conv / pool pad access is a
    # plain in-range slice load (no roll, no stencil matmul).  Data regions
    # are fully rewritten below, so zeroing once per grid step is enough.
    zero_plane = jnp.zeros(pad_i.shape, f32)
    pad_i[...] = zero_plane
    pad_r[...] = zero_plane
    pad_g[...] = zero_plane

    def stage_gray(pref, src_ref):
        # gray = 0.299 R + 0.587 G + 0.114 B of the quaternion's imaginary
        # channels (1..3); data at offset (_RO, _CO), border stays zero.
        pref[_RO:_RO + H, _CO:_CO + W] = (0.299 * src_ref[0, 1]
                                          + 0.587 * src_ref[0, 2]
                                          + 0.114 * src_ref[0, 3])

    def grad_x(pref):
        # |conv2d(x, [[0, 0], [-1, 1]], stride=1, padding=1)| on the
        # (H+1, W+1) output grid, extended with provably-zero rows/cols.
        return jnp.abs(pref[_RO:_RO + OH, _CO:_CO + OW]
                       - pref[_RO:_RO + OH, _CO - 1:_CO - 1 + OW])

    def grad_y(pref):
        # |conv2d(x, [[0, -1], [0, 1]], stride=1, padding=1)|
        return jnp.abs(pref[_RO:_RO + OH, _CO:_CO + OW]
                       - pref[_RO - 1:_RO - 1 + OH, _CO:_CO + OW])

    def avg_pool3(g):
        # avg_pool2d(kernel=3, stride=1, padding=1, count_include_pad=True)
        pad_g[_RO:_RO + OH, _CO:_CO + OW] = g
        s = jnp.zeros((OH, OW), f32)
        for du in (-1, 0, 1):
            for dv in (-1, 0, 1):
                s = s + pad_g[_RO + du:_RO + du + OH, _CO + dv:_CO + dv + OW]
        return s * (1.0 / 9.0)

    def smooth_partial(i_ref, r_ref):
        # sum over the (H+1, W+1) grid of
        #   |grad_x I| * exp(-10 avgpool(|grad_x R|)) + (same for y),
        # x- and y-branches serialized to keep live-plane pressure low.
        stage_gray(pad_i, i_ref)
        stage_gray(pad_r, r_ref)
        ax = avg_pool3(grad_x(pad_r))
        t = sum11(grad_x(pad_i) * jnp.exp(-10.0 * ax))
        ay = avg_pool3(grad_y(pad_r))
        return t + sum11(grad_y(pad_i) * jnp.exp(-10.0 * ay))

    s_low = smooth_partial(q2l_ref, q1l_ref)    # I = Q2[:, 1:], R = Q1[:, 1:]
    s_high = smooth_partial(q2h_ref, q1h_ref)

    # ------------- accumulate raw per-batch sums into the (1, 8) output -------------
    vals = (recon_low, recon_high, mutal_low, mutal_high, eqr, s_low, s_high)
    lane = jax.lax.broadcasted_iota(jnp.int32, (1, 8), 1)
    packed = jnp.zeros((1, 8), f32)
    for idx, v in enumerate(vals):
        packed = packed + jnp.where(lane == idx, v, 0.0)

    @pl.when(pl.program_id(0) == 0)
    def _():
        out_ref[...] = jnp.zeros((1, 8), f32)

    out_ref[...] = out_ref[...] + packed


def retinex_loss(Q1_low, Q2_low, input_low, Q1_high, Q2_high, input_high):
    f32 = jnp.float32
    B, _, H, W = Q1_low.shape

    # Extended (lane/sublane friendly) conv-output grid; the extra rows/cols
    # are exactly zero in every gradient map, so the sums are unchanged.
    OH = _round_up(H + 1, 8)
    OW = _round_up(W + 1, 128)
    HP = _RO + OH + 8      # >= _RO + OH + 1, sublane aligned
    WP = _CO + OW + 128    # >= _CO + OW + 1, lane aligned

    kernel = functools.partial(_retinex_loss_kernel, H=H, W=W, OH=OH, OW=OW)

    def q_spec():
        return pl.BlockSpec((1, 4, H, W), lambda b: (b, 0, 0, 0))

    def im_spec():
        return pl.BlockSpec((1, 3, H, W), lambda b: (b, 0, 0, 0))

    block_bytes = (4 * 4 + 2 * 3) * H * W * 4            # per-batch input planes
    scratch_bytes = 3 * HP * WP * 4
    live_bytes = 12 * max(H * W, OH * OW) * 4             # live value planes
    vmem_limit = int(min(64 * 1024 * 1024,
                         max(16 * 1024 * 1024,
                             2 * block_bytes + scratch_bytes + live_bytes
                             + (2 << 20))))

    flops = int(B * (H * W * 140 + OH * OW * 70))
    transcendentals = int(4 * B * OH * OW)
    bytes_accessed = int(22 * B * H * W * 4 + 8 * 4)

    out = pl.pallas_call(
        kernel,
        out_shape=jax.ShapeDtypeStruct((1, 8), f32),
        grid=(B,),
        in_specs=[q_spec(), q_spec(), q_spec(), q_spec(), im_spec(), im_spec()],
        out_specs=pl.BlockSpec((1, 8), lambda b: (0, 0)),
        scratch_shapes=[pltpu.VMEM((HP, WP), f32),
                        pltpu.VMEM((HP, WP), f32),
                        pltpu.VMEM((HP, WP), f32)],
        compiler_params=pltpu.CompilerParams(
            dimension_semantics=("arbitrary",),
            vmem_limit_bytes=vmem_limit),
        cost_estimate=pl.CostEstimate(flops=flops,
                                      transcendentals=transcendentals,
                                      bytes_accessed=bytes_accessed),
    )(Q1_low.astype(f32), Q2_low.astype(f32), Q1_high.astype(f32),
      Q2_high.astype(f32), input_low.astype(f32), input_high.astype(f32))

    # Final normalization / weighting on 8 scalars (plain JAX, negligible).
    n_px = float(3 * B * H * W)
    n_sm = float(B * (H + 1) * (W + 1))
    recon_loss_low = out[0, 0] / n_px
    recon_loss_high = out[0, 1] / n_px
    recon_loss_mutal_low = out[0, 2] / n_px
    recon_loss_mutal_high = out[0, 3] / n_px
    equal_R_loss = out[0, 4] / n_px
    Ismooth_loss_low = out[0, 5] / n_sm
    Ismooth_loss_high = out[0, 6] / n_sm
    loss_Decom = (recon_loss_low + recon_loss_high
                  + 0.001 * recon_loss_mutal_low
                  + 0.001 * recon_loss_mutal_high
                  + 0.1 * Ismooth_loss_low + 0.1 * Ismooth_loss_high
                  + 0.01 * equal_R_loss)

    return {
        'loss_Decom': loss_Decom,
        'recon_loss_low': recon_loss_low,
        'recon_loss_high': recon_loss_high,
        'recon_loss_mutal_low': recon_loss_mutal_low,
        'recon_loss_mutal_high': recon_loss_mutal_high,
        'equal_R_loss': equal_R_loss,
        'Ismooth_loss_low': Ismooth_loss_low,
        'Ismooth_loss_high': Ismooth_loss_high,
    }


if __name__ == "__main__":
    key = jax.random.PRNGKey(0)
    k1, k2, k3, k4, k5, k6 = jax.random.split(key, 6)
    B, H, W = 2, 16, 16
    Q1_low = jax.random.uniform(k1, (B, 4, H, W), dtype=jnp.float32)
    Q2_low = jax.random.uniform(k2, (B, 4, H, W), dtype=jnp.float32)
    input_low = jax.random.uniform(k3, (B, 3, H, W), dtype=jnp.float32)
    Q1_high = jax.random.uniform(k4, (B, 4, H, W), dtype=jnp.float32)
    Q2_high = jax.random.uniform(k5, (B, 4, H, W), dtype=jnp.float32)
    input_high = jax.random.uniform(k6, (B, 3, H, W), dtype=jnp.float32)

    out = jax.jit(retinex_loss)(Q1_low, Q2_low, input_low,
                                Q1_high, Q2_high, input_high)
    jax.block_until_ready(out)
    print("KERNEL_OK")
</pallas_src>

<mosaic_0001>
module attributes {stable_mosaic.version = 11 : i64} {
  func.func @_retinex_loss_kernel(%arg0: i32, %arg1: memref<1x4x16x16xf32, #tpu.memory_space<vmem>>, %arg2: memref<1x4x16x16xf32, #tpu.memory_space<vmem>>, %arg3: memref<1x4x16x16xf32, #tpu.memory_space<vmem>>, %arg4: memref<1x4x16x16xf32, #tpu.memory_space<vmem>>, %arg5: memref<1x3x16x16xf32, #tpu.memory_space<vmem>>, %arg6: memref<1x3x16x16xf32, #tpu.memory_space<vmem>>, %arg7: memref<1x8xf32, #tpu.memory_space<vmem>>, %arg8: memref<40x384xf32, #tpu.memory_space<vmem>>, %arg9: memref<40x384xf32, #tpu.memory_space<vmem>>, %arg10: memref<40x384xf32, #tpu.memory_space<vmem>>) attributes {dimension_semantics = [#tpu.dimension_semantics<arbitrary>], iteration_bounds = array<i64: 2>, scalar_prefetch = 0 : i64, scratch_operands = 3 : i64, tpu.core_type = #tpu.core_type<tc>, window_params = [{transform_indices = @transform_0, window_bounds = array<i64: 1, 4, 16, 16>}, {transform_indices = @transform_1, window_bounds = array<i64: 1, 4, 16, 16>}, {transform_indices = @transform_2, window_bounds = array<i64: 1, 4, 16, 16>}, {transform_indices = @transform_3, window_bounds = array<i64: 1, 4, 16, 16>}, {transform_indices = @transform_4, window_bounds = array<i64: 1, 3, 16, 16>}, {transform_indices = @transform_5, window_bounds = array<i64: 1, 3, 16, 16>}, {pipeline_mode = #tpu.pipeline_mode<synchronous>, transform_indices = @transform_6, window_bounds = array<i64: 1, 8>}]} {
    %c0 = arith.constant 0 : index
    %c0_0 = arith.constant 0 : index
    %c0_1 = arith.constant 0 : index
    %c0_2 = arith.constant 0 : index
    %0 = vector.load %arg1[%c0, %c0_0, %c0_1, %c0_2] : memref<1x4x16x16xf32, #tpu.memory_space<vmem>>, vector<1x1x16x16xf32>
    %1 = vector.shape_cast %0 : vector<1x1x16x16xf32> to vector<16x16xf32>
    %c0_3 = arith.constant 0 : index
    %c1 = arith.constant 1 : index
    %c0_4 = arith.constant 0 : index
    %c0_5 = arith.constant 0 : index
    %2 = vector.load %arg1[%c0_3, %c1, %c0_4, %c0_5] : memref<1x4x16x16xf32, #tpu.memory_space<vmem>>, vector<1x1x16x16xf32>
    %3 = vector.shape_cast %2 : vector<1x1x16x16xf32> to vector<16x16xf32>
    %c0_6 = arith.constant 0 : index
    %c2 = arith.constant 2 : index
    %c0_7 = arith.constant 0 : index
    %c0_8 = arith.constant 0 : index
    %4 = vector.load %arg1[%c0_6, %c2, %c0_7, %c0_8] : memref<1x4x16x16xf32, #tpu.memory_space<vmem>>, vector<1x1x16x16xf32>
    %5 = vector.shape_cast %4 : vector<1x1x16x16xf32> to vector<16x16xf32>
    %c0_9 = arith.constant 0 : index
    %c3 = arith.constant 3 : index
    %c0_10 = arith.constant 0 : index
    %c0_11 = arith.constant 0 : index
    %6 = vector.load %arg1[%c0_9, %c3, %c0_10, %c0_11] : memref<1x4x16x16xf32, #tpu.memory_space<vmem>>, vector<1x1x16x16xf32>
    %7 = vector.shape_cast %6 : vector<1x1x16x16xf32> to vector<16x16xf32>
    %c0_12 = arith.constant 0 : index
    %c0_13 = arith.constant 0 : index
    %c0_14 = arith.constant 0 : index
    %c0_15 = arith.constant 0 : index
    %8 = vector.load %arg2[%c0_12, %c0_13, %c0_14, %c0_15] : memref<1x4x16x16xf32, #tpu.memory_space<vmem>>, vector<1x1x16x16xf32>
    %9 = vector.shape_cast %8 : vector<1x1x16x16xf32> to vector<16x16xf32>
    %c0_16 = arith.constant 0 : index
    %c1_17 = arith.constant 1 : index
    %c0_18 = arith.constant 0 : index
    %c0_19 = arith.constant 0 : index
    %10 = vector.load %arg2[%c0_16, %c1_17, %c0_18, %c0_19] : memref<1x4x16x16xf32, #tpu.memory_space<vmem>>, vector<1x1x16x16xf32>
    %11 = vector.shape_cast %10 : vector<1x1x16x16xf32> to vector<16x16xf32>
    %c0_20 = arith.constant 0 : index
    %c2_21 = arith.constant 2 : index
    %c0_22 = arith.constant 0 : index
    %c0_23 = arith.constant 0 : index
    %12 = vector.load %arg2[%c0_20, %c2_21, %c0_22, %c0_23] : memref<1x4x16x16xf32, #tpu.memory_space<vmem>>, vector<1x1x16x16xf32>
    %13 = vector.shape_cast %12 : vector<1x1x16x16xf32> to vector<16x16xf32>
    %c0_24 = arith.constant 0 : index
    %c3_25 = arith.constant 3 : index
    %c0_26 = arith.constant 0 : index
    %c0_27 = arith.constant 0 : index
    %14 = vector.load %arg2[%c0_24, %c3_25, %c0_26, %c0_27] : memref<1x4x16x16xf32, #tpu.memory_space<vmem>>, vector<1x1x16x16xf32>
    %15 = vector.shape_cast %14 : vector<1x1x16x16xf32> to vector<16x16xf32>
    %c0_28 = arith.constant 0 : index
    %c0_29 = arith.constant 0 : index
    %c0_30 = arith.constant 0 : index
    %c0_31 = arith.constant 0 : index
    %16 = vector.load %arg3[%c0_28, %c0_29, %c0_30, %c0_31] : memref<1x4x16x16xf32, #tpu.memory_space<vmem>>, vector<1x1x16x16xf32>
    %17 = vector.shape_cast %16 : vector<1x1x16x16xf32> to vector<16x16xf32>
    %c0_32 = arith.constant 0 : index
    %c1_33 = arith.constant 1 : index
    %c0_34 = arith.constant 0 : index
    %c0_35 = arith.constant 0 : index
    %18 = vector.load %arg3[%c0_32, %c1_33, %c0_34, %c0_35] : memref<1x4x16x16xf32, #tpu.memory_space<vmem>>, vector<1x1x16x16xf32>
    %19 = vector.shape_cast %18 : vector<1x1x16x16xf32> to vector<16x16xf32>
    %c0_36 = arith.constant 0 : index
    %c2_37 = arith.constant 2 : index
    %c0_38 = arith.constant 0 : index
    %c0_39 = arith.constant 0 : index
    %20 = vector.load %arg3[%c0_36, %c2_37, %c0_38, %c0_39] : memref<1x4x16x16xf32, #tpu.memory_space<vmem>>, vector<1x1x16x16xf32>
    %21 = vector.shape_cast %20 : vector<1x1x16x16xf32> to vector<16x16xf32>
    %c0_40 = arith.constant 0 : index
    %c3_41 = arith.constant 3 : index
    %c0_42 = arith.constant 0 : index
    %c0_43 = arith.constant 0 : index
    %22 = vector.load %arg3[%c0_40, %c3_41, %c0_42, %c0_43] : memref<1x4x16x16xf32, #tpu.memory_space<vmem>>, vector<1x1x16x16xf32>
    %23 = vector.shape_cast %22 : vector<1x1x16x16xf32> to vector<16x16xf32>
    %c0_44 = arith.constant 0 : index
    %c0_45 = arith.constant 0 : index
    %c0_46 = arith.constant 0 : index
    %c0_47 = arith.constant 0 : index
    %24 = vector.load %arg4[%c0_44, %c0_45, %c0_46, %c0_47] : memref<1x4x16x16xf32, #tpu.memory_space<vmem>>, vector<1x1x16x16xf32>
    %25 = vector.shape_cast %24 : vector<1x1x16x16xf32> to vector<16x16xf32>
    %c0_48 = arith.constant 0 : index
    %c1_49 = arith.constant 1 : index
    %c0_50 = arith.constant 0 : index
    %c0_51 = arith.constant 0 : index
    %26 = vector.load %arg4[%c0_48, %c1_49, %c0_50, %c0_51] : memref<1x4x16x16xf32, #tpu.memory_space<vmem>>, vector<1x1x16x16xf32>
    %27 = vector.shape_cast %26 : vector<1x1x16x16xf32> to vector<16x16xf32>
    %c0_52 = arith.constant 0 : index
    %c2_53 = arith.constant 2 : index
    %c0_54 = arith.constant 0 : index
    %c0_55 = arith.constant 0 : index
    %28 = vector.load %arg4[%c0_52, %c2_53, %c0_54, %c0_55] : memref<1x4x16x16xf32, #tpu.memory_space<vmem>>, vector<1x1x16x16xf32>
    %29 = vector.shape_cast %28 : vector<1x1x16x16xf32> to vector<16x16xf32>
    %c0_56 = arith.constant 0 : index
    %c3_57 = arith.constant 3 : index
    %c0_58 = arith.constant 0 : index
    %c0_59 = arith.constant 0 : index
    %30 = vector.load %arg4[%c0_56, %c3_57, %c0_58, %c0_59] : memref<1x4x16x16xf32, #tpu.memory_space<vmem>>, vector<1x1x16x16xf32>
    %31 = vector.shape_cast %30 : vector<1x1x16x16xf32> to vector<16x16xf32>
    %c0_60 = arith.constant 0 : index
    %c0_61 = arith.constant 0 : index
    %c0_62 = arith.constant 0 : index
    %c0_63 = arith.constant 0 : index
    %32 = vector.load %arg5[%c0_60, %c0_61, %c0_62, %c0_63] : memref<1x3x16x16xf32, #tpu.memory_space<vmem>>, vector<1x1x16x16xf32>
    %33 = vector.shape_cast %32 : vector<1x1x16x16xf32> to vector<16x16xf32>
    %c0_64 = arith.constant 0 : index
    %c1_65 = arith.constant 1 : index
    %c0_66 = arith.constant 0 : index
    %c0_67 = arith.constant 0 : index
    %34 = vector.load %arg5[%c0_64, %c1_65, %c0_66, %c0_67] : memref<1x3x16x16xf32, #tpu.memory_space<vmem>>, vector<1x1x16x16xf32>
    %35 = vector.shape_cast %34 : vector<1x1x16x16xf32> to vector<16x16xf32>
    %c0_68 = arith.constant 0 : index
    %c2_69 = arith.constant 2 : index
    %c0_70 = arith.constant 0 : index
    %c0_71 = arith.constant 0 : index
    %36 = vector.load %arg5[%c0_68, %c2_69, %c0_70, %c0_71] : memref<1x3x16x16xf32, #tpu.memory_space<vmem>>, vector<1x1x16x16xf32>
    %37 = vector.shape_cast %36 : vector<1x1x16x16xf32> to vector<16x16xf32>
    %c0_72 = arith.constant 0 : index
    %c0_73 = arith.constant 0 : index
    %c0_74 = arith.constant 0 : index
    %c0_75 = arith.constant 0 : index
    %38 = vector.load %arg6[%c0_72, %c0_73, %c0_74, %c0_75] : memref<1x3x16x16xf32, #tpu.memory_space<vmem>>, vector<1x1x16x16xf32>
    %39 = vector.shape_cast %38 : vector<1x1x16x16xf32> to vector<16x16xf32>
    %c0_76 = arith.constant 0 : index
    %c1_77 = arith.constant 1 : index
    %c0_78 = arith.constant 0 : index
    %c0_79 = arith.constant 0 : index
    %40 = vector.load %arg6[%c0_76, %c1_77, %c0_78, %c0_79] : memref<1x3x16x16xf32, #tpu.memory_space<vmem>>, vector<1x1x16x16xf32>
    %41 = vector.shape_cast %40 : vector<1x1x16x16xf32> to vector<16x16xf32>
    %c0_80 = arith.constant 0 : index
    %c2_81 = arith.constant 2 : index
    %c0_82 = arith.constant 0 : index
    %c0_83 = arith.constant 0 : index
    %42 = vector.load %arg6[%c0_80, %c2_81, %c0_82, %c0_83] : memref<1x3x16x16xf32, #tpu.memory_space<vmem>>, vector<1x1x16x16xf32>
    %43 = vector.shape_cast %42 : vector<1x1x16x16xf32> to vector<16x16xf32>
    %44 = arith.mulf %1, %11 : vector<16x16xf32>
    %45 = arith.mulf %3, %9 : vector<16x16xf32>
    %46 = arith.addf %44, %45 : vector<16x16xf32>
    %47 = arith.mulf %5, %15 : vector<16x16xf32>
    %48 = arith.addf %46, %47 : vector<16x16xf32>
    %49 = arith.mulf %7, %13 : vector<16x16xf32>
    %50 = arith.subf %48, %49 : vector<16x16xf32>
    %51 = arith.mulf %1, %13 : vector<16x16xf32>
    %52 = arith.mulf %3, %15 : vector<16x16xf32>
    %53 = arith.subf %51, %52 : vector<16x16xf32>
    %54 = arith.mulf %5, %9 : vector<16x16xf32>
    %55 = arith.addf %53, %54 : vector<16x16xf32>
    %56 = arith.mulf %7, %11 : vector<16x16xf32>
    %57 = arith.addf %55, %56 : vector<16x16xf32>
    %58 = arith.mulf %1, %15 : vector<16x16xf32>
    %59 = arith.mulf %3, %13 : vector<16x16xf32>
    %60 = arith.addf %58, %59 : vector<16x16xf32>
    %61 = arith.mulf %5, %11 : vector<16x16xf32>
    %62 = arith.subf %60, %61 : vector<16x16xf32>
    %63 = arith.mulf %7, %9 : vector<16x16xf32>
    %64 = arith.addf %62, %63 : vector<16x16xf32>
    %65 = arith.subf %50, %33 : vector<16x16xf32>
    %66 = math.absf %65 : vector<16x16xf32>
    %67 = arith.subf %57, %35 : vector<16x16xf32>
    %68 = math.absf %67 : vector<16x16xf32>
    %69 = arith.addf %66, %68 : vector<16x16xf32>
    %70 = arith.subf %64, %37 : vector<16x16xf32>
    %71 = math.absf %70 : vector<16x16xf32>
    %72 = arith.addf %69, %71 : vector<16x16xf32>
    %cst = arith.constant dense<0.000000e+00> : vector<16xf32>
    %73 = vector.multi_reduction <add>, %72, %cst [1] : vector<16x16xf32> to vector<16xf32>
    %74 = vector.shape_cast %73 : vector<16xf32> to vector<16x1xf32>
    %cst_84 = arith.constant dense<0.000000e+00> : vector<1xf32>
    %75 = vector.multi_reduction <add>, %74, %cst_84 [0] : vector<16x1xf32> to vector<1xf32>
    %76 = vector.shape_cast %75 : vector<1xf32> to vector<1x1xf32>
    %77 = arith.mulf %17, %27 : vector<16x16xf32>
    %78 = arith.mulf %19, %25 : vector<16x16xf32>
    %79 = arith.addf %77, %78 : vector<16x16xf32>
    %80 = arith.mulf %21, %31 : vector<16x16xf32>
    %81 = arith.addf %79, %80 : vector<16x16xf32>
    %82 = arith.mulf %23, %29 : vector<16x16xf32>
    %83 = arith.subf %81, %82 : vector<16x16xf32>
    %84 = arith.mulf %17, %29 : vector<16x16xf32>
    %85 = arith.mulf %19, %31 : vector<16x16xf32>
    %86 = arith.subf %84, %85 : vector<16x16xf32>
    %87 = arith.mulf %21, %25 : vector<16x16xf32>
    %88 = arith.addf %86, %87 : vector<16x16xf32>
    %89 = arith.mulf %23, %27 : vector<16x16xf32>
    %90 = arith.addf %88, %89 : vector<16x16xf32>
    %91 = arith.mulf %17, %31 : vector<16x16xf32>
    %92 = arith.mulf %19, %29 : vector<16x16xf32>
    %93 = arith.addf %91, %92 : vector<16x16xf32>
    %94 = arith.mulf %21, %27 : vector<16x16xf32>
    %95 = arith.subf %93, %94 : vector<16x16xf32>
    %96 = arith.mulf %23, %25 : vector<16x16xf32>
    %97 = arith.addf %95, %96 : vector<16x16xf32>
    %98 = arith.subf %83, %39 : vector<16x16xf32>
    %99 = math.absf %98 : vector<16x16xf32>
    %100 = arith.subf %90, %41 : vector<16x16xf32>
    %101 = math.absf %100 : vector<16x16xf32>
    %102 = arith.addf %99, %101 : vector<16x16xf32>
    %103 = arith.subf %97, %43 : vector<16x16xf32>
    %104 = math.absf %103 : vector<16x16xf32>
    %105 = arith.addf %102, %104 : vector<16x16xf32>
    %cst_85 = arith.constant dense<0.000000e+00> : vector<16xf32>
    %106 = vector.multi_reduction <add>, %105, %cst_85 [1] : vector<16x16xf32> to vector<16xf32>
    %107 = vector.shape_cast %106 : vector<16xf32> to vector<16x1xf32>
    %cst_86 = arith.constant dense<0.000000e+00> : vector<1xf32>
    %108 = vector.multi_reduction <add>, %107, %cst_86 [0] : vector<16x1xf32> to vector<1xf32>
    %109 = vector.shape_cast %108 : vector<1xf32> to vector<1x1xf32>
    %110 = arith.mulf %17, %11 : vector<16x16xf32>
    %111 = arith.mulf %19, %9 : vector<16x16xf32>
    %112 = arith.addf %110, %111 : vector<16x16xf32>
    %113 = arith.mulf %21, %15 : vector<16x16xf32>
    %114 = arith.addf %112, %113 : vector<16x16xf32>
    %115 = arith.mulf %23, %13 : vector<16x16xf32>
    %116 = arith.subf %114, %115 : vector<16x16xf32>
    %117 = arith.mulf %17, %13 : vector<16x16xf32>
    %118 = arith.mulf %19, %15 : vector<16x16xf32>
    %119 = arith.subf %117, %118 : vector<16x16xf32>
    %120 = arith.mulf %21, %9 : vector<16x16xf32>
    %121 = arith.addf %119, %120 : vector<16x16xf32>
    %122 = arith.mulf %23, %11 : vector<16x16xf32>
    %123 = arith.addf %121, %122 : vector<16x16xf32>
    %124 = arith.mulf %17, %15 : vector<16x16xf32>
    %125 = arith.mulf %19, %13 : vector<16x16xf32>
    %126 = arith.addf %124, %125 : vector<16x16xf32>
    %127 = arith.mulf %21, %11 : vector<16x16xf32>
    %128 = arith.subf %126, %127 : vector<16x16xf32>
    %129 = arith.mulf %23, %9 : vector<16x16xf32>
    %130 = arith.addf %128, %129 : vector<16x16xf32>
    %131 = arith.subf %116, %33 : vector<16x16xf32>
    %132 = math.absf %131 : vector<16x16xf32>
    %133 = arith.subf %123, %35 : vector<16x16xf32>
    %134 = math.absf %133 : vector<16x16xf32>
    %135 = arith.addf %132, %134 : vector<16x16xf32>
    %136 = arith.subf %130, %37 : vector<16x16xf32>
    %137 = math.absf %136 : vector<16x16xf32>
    %138 = arith.addf %135, %137 : vector<16x16xf32>
    %cst_87 = arith.constant dense<0.000000e+00> : vector<16xf32>
    %139 = vector.multi_reduction <add>, %138, %cst_87 [1] : vector<16x16xf32> to vector<16xf32>
    %140 = vector.shape_cast %139 : vector<16xf32> to vector<16x1xf32>
    %cst_88 = arith.constant dense<0.000000e+00> : vector<1xf32>
    %141 = vector.multi_reduction <add>, %140, %cst_88 [0] : vector<16x1xf32> to vector<1xf32>
    %142 = vector.shape_cast %141 : vector<1xf32> to vector<1x1xf32>
    %143 = arith.mulf %1, %27 : vector<16x16xf32>
    %144 = arith.mulf %3, %25 : vector<16x16xf32>
    %145 = arith.addf %143, %144 : vector<16x16xf32>
    %146 = arith.mulf %5, %31 : vector<16x16xf32>
    %147 = arith.addf %145, %146 : vector<16x16xf32>
    %148 = arith.mulf %7, %29 : vector<16x16xf32>
    %149 = arith.subf %147, %148 : vector<16x16xf32>
    %150 = arith.mulf %1, %29 : vector<16x16xf32>
    %151 = arith.mulf %3, %31 : vector<16x16xf32>
    %152 = arith.subf %150, %151 : vector<16x16xf32>
    %153 = arith.mulf %5, %25 : vector<16x16xf32>
    %154 = arith.addf %152, %153 : vector<16x16xf32>
    %155 = arith.mulf %7, %27 : vector<16x16xf32>
    %156 = arith.addf %154, %155 : vector<16x16xf32>
    %157 = arith.mulf %1, %31 : vector<16x16xf32>
    %158 = arith.mulf %3, %29 : vector<16x16xf32>
    %159 = arith.addf %157, %158 : vector<16x16xf32>
    %160 = arith.mulf %5, %27 : vector<16x16xf32>
    %161 = arith.subf %159, %160 : vector<16x16xf32>
    %162 = arith.mulf %7, %25 : vector<16x16xf32>
    %163 = arith.addf %161, %162 : vector<16x16xf32>
    %164 = arith.subf %149, %39 : vector<16x16xf32>
    %165 = math.absf %164 : vector<16x16xf32>
    %166 = arith.subf %156, %41 : vector<16x16xf32>
    %167 = math.absf %166 : vector<16x16xf32>
    %168 = arith.addf %165, %167 : vector<16x16xf32>
    %169 = arith.subf %163, %43 : vector<16x16xf32>
    %170 = math.absf %169 : vector<16x16xf32>
    %171 = arith.addf %168, %170 : vector<16x16xf32>
    %cst_89 = arith.constant dense<0.000000e+00> : vector<16xf32>
    %172 = vector.multi_reduction <add>, %171, %cst_89 [1] : vector<16x16xf32> to vector<16xf32>
    %173 = vector.shape_cast %172 : vector<16xf32> to vector<16x1xf32>
    %cst_90 = arith.constant dense<0.000000e+00> : vector<1xf32>
    %174 = vector.multi_reduction <add>, %173, %cst_90 [0] : vector<16x1xf32> to vector<1xf32>
    %175 = vector.shape_cast %174 : vector<1xf32> to vector<1x1xf32>
    %176 = arith.subf %3, %19 : vector<16x16xf32>
    %177 = math.absf %176 : vector<16x16xf32>
    %178 = arith.subf %5, %21 : vector<16x16xf32>
    %179 = math.absf %178 : vector<16x16xf32>
    %180 = arith.addf %177, %179 : vector<16x16xf32>
    %181 = arith.subf %7, %23 : vector<16x16xf32>
    %182 = math.absf %181 : vector<16x16xf32>
    %183 = arith.addf %180, %182 : vector<16x16xf32>
    %cst_91 = arith.constant dense<0.000000e+00> : vector<16xf32>
    %184 = vector.multi_reduction <add>, %183, %cst_91 [1] : vector<16x16xf32> to vector<16xf32>
    %185 = vector.shape_cast %184 : vector<16xf32> to vector<16x1xf32>
    %cst_92 = arith.constant dense<0.000000e+00> : vector<1xf32>
    %186 = vector.multi_reduction <add>, %185, %cst_92 [0] : vector<16x1xf32> to vector<1xf32>
    %187 = vector.shape_cast %186 : vector<1xf32> to vector<1x1xf32>
    %cst_93 = arith.constant 0.000000e+00 : f32
    %188 = vector.broadcast %cst_93 : f32 to vector<40x384xf32>
    %c0_94 = arith.constant 0 : index
    %c0_95 = arith.constant 0 : index
    %189 = vector.load %arg8[%c0_94, %c0_95] : memref<40x384xf32, #tpu.memory_space<vmem>>, vector<40x384xf32>
    tpu.vector_store %arg8[%c0_94, %c0_95], %188 {strides = array<i32>} : memref<40x384xf32, #tpu.memory_space<vmem>>, vector<40x384xf32>,
    %c0_96 = arith.constant 0 : index
    %c0_97 = arith.constant 0 : index
    %190 = vector.load %arg9[%c0_96, %c0_97] : memref<40x384xf32, #tpu.memory_space<vmem>>, vector<40x384xf32>
    tpu.vector_store %arg9[%c0_96, %c0_97], %188 {strides = array<i32>} : memref<40x384xf32, #tpu.memory_space<vmem>>, vector<40x384xf32>,
    %c0_98 = arith.constant 0 : index
    %c0_99 = arith.constant 0 : index
    %191 = vector.load %arg10[%c0_98, %c0_99] : memref<40x384xf32, #tpu.memory_space<vmem>>, vector<40x384xf32>
    tpu.vector_store %arg10[%c0_98, %c0_99], %188 {strides = array<i32>} : memref<40x384xf32, #tpu.memory_space<vmem>>, vector<40x384xf32>,
    %c0_100 = arith.constant 0 : index
    %c1_101 = arith.constant 1 : index
    %c0_102 = arith.constant 0 : index
    %c0_103 = arith.constant 0 : index
    %192 = vector.load %arg2[%c0_100, %c1_101, %c0_102, %c0_103] : memref<1x4x16x16xf32, #tpu.memory_space<vmem>>, vector<1x1x16x16xf32>
    %193 = vector.shape_cast %192 : vector<1x1x16x16xf32> to vector<16x16xf32>
    %cst_104 = arith.constant 2.990000e-01 : f32
    %194 = vector.broadcast %cst_104 : f32 to vector<16x16xf32>
    %195 = arith.mulf %194, %193 : vector<16x16xf32>
    %c0_105 = arith.constant 0 : index
    %c2_106 = arith.constant 2 : index
    %c0_107 = arith.constant 0 : index
    %c0_108 = arith.constant 0 : index
    %196 = vector.load %arg2[%c0_105, %c2_106, %c0_107, %c0_108] : memref<1x4x16x16xf32, #tpu.memory_space<vmem>>, vector<1x1x16x16xf32>
    %197 = vector.shape_cast %196 : vector<1x1x16x16xf32> to vector<16x16xf32>
    %cst_109 = arith.constant 5.870000e-01 : f32
    %198 = vector.broadcast %cst_109 : f32 to vector<16x16xf32>
    %199 = arith.mulf %198, %197 : vector<16x16xf32>
    %200 = arith.addf %195, %199 : vector<16x16xf32>
    %c0_110 = arith.constant 0 : index
    %c3_111 = arith.constant 3 : index
    %c0_112 = arith.constant 0 : index
    %c0_113 = arith.constant 0 : index
    %201 = vector.load %arg2[%c0_110, %c3_111, %c0_112, %c0_113] : memref<1x4x16x16xf32, #tpu.memory_space<vmem>>, vector<1x1x16x16xf32>
    %202 = vector.shape_cast %201 : vector<1x1x16x16xf32> to vector<16x16xf32>
    %cst_114 = arith.constant 1.140000e-01 : f32
    %203 = vector.broadcast %cst_114 : f32 to vector<16x16xf32>
    %204 = arith.mulf %203, %202 : vector<16x16xf32>
    %205 = arith.addf %200, %204 : vector<16x16xf32>
    %c8 = arith.constant 8 : index
    %c128 = arith.constant 128 : index
    %206 = vector.load %arg8[%c8, %c128] : memref<40x384xf32, #tpu.memory_space<vmem>>, vector<16x16xf32>
    tpu.vector_store %arg8[%c8, %c128], %205 {strides = array<i32>} : memref<40x384xf32, #tpu.memory_space<vmem>>, vector<16x16xf32>,
    %c0_115 = arith.constant 0 : index
    %c1_116 = arith.constant 1 : index
    %c0_117 = arith.constant 0 : index
    %c0_118 = arith.constant 0 : index
    %207 = vector.load %arg1[%c0_115, %c1_116, %c0_117, %c0_118] : memref<1x4x16x16xf32, #tpu.memory_space<vmem>>, vector<1x1x16x16xf32>
    %208 = vector.shape_cast %207 : vector<1x1x16x16xf32> to vector<16x16xf32>
    %cst_119 = arith.constant 2.990000e-01 : f32
    %209 = vector.broadcast %cst_119 : f32 to vector<16x16xf32>
    %210 = arith.mulf %209, %208 : vector<16x16xf32>
    %c0_120 = arith.constant 0 : index
    %c2_121 = arith.constant 2 : index
    %c0_122 = arith.constant 0 : index
    %c0_123 = arith.constant 0 : index
    %211 = vector.load %arg1[%c0_120, %c2_121, %c0_122, %c0_123] : memref<1x4x16x16xf32, #tpu.memory_space<vmem>>, vector<1x1x16x16xf32>
    %212 = vector.shape_cast %211 : vector<1x1x16x16xf32> to vector<16x16xf32>
    %cst_124 = arith.constant 5.870000e-01 : f32
    %213 = vector.broadcast %cst_124 : f32 to vector<16x16xf32>
    %214 = arith.mulf %213, %212 : vector<16x16xf32>
    %215 = arith.addf %210, %214 : vector<16x16xf32>
    %c0_125 = arith.constant 0 : index
    %c3_126 = arith.constant 3 : index
    %c0_127 = arith.constant 0 : index
    %c0_128 = arith.constant 0 : index
    %216 = vector.load %arg1[%c0_125, %c3_126, %c0_127, %c0_128] : memref<1x4x16x16xf32, #tpu.memory_space<vmem>>, vector<1x1x16x16xf32>
    %217 = vector.shape_cast %216 : vector<1x1x16x16xf32> to vector<16x16xf32>
    %cst_129 = arith.constant 1.140000e-01 : f32
    %218 = vector.broadcast %cst_129 : f32 to vector<16x16xf32>
    %219 = arith.mulf %218, %217 : vector<16x16xf32>
    %220 = arith.addf %215, %219 : vector<16x16xf32>
    %c8_130 = arith.constant 8 : index
    %c128_131 = arith.constant 128 : index
    %221 = vector.load %arg9[%c8_130, %c128_131] : memref<40x384xf32, #tpu.memory_space<vmem>>, vector<16x16xf32>
    tpu.vector_store %arg9[%c8_130, %c128_131], %220 {strides = array<i32>} : memref<40x384xf32, #tpu.memory_space<vmem>>, vector<16x16xf32>,
    %c8_132 = arith.constant 8 : index
    %c128_133 = arith.constant 128 : index
    %222 = vector.load %arg9[%c8_132, %c128_133] : memref<40x384xf32, #tpu.memory_space<vmem>>, vector<24x128xf32>
    %c8_134 = arith.constant 8 : index
    %c127 = arith.constant 127 : index
    %223 = vector.load %arg9[%c8_134, %c127] : memref<40x384xf32, #tpu.memory_space<vmem>>, vector<24x128xf32>
    %224 = arith.subf %222, %223 : vector<24x128xf32>
    %225 = math.absf %224 : vector<24x128xf32>
    %c8_135 = arith.constant 8 : index
    %c128_136 = arith.constant 128 : index
    %226 = vector.load %arg10[%c8_135, %c128_136] : memref<40x384xf32, #tpu.memory_space<vmem>>, vector<24x128xf32>
    tpu.vector_store %arg10[%c8_135, %c128_136], %225 {strides = array<i32>} : memref<40x384xf32, #tpu.memory_space<vmem>>, vector<24x128xf32>,
    %cst_137 = arith.constant 0.000000e+00 : f32
    %227 = vector.broadcast %cst_137 : f32 to vector<24x128xf32>
    %c7 = arith.constant 7 : index
    %c127_138 = arith.constant 127 : index
    %228 = vector.load %arg10[%c7, %c127_138] : memref<40x384xf32, #tpu.memory_space<vmem>>, vector<24x128xf32>
    %229 = arith.addf %227, %228 : vector<24x128xf32>
    %c7_139 = arith.constant 7 : index
    %c128_140 = arith.constant 128 : index
    %230 = vector.load %arg10[%c7_139, %c128_140] : memref<40x384xf32, #tpu.memory_space<vmem>>, vector<24x128xf32>
    %231 = arith.addf %229, %230 : vector<24x128xf32>
    %c7_141 = arith.constant 7 : index
    %c129 = arith.constant 129 : index
    %232 = vector.load %arg10[%c7_141, %c129] : memref<40x384xf32, #tpu.memory_space<vmem>>, vector<24x128xf32>
    %233 = arith.addf %231, %232 : vector<24x128xf32>
    %c8_142 = arith.constant 8 : index
    %c127_143 = arith.constant 127 : index
    %234 = vector.load %arg10[%c8_142, %c127_143] : memref<40x384xf32, #tpu.memory_space<vmem>>, vector<24x128xf32>
    %235 = arith.addf %233, %234 : vector<24x128xf32>
    %c8_144 = arith.constant 8 : index
    %c128_145 = arith.constant 128 : index
    %236 = vector.load %arg10[%c8_144, %c128_145] : memref<40x384xf32, #tpu.memory_space<vmem>>, vector<24x128xf32>
    %237 = arith.addf %235, %236 : vector<24x128xf32>
    %c8_146 = arith.constant 8 : index
    %c129_147 = arith.constant 129 : index
    %238 = vector.load %arg10[%c8_146, %c129_147] : memref<40x384xf32, #tpu.memory_space<vmem>>, vector<24x128xf32>
    %239 = arith.addf %237, %238 : vector<24x128xf32>
    %c9 = arith.constant 9 : index
    %c127_148 = arith.constant 127 : index
    %240 = vector.load %arg10[%c9, %c127_148] : memref<40x384xf32, #tpu.memory_space<vmem>>, vector<24x128xf32>
    %241 = arith.addf %239, %240 : vector<24x128xf32>
    %c9_149 = arith.constant 9 : index
    %c128_150 = arith.constant 128 : index
    %242 = vector.load %arg10[%c9_149, %c128_150] : memref<40x384xf32, #tpu.memory_space<vmem>>, vector<24x128xf32>
    %243 = arith.addf %241, %242 : vector<24x128xf32>
    %c9_151 = arith.constant 9 : index
    %c129_152 = arith.constant 129 : index
    %244 = vector.load %arg10[%c9_151, %c129_152] : memref<40x384xf32, #tpu.memory_space<vmem>>, vector<24x128xf32>
    %245 = arith.addf %243, %244 : vector<24x128xf32>
    %cst_153 = arith.constant 0.111111112 : f32
    %246 = vector.broadcast %cst_153 : f32 to vector<24x128xf32>
    %247 = arith.mulf %245, %246 : vector<24x128xf32>
    %c8_154 = arith.constant 8 : index
    %c128_155 = arith.constant 128 : index
    %248 = vector.load %arg8[%c8_154, %c128_155] : memref<40x384xf32, #tpu.memory_space<vmem>>, vector<24x128xf32>
    %c8_156 = arith.constant 8 : index
    %c127_157 = arith.constant 127 : index
    %249 = vector.load %arg8[%c8_156, %c127_157] : memref<40x384xf32, #tpu.memory_space<vmem>>, vector<24x128xf32>
    %250 = arith.subf %248, %249 : vector<24x128xf32>
    %251 = math.absf %250 : vector<24x128xf32>
    %cst_158 = arith.constant -1.000000e+01 : f32
    %252 = vector.broadcast %cst_158 : f32 to vector<24x128xf32>
    %253 = arith.mulf %252, %247 : vector<24x128xf32>
    %254 = math.exp %253 : vector<24x128xf32>
    %255 = arith.mulf %251, %254 : vector<24x128xf32>
    %cst_159 = arith.constant dense<0.000000e+00> : vector<24xf32>
    %256 = vector.multi_reduction <add>, %255, %cst_159 [1] : vector<24x128xf32> to vector<24xf32>
    %257 = vector.shape_cast %256 : vector<24xf32> to vector<24x1xf32>
    %cst_160 = arith.constant dense<0.000000e+00> : vector<1xf32>
    %258 = vector.multi_reduction <add>, %257, %cst_160 [0] : vector<24x1xf32> to vector<1xf32>
    %259 = vector.shape_cast %258 : vector<1xf32> to vector<1x1xf32>
    %c8_161 = arith.constant 8 : index
    %c128_162 = arith.constant 128 : index
    %260 = vector.load %arg9[%c8_161, %c128_162] : memref<40x384xf32, #tpu.memory_space<vmem>>, vector<24x128xf32>
    %c7_163 = arith.constant 7 : index
    %c128_164 = arith.constant 128 : index
    %261 = vector.load %arg9[%c7_163, %c128_164] : memref<40x384xf32, #tpu.memory_space<vmem>>, vector<24x128xf32>
    %262 = arith.subf %260, %261 : vector<24x128xf32>
    %263 = math.absf %262 : vector<24x128xf32>
    %c8_165 = arith.constant 8 : index
    %c128_166 = arith.constant 128 : index
    %264 = vector.load %arg10[%c8_165, %c128_166] : memref<40x384xf32, #tpu.memory_space<vmem>>, vector<24x128xf32>
    tpu.vector_store %arg10[%c8_165, %c128_166], %263 {strides = array<i32>} : memref<40x384xf32, #tpu.memory_space<vmem>>, vector<24x128xf32>,
    %cst_167 = arith.constant 0.000000e+00 : f32
    %265 = vector.broadcast %cst_167 : f32 to vector<24x128xf32>
    %c7_168 = arith.constant 7 : index
    %c127_169 = arith.constant 127 : index
    %266 = vector.load %arg10[%c7_168, %c127_169] : memref<40x384xf32, #tpu.memory_space<vmem>>, vector<24x128xf32>
    %267 = arith.addf %265, %266 : vector<24x128xf32>
    %c7_170 = arith.constant 7 : index
    %c128_171 = arith.constant 128 : index
    %268 = vector.load %arg10[%c7_170, %c128_171] : memref<40x384xf32, #tpu.memory_space<vmem>>, vector<24x128xf32>
    %269 = arith.addf %267, %268 : vector<24x128xf32>
    %c7_172 = arith.constant 7 : index
    %c129_173 = arith.constant 129 : index
    %270 = vector.load %arg10[%c7_172, %c129_173] : memref<40x384xf32, #tpu.memory_space<vmem>>, vector<24x128xf32>
    %271 = arith.addf %269, %270 : vector<24x128xf32>
    %c8_174 = arith.constant 8 : index
    %c127_175 = arith.constant 127 : index
    %272 = vector.load %arg10[%c8_174, %c127_175] : memref<40x384xf32, #tpu.memory_space<vmem>>, vector<24x128xf32>
    %273 = arith.addf %271, %272 : vector<24x128xf32>
    %c8_176 = arith.constant 8 : index
    %c128_177 = arith.constant 128 : index
    %274 = vector.load %arg10[%c8_176, %c128_177] : memref<40x384xf32, #tpu.memory_space<vmem>>, vector<24x128xf32>
    %275 = arith.addf %273, %274 : vector<24x128xf32>
    %c8_178 = arith.constant 8 : index
    %c129_179 = arith.constant 129 : index
    %276 = vector.load %arg10[%c8_178, %c129_179] : memref<40x384xf32, #tpu.memory_space<vmem>>, vector<24x128xf32>
    %277 = arith.addf %275, %276 : vector<24x128xf32>
    %c9_180 = arith.constant 9 : index
    %c127_181 = arith.constant 127 : index
    %278 = vector.load %arg10[%c9_180, %c127_181] : memref<40x384xf32, #tpu.memory_space<vmem>>, vector<24x128xf32>
    %279 = arith.addf %277, %278 : vector<24x128xf32>
    %c9_182 = arith.constant 9 : index
    %c128_183 = arith.constant 128 : index
    %280 = vector.load %arg10[%c9_182, %c128_183] : memref<40x384xf32, #tpu.memory_space<vmem>>, vector<24x128xf32>
    %281 = arith.addf %279, %280 : vector<24x128xf32>
    %c9_184 = arith.constant 9 : index
    %c129_185 = arith.constant 129 : index
    %282 = vector.load %arg10[%c9_184, %c129_185] : memref<40x384xf32, #tpu.memory_space<vmem>>, vector<24x128xf32>
    %283 = arith.addf %281, %282 : vector<24x128xf32>
    %cst_186 = arith.constant 0.111111112 : f32
    %284 = vector.broadcast %cst_186 : f32 to vector<24x128xf32>
    %285 = arith.mulf %283, %284 : vector<24x128xf32>
    %c8_187 = arith.constant 8 : index
    %c128_188 = arith.constant 128 : index
    %286 = vector.load %arg8[%c8_187, %c128_188] : memref<40x384xf32, #tpu.memory_space<vmem>>, vector<24x128xf32>
    %c7_189 = arith.constant 7 : index
    %c128_190 = arith.constant 128 : index
    %287 = vector.load %arg8[%c7_189, %c128_190] : memref<40x384xf32, #tpu.memory_space<vmem>>, vector<24x128xf32>
    %288 = arith.subf %286, %287 : vector<24x128xf32>
    %289 = math.absf %288 : vector<24x128xf32>
    %cst_191 = arith.constant -1.000000e+01 : f32
    %290 = vector.broadcast %cst_191 : f32 to vector<24x128xf32>
    %291 = arith.mulf %290, %285 : vector<24x128xf32>
    %292 = math.exp %291 : vector<24x128xf32>
    %293 = arith.mulf %289, %292 : vector<24x128xf32>
    %cst_192 = arith.constant dense<0.000000e+00> : vector<24xf32>
    %294 = vector.multi_reduction <add>, %293, %cst_192 [1] : vector<24x128xf32> to vector<24xf32>
    %295 = vector.shape_cast %294 : vector<24xf32> to vector<24x1xf32>
    %cst_193 = arith.constant dense<0.000000e+00> : vector<1xf32>
    %296 = vector.multi_reduction <add>, %295, %cst_193 [0] : vector<24x1xf32> to vector<1xf32>
    %297 = vector.shape_cast %296 : vector<1xf32> to vector<1x1xf32>
    %298 = arith.addf %259, %297 : vector<1x1xf32>
    %c0_194 = arith.constant 0 : index
    %c1_195 = arith.constant 1 : index
    %c0_196 = arith.constant 0 : index
    %c0_197 = arith.constant 0 : index
    %299 = vector.load %arg4[%c0_194, %c1_195, %c0_196, %c0_197] : memref<1x4x16x16xf32, #tpu.memory_space<vmem>>, vector<1x1x16x16xf32>
    %300 = vector.shape_cast %299 : vector<1x1x16x16xf32> to vector<16x16xf32>
    %cst_198 = arith.constant 2.990000e-01 : f32
    %301 = vector.broadcast %cst_198 : f32 to vector<16x16xf32>
    %302 = arith.mulf %301, %300 : vector<16x16xf32>
    %c0_199 = arith.constant 0 : index
    %c2_200 = arith.constant 2 : index
    %c0_201 = arith.constant 0 : index
    %c0_202 = arith.constant 0 : index
    %303 = vector.load %arg4[%c0_199, %c2_200, %c0_201, %c0_202] : memref<1x4x16x16xf32, #tpu.memory_space<vmem>>, vector<1x1x16x16xf32>
    %304 = vector.shape_cast %303 : vector<1x1x16x16xf32> to vector<16x16xf32>
    %cst_203 = arith.constant 5.870000e-01 : f32
    %305 = vector.broadcast %cst_203 : f32 to vector<16x16xf32>
    %306 = arith.mulf %305, %304 : vector<16x16xf32>
    %307 = arith.addf %302, %306 : vector<16x16xf32>
    %c0_204 = arith.constant 0 : index
    %c3_205 = arith.constant 3 : index
    %c0_206 = arith.constant 0 : index
    %c0_207 = arith.constant 0 : index
    %308 = vector.load %arg4[%c0_204, %c3_205, %c0_206, %c0_207] : memref<1x4x16x16xf32, #tpu.memory_space<vmem>>, vector<1x1x16x16xf32>
    %309 = vector.shape_cast %308 : vector<1x1x16x16xf32> to vector<16x16xf32>
    %cst_208 = arith.constant 1.140000e-01 : f32
    %310 = vector.broadcast %cst_208 : f32 to vector<16x16xf32>
    %311 = arith.mulf %310, %309 : vector<16x16xf32>
    %312 = arith.addf %307, %311 : vector<16x16xf32>
    %c8_209 = arith.constant 8 : index
    %c128_210 = arith.constant 128 : index
    %313 = vector.load %arg8[%c8_209, %c128_210] : memref<40x384xf32, #tpu.memory_space<vmem>>, vector<16x16xf32>
    tpu.vector_store %arg8[%c8_209, %c128_210], %312 {strides = array<i32>} : memref<40x384xf32, #tpu.memory_space<vmem>>, vector<16x16xf32>,
    %c0_211 = arith.constant 0 : index
    %c1_212 = arith.constant 1 : index
    %c0_213 = arith.constant 0 : index
    %c0_214 = arith.constant 0 : index
    %314 = vector.load %arg3[%c0_211, %c1_212, %c0_213, %c0_214] : memref<1x4x16x16xf32, #tpu.memory_space<vmem>>, vector<1x1x16x16xf32>
    %315 = vector.shape_cast %314 : vector<1x1x16x16xf32> to vector<16x16xf32>
    %cst_215 = arith.constant 2.990000e-01 : f32
    %316 = vector.broadcast %cst_215 : f32 to vector<16x16xf32>
    %317 = arith.mulf %316, %315 : vector<16x16xf32>
    %c0_216 = arith.constant 0 : index
    %c2_217 = arith.constant 2 : index
    %c0_218 = arith.constant 0 : index
    %c0_219 = arith.constant 0 : index
    %318 = vector.load %arg3[%c0_216, %c2_217, %c0_218, %c0_219] : memref<1x4x16x16xf32, #tpu.memory_space<vmem>>, vector<1x1x16x16xf32>
    %319 = vector.shape_cast %318 : vector<1x1x16x16xf32> to vector<16x16xf32>
    %cst_220 = arith.constant 5.870000e-01 : f32
    %320 = vector.broadcast %cst_220 : f32 to vector<16x16xf32>
    %321 = arith.mulf %320, %319 : vector<16x16xf32>
    %322 = arith.addf %317, %321 : vector<16x16xf32>
    %c0_221 = arith.constant 0 : index
    %c3_222 = arith.constant 3 : index
    %c0_223 = arith.constant 0 : index
    %c0_224 = arith.constant 0 : index
    %323 = vector.load %arg3[%c0_221, %c3_222, %c0_223, %c0_224] : memref<1x4x16x16xf32, #tpu.memory_space<vmem>>, vector<1x1x16x16xf32>
    %324 = vector.shape_cast %323 : vector<1x1x16x16xf32> to vector<16x16xf32>
    %cst_225 = arith.constant 1.140000e-01 : f32
    %325 = vector.broadcast %cst_225 : f32 to vector<16x16xf32>
    %326 = arith.mulf %325, %324 : vector<16x16xf32>
    %327 = arith.addf %322, %326 : vector<16x16xf32>
    %c8_226 = arith.constant 8 : index
    %c128_227 = arith.constant 128 : index
    %328 = vector.load %arg9[%c8_226, %c128_227] : memref<40x384xf32, #tpu.memory_space<vmem>>, vector<16x16xf32>
    tpu.vector_store %arg9[%c8_226, %c128_227], %327 {strides = array<i32>} : memref<40x384xf32, #tpu.memory_space<vmem>>, vector<16x16xf32>,
    %c8_228 = arith.constant 8 : index
    %c128_229 = arith.constant 128 : index
    %329 = vector.load %arg9[%c8_228, %c128_229] : memref<40x384xf32, #tpu.memory_space<vmem>>, vector<24x128xf32>
    %c8_230 = arith.constant 8 : index
    %c127_231 = arith.constant 127 : index
    %330 = vector.load %arg9[%c8_230, %c127_231] : memref<40x384xf32, #tpu.memory_space<vmem>>, vector<24x128xf32>
    %331 = arith.subf %329, %330 : vector<24x128xf32>
    %332 = math.absf %331 : vector<24x128xf32>
    %c8_232 = arith.constant 8 : index
    %c128_233 = arith.constant 128 : index
    %333 = vector.load %arg10[%c8_232, %c128_233] : memref<40x384xf32, #tpu.memory_space<vmem>>, vector<24x128xf32>
    tpu.vector_store %arg10[%c8_232, %c128_233], %332 {strides = array<i32>} : memref<40x384xf32, #tpu.memory_space<vmem>>, vector<24x128xf32>,
    %cst_234 = arith.constant 0.000000e+00 : f32
    %334 = vector.broadcast %cst_234 : f32 to vector<24x128xf32>
    %c7_235 = arith.constant 7 : index
    %c127_236 = arith.constant 127 : index
    %335 = vector.load %arg10[%c7_235, %c127_236] : memref<40x384xf32, #tpu.memory_space<vmem>>, vector<24x128xf32>
    %336 = arith.addf %334, %335 : vector<24x128xf32>
    %c7_237 = arith.constant 7 : index
    %c128_238 = arith.constant 128 : index
    %337 = vector.load %arg10[%c7_237, %c128_238] : memref<40x384xf32, #tpu.memory_space<vmem>>, vector<24x128xf32>
    %338 = arith.addf %336, %337 : vector<24x128xf32>
    %c7_239 = arith.constant 7 : index
    %c129_240 = arith.constant 129 : index
    %339 = vector.load %arg10[%c7_239, %c129_240] : memref<40x384xf32, #tpu.memory_space<vmem>>, vector<24x128xf32>
    %340 = arith.addf %338, %339 : vector<24x128xf32>
    %c8_241 = arith.constant 8 : index
    %c127_242 = arith.constant 127 : index
    %341 = vector.load %arg10[%c8_241, %c127_242] : memref<40x384xf32, #tpu.memory_space<vmem>>, vector<24x128xf32>
    %342 = arith.addf %340, %341 : vector<24x128xf32>
    %c8_243 = arith.constant 8 : index
    %c128_244 = arith.constant 128 : index
    %343 = vector.load %arg10[%c8_243, %c128_244] : memref<40x384xf32, #tpu.memory_space<vmem>>, vector<24x128xf32>
    %344 = arith.addf %342, %343 : vector<24x128xf32>
    %c8_245 = arith.constant 8 : index
    %c129_246 = arith.constant 129 : index
    %345 = vector.load %arg10[%c8_245, %c129_246] : memref<40x384xf32, #tpu.memory_space<vmem>>, vector<24x128xf32>
    %346 = arith.addf %344, %345 : vector<24x128xf32>
    %c9_247 = arith.constant 9 : index
    %c127_248 = arith.constant 127 : index
    %347 = vector.load %arg10[%c9_247, %c127_248] : memref<40x384xf32, #tpu.memory_space<vmem>>, vector<24x128xf32>
    %348 = arith.addf %346, %347 : vector<24x128xf32>
    %c9_249 = arith.constant 9 : index
    %c128_250 = arith.constant 128 : index
    %349 = vector.load %arg10[%c9_249, %c128_250] : memref<40x384xf32, #tpu.memory_space<vmem>>, vector<24x128xf32>
    %350 = arith.addf %348, %349 : vector<24x128xf32>
    %c9_251 = arith.constant 9 : index
    %c129_252 = arith.constant 129 : index
    %351 = vector.load %arg10[%c9_251, %c129_252] : memref<40x384xf32, #tpu.memory_space<vmem>>, vector<24x128xf32>
    %352 = arith.addf %350, %351 : vector<24x128xf32>
    %cst_253 = arith.constant 0.111111112 : f32
    %353 = vector.broadcast %cst_253 : f32 to vector<24x128xf32>
    %354 = arith.mulf %352, %353 : vector<24x128xf32>
    %c8_254 = arith.constant 8 : index
    %c128_255 = arith.constant 128 : index
    %355 = vector.load %arg8[%c8_254, %c128_255] : memref<40x384xf32, #tpu.memory_space<vmem>>, vector<24x128xf32>
    %c8_256 = arith.constant 8 : index
    %c127_257 = arith.constant 127 : index
    %356 = vector.load %arg8[%c8_256, %c127_257] : memref<40x384xf32, #tpu.memory_space<vmem>>, vector<24x128xf32>
    %357 = arith.subf %355, %356 : vector<24x128xf32>
    %358 = math.absf %357 : vector<24x128xf32>
    %cst_258 = arith.constant -1.000000e+01 : f32
    %359 = vector.broadcast %cst_258 : f32 to vector<24x128xf32>
    %360 = arith.mulf %359, %354 : vector<24x128xf32>
    %361 = math.exp %360 : vector<24x128xf32>
    %362 = arith.mulf %358, %361 : vector<24x128xf32>
    %cst_259 = arith.constant dense<0.000000e+00> : vector<24xf32>
    %363 = vector.multi_reduction <add>, %362, %cst_259 [1] : vector<24x128xf32> to vector<24xf32>
    %364 = vector.shape_cast %363 : vector<24xf32> to vector<24x1xf32>
    %cst_260 = arith.constant dense<0.000000e+00> : vector<1xf32>
    %365 = vector.multi_reduction <add>, %364, %cst_260 [0] : vector<24x1xf32> to vector<1xf32>
    %366 = vector.shape_cast %365 : vector<1xf32> to vector<1x1xf32>
    %c8_261 = arith.constant 8 : index
    %c128_262 = arith.constant 128 : index
    %367 = vector.load %arg9[%c8_261, %c128_262] : memref<40x384xf32, #tpu.memory_space<vmem>>, vector<24x128xf32>
    %c7_263 = arith.constant 7 : index
    %c128_264 = arith.constant 128 : index
    %368 = vector.load %arg9[%c7_263, %c128_264] : memref<40x384xf32, #tpu.memory_space<vmem>>, vector<24x128xf32>
    %369 = arith.subf %367, %368 : vector<24x128xf32>
    %370 = math.absf %369 : vector<24x128xf32>
    %c8_265 = arith.constant 8 : index
    %c128_266 = arith.constant 128 : index
    %371 = vector.load %arg10[%c8_265, %c128_266] : memref<40x384xf32, #tpu.memory_space<vmem>>, vector<24x128xf32>
    tpu.vector_store %arg10[%c8_265, %c128_266], %370 {strides = array<i32>} : memref<40x384xf32, #tpu.memory_space<vmem>>, vector<24x128xf32>,
    %cst_267 = arith.constant 0.000000e+00 : f32
    %372 = vector.broadcast %cst_267 : f32 to vector<24x128xf32>
    %c7_268 = arith.constant 7 : index
    %c127_269 = arith.constant 127 : index
    %373 = vector.load %arg10[%c7_268, %c127_269] : memref<40x384xf32, #tpu.memory_space<vmem>>, vector<24x128xf32>
    %374 = arith.addf %372, %373 : vector<24x128xf32>
    %c7_270 = arith.constant 7 : index
    %c128_271 = arith.constant 128 : index
    %375 = vector.load %arg10[%c7_270, %c128_271] : memref<40x384xf32, #tpu.memory_space<vmem>>, vector<24x128xf32>
    %376 = arith.addf %374, %375 : vector<24x128xf32>
    %c7_272 = arith.constant 7 : index
    %c129_273 = arith.constant 129 : index
    %377 = vector.load %arg10[%c7_272, %c129_273] : memref<40x384xf32, #tpu.memory_space<vmem>>, vector<24x128xf32>
    %378 = arith.addf %376, %377 : vector<24x128xf32>
    %c8_274 = arith.constant 8 : index
    %c127_275 = arith.constant 127 : index
    %379 = vector.load %arg10[%c8_274, %c127_275] : memref<40x384xf32, #tpu.memory_space<vmem>>, vector<24x128xf32>
    %380 = arith.addf %378, %379 : vector<24x128xf32>
    %c8_276 = arith.constant 8 : index
    %c128_277 = arith.constant 128 : index
    %381 = vector.load %arg10[%c8_276, %c128_277] : memref<40x384xf32, #tpu.memory_space<vmem>>, vector<24x128xf32>
    %382 = arith.addf %380, %381 : vector<24x128xf32>
    %c8_278 = arith.constant 8 : index
    %c129_279 = arith.constant 129 : index
    %383 = vector.load %arg10[%c8_278, %c129_279] : memref<40x384xf32, #tpu.memory_space<vmem>>, vector<24x128xf32>
    %384 = arith.addf %382, %383 : vector<24x128xf32>
    %c9_280 = arith.constant 9 : index
    %c127_281 = arith.constant 127 : index
    %385 = vector.load %arg10[%c9_280, %c127_281] : memref<40x384xf32, #tpu.memory_space<vmem>>, vector<24x128xf32>
    %386 = arith.addf %384, %385 : vector<24x128xf32>
    %c9_282 = arith.constant 9 : index
    %c128_283 = arith.constant 128 : index
    %387 = vector.load %arg10[%c9_282, %c128_283] : memref<40x384xf32, #tpu.memory_space<vmem>>, vector<24x128xf32>
    %388 = arith.addf %386, %387 : vector<24x128xf32>
    %c9_284 = arith.constant 9 : index
    %c129_285 = arith.constant 129 : index
    %389 = vector.load %arg10[%c9_284, %c129_285] : memref<40x384xf32, #tpu.memory_space<vmem>>, vector<24x128xf32>
    %390 = arith.addf %388, %389 : vector<24x128xf32>
    %cst_286 = arith.constant 0.111111112 : f32
    %391 = vector.broadcast %cst_286 : f32 to vector<24x128xf32>
    %392 = arith.mulf %390, %391 : vector<24x128xf32>
    %c8_287 = arith.constant 8 : index
    %c128_288 = arith.constant 128 : index
    %393 = vector.load %arg8[%c8_287, %c128_288] : memref<40x384xf32, #tpu.memory_space<vmem>>, vector<24x128xf32>
    %c7_289 = arith.constant 7 : index
    %c128_290 = arith.constant 128 : index
    %394 = vector.load %arg8[%c7_289, %c128_290] : memref<40x384xf32, #tpu.memory_space<vmem>>, vector<24x128xf32>
    %395 = arith.subf %393, %394 : vector<24x128xf32>
    %396 = math.absf %395 : vector<24x128xf32>
    %cst_291 = arith.constant -1.000000e+01 : f32
    %397 = vector.broadcast %cst_291 : f32 to vector<24x128xf32>
    %398 = arith.mulf %397, %392 : vector<24x128xf32>
    %399 = math.exp %398 : vector<24x128xf32>
    %400 = arith.mulf %396, %399 : vector<24x128xf32>
    %cst_292 = arith.constant dense<0.000000e+00> : vector<24xf32>
    %401 = vector.multi_reduction <add>, %400, %cst_292 [1] : vector<24x128xf32> to vector<24xf32>
    %402 = vector.shape_cast %401 : vector<24xf32> to vector<24x1xf32>
    %cst_293 = arith.constant dense<0.000000e+00> : vector<1xf32>
    %403 = vector.multi_reduction <add>, %402, %cst_293 [0] : vector<24x1xf32> to vector<1xf32>
    %404 = vector.shape_cast %403 : vector<1xf32> to vector<1x1xf32>
    %405 = arith.addf %366, %404 : vector<1x1xf32>
    %406 = tpu.iota {dimensions = array<i32: 1>} : vector<1x8xi32>
    %cst_294 = arith.constant 0.000000e+00 : f32
    %407 = vector.broadcast %cst_294 : f32 to vector<1x8xf32>
    %c0_i32 = arith.constant 0 : i32
    %408 = vector.broadcast %c0_i32 : i32 to vector<1x8xi32>
    %409 = arith.cmpi eq, %406, %408 : vector<1x8xi32>
    %cst_295 = arith.constant 0.000000e+00 : f32
    %410 = vector.shape_cast %76 : vector<1x1xf32> to vector<1x1xf32>
    %411 = vector.broadcast %410 : vector<1x1xf32> to vector<1x8xf32>
    %412 = vector.broadcast %cst_295 : f32 to vector<1x8xf32>
    %413 = arith.select %409, %411, %412 : vector<1x8xi1>, vector<1x8xf32>
    %414 = arith.addf %407, %413 : vector<1x8xf32>
    %c1_i32 = arith.constant 1 : i32
    %415 = vector.broadcast %c1_i32 : i32 to vector<1x8xi32>
    %416 = arith.cmpi eq, %406, %415 : vector<1x8xi32>
    %cst_296 = arith.constant 0.000000e+00 : f32
    %417 = vector.shape_cast %109 : vector<1x1xf32> to vector<1x1xf32>
    %418 = vector.broadcast %417 : vector<1x1xf32> to vector<1x8xf32>
    %419 = vector.broadcast %cst_296 : f32 to vector<1x8xf32>
    %420 = arith.select %416, %418, %419 : vector<1x8xi1>, vector<1x8xf32>
    %421 = arith.addf %414, %420 : vector<1x8xf32>
    %c2_i32 = arith.constant 2 : i32
    %422 = vector.broadcast %c2_i32 : i32 to vector<1x8xi32>
    %423 = arith.cmpi eq, %406, %422 : vector<1x8xi32>
    %cst_297 = arith.constant 0.000000e+00 : f32
    %424 = vector.shape_cast %142 : vector<1x1xf32> to vector<1x1xf32>
    %425 = vector.broadcast %424 : vector<1x1xf32> to vector<1x8xf32>
    %426 = vector.broadcast %cst_297 : f32 to vector<1x8xf32>
    %427 = arith.select %423, %425, %426 : vector<1x8xi1>, vector<1x8xf32>
    %428 = arith.addf %421, %427 : vector<1x8xf32>
    %c3_i32 = arith.constant 3 : i32
    %429 = vector.broadcast %c3_i32 : i32 to vector<1x8xi32>
    %430 = arith.cmpi eq, %406, %429 : vector<1x8xi32>
    %cst_298 = arith.constant 0.000000e+00 : f32
    %431 = vector.shape_cast %175 : vector<1x1xf32> to vector<1x1xf32>
    %432 = vector.broadcast %431 : vector<1x1xf32> to vector<1x8xf32>
    %433 = vector.broadcast %cst_298 : f32 to vector<1x8xf32>
    %434 = arith.select %430, %432, %433 : vector<1x8xi1>, vector<1x8xf32>
    %435 = arith.addf %428, %434 : vector<1x8xf32>
    %c4_i32 = arith.constant 4 : i32
    %436 = vector.broadcast %c4_i32 : i32 to vector<1x8xi32>
    %437 = arith.cmpi eq, %406, %436 : vector<1x8xi32>
    %cst_299 = arith.constant 0.000000e+00 : f32
    %438 = vector.shape_cast %187 : vector<1x1xf32> to vector<1x1xf32>
    %439 = vector.broadcast %438 : vector<1x1xf32> to vector<1x8xf32>
    %440 = vector.broadcast %cst_299 : f32 to vector<1x8xf32>
    %441 = arith.select %437, %439, %440 : vector<1x8xi1>, vector<1x8xf32>
    %442 = arith.addf %435, %441 : vector<1x8xf32>
    %c5_i32 = arith.constant 5 : i32
    %443 = vector.broadcast %c5_i32 : i32 to vector<1x8xi32>
    %444 = arith.cmpi eq, %406, %443 : vector<1x8xi32>
    %cst_300 = arith.constant 0.000000e+00 : f32
    %445 = vector.shape_cast %298 : vector<1x1xf32> to vector<1x1xf32>
    %446 = vector.broadcast %445 : vector<1x1xf32> to vector<1x8xf32>
    %447 = vector.broadcast %cst_300 : f32 to vector<1x8xf32>
    %448 = arith.select %444, %446, %447 : vector<1x8xi1>, vector<1x8xf32>
    %449 = arith.addf %442, %448 : vector<1x8xf32>
    %c6_i32 = arith.constant 6 : i32
    %450 = vector.broadcast %c6_i32 : i32 to vector<1x8xi32>
    %451 = arith.cmpi eq, %406, %450 : vector<1x8xi32>
    %cst_301 = arith.constant 0.000000e+00 : f32
    %452 = vector.shape_cast %405 : vector<1x1xf32> to vector<1x1xf32>
    %453 = vector.broadcast %452 : vector<1x1xf32> to vector<1x8xf32>
    %454 = vector.broadcast %cst_301 : f32 to vector<1x8xf32>
    %455 = arith.select %451, %453, %454 : vector<1x8xi1>, vector<1x8xf32>
    %456 = arith.addf %449, %455 : vector<1x8xf32>
    %c0_i32_302 = arith.constant 0 : i32
    %457 = arith.cmpi eq, %arg0, %c0_i32_302 : i32
    %458 = arith.extui %457 : i1 to i32
    %c0_i32_303 = arith.constant 0 : i32
    %459 = arith.cmpi ne, %458, %c0_i32_303 : i32
    scf.if %459 {
      %cst_308 = arith.constant 0.000000e+00 : f32
      %463 = vector.broadcast %cst_308 : f32 to vector<1x8xf32>
      %c0_309 = arith.constant 0 : index
      %c0_310 = arith.constant 0 : index
      %464 = vector.load %arg7[%c0_309, %c0_310] : memref<1x8xf32, #tpu.memory_space<vmem>>, vector<1x8xf32>
      tpu.vector_store %arg7[%c0_309, %c0_310], %463 {strides = array<i32>} : memref<1x8xf32, #tpu.memory_space<vmem>>, vector<1x8xf32>,
    } else {
    }
    %c0_304 = arith.constant 0 : index
    %c0_305 = arith.constant 0 : index
    %460 = vector.load %arg7[%c0_304, %c0_305] : memref<1x8xf32, #tpu.memory_space<vmem>>, vector<1x8xf32>
    %461 = arith.addf %460, %456 : vector<1x8xf32>
    %c0_306 = arith.constant 0 : index
    %c0_307 = arith.constant 0 : index
    %462 = vector.load %arg7[%c0_306, %c0_307] : memref<1x8xf32, #tpu.memory_space<vmem>>, vector<1x8xf32>
    tpu.vector_store %arg7[%c0_306, %c0_307], %461 {strides = array<i32>} : memref<1x8xf32, #tpu.memory_space<vmem>>, vector<1x8xf32>,
    return
  }
  func.func @transform_0(%arg0: i32) -> (i32, i32, i32, i32) {
    %c0_i32 = arith.constant 0 : i32
    %c0_i32_0 = arith.constant 0 : i32
    %c0_i32_1 = arith.constant 0 : i32
    %c0_i32_2 = arith.constant 0 : i32
    return %arg0, %c0_i32, %c0_i32_0, %c0_i32_1 : i32, i32, i32, i32
  }
  func.func @transform_1(%arg0: i32) -> (i32, i32, i32, i32) {
    %c0_i32 = arith.constant 0 : i32
    %c0_i32_0 = arith.constant 0 : i32
    %c0_i32_1 = arith.constant 0 : i32
    %c0_i32_2 = arith.constant 0 : i32
    return %arg0, %c0_i32, %c0_i32_0, %c0_i32_1 : i32, i32, i32, i32
  }
  func.func @transform_2(%arg0: i32) -> (i32, i32, i32, i32) {
    %c0_i32 = arith.constant 0 : i32
    %c0_i32_0 = arith.constant 0 : i32
    %c0_i32_1 = arith.constant 0 : i32
    %c0_i32_2 = arith.constant 0 : i32
    return %arg0, %c0_i32, %c0_i32_0, %c0_i32_1 : i32, i32, i32, i32
  }
  func.func @transform_3(%arg0: i32) -> (i32, i32, i32, i32) {
    %c0_i32 = arith.constant 0 : i32
    %c0_i32_0 = arith.constant 0 : i32
    %c0_i32_1 = arith.constant 0 : i32
    %c0_i32_2 = arith.constant 0 : i32
    return %arg0, %c0_i32, %c0_i32_0, %c0_i32_1 : i32, i32, i32, i32
  }
  func.func @transform_4(%arg0: i32) -> (i32, i32, i32, i32) {
    %c0_i32 = arith.constant 0 : i32
    %c0_i32_0 = arith.constant 0 : i32
    %c0_i32_1 = arith.constant 0 : i32
    %c0_i32_2 = arith.constant 0 : i32
    return %arg0, %c0_i32, %c0_i32_0, %c0_i32_1 : i32, i32, i32, i32
  }
  func.func @transform_5(%arg0: i32) -> (i32, i32, i32, i32) {
    %c0_i32 = arith.constant 0 : i32
    %c0_i32_0 = arith.constant 0 : i32
    %c0_i32_1 = arith.constant 0 : i32
    %c0_i32_2 = arith.constant 0 : i32
    return %arg0, %c0_i32, %c0_i32_0, %c0_i32_1 : i32, i32, i32, i32
  }
  func.func @transform_6(%arg0: i32) -> (i32, i32) {
    %c0_i32 = arith.constant 0 : i32
    %c0_i32_0 = arith.constant 0 : i32
    %c0_i32_1 = arith.constant 0 : i32
    return %c0_i32, %c0_i32_0 : i32, i32
  }
}

</mosaic_0001>

<llo_original>
// kernel: retinex_loss.1
$region0: #{retinex_loss.1}
  #allocation0 [shape = 'u32[]', space=smem, size = 0x4, offset = 0x4, fixed_abs, tag = 'smem constant byte address 0x4 - core index']
  #allocation1 [shape = 'u32[144,128]{1,0:T(1,128)}', space=vmem, size = 0x12000, scoped, tag = 'internal scratch']
  #allocation2 [shape = 'f32[40,384]{1,0:T(8,128)}', space=vmem, size = 0xf000, scoped, tag = 'scratch operand']
  #allocation3 [shape = 'f32[40,384]{1,0:T(8,128)}', space=vmem, size = 0xf000, scoped, tag = 'scratch operand']
  #allocation4 [shape = 'f32[40,384]{1,0:T(8,128)}', space=vmem, size = 0xf000, scoped, tag = 'scratch operand']
  %s0 = inlined_call_operand.hbm [shape: f32[2,4,16,16], index: 0, kind: input, shape index: {}]
  %s1 = inlined_call_operand.hbm [shape: f32[2,4,16,16], index: 1, kind: input, shape index: {}]
  %s2 = inlined_call_operand.hbm [shape: f32[2,4,16,16], index: 2, kind: input, shape index: {}]
  %s3 = inlined_call_operand.hbm [shape: f32[2,4,16,16], index: 3, kind: input, shape index: {}]
  %s4 = inlined_call_operand.hbm [shape: f32[2,3,16,16], index: 4, kind: input, shape index: {}]
  %s5 = inlined_call_operand.hbm [shape: f32[2,3,16,16], index: 5, kind: input, shape index: {}]
  %s6 = inlined_call_operand.vmem [shape: f32[1,8], index: 6, kind: output, shape index: {}]
  %s7 = sld [smem:[#allocation0]]
  $region85: #{retinex_loss.1} parent=0
    _
  %s9 = ssub.s32 1, %s7
  %s10 = scalar_select 0, %s9, %s7
  $region1: #{retinex_loss.1} parent=0
    #allocation5 [shape = 'u8[65536]{0}', space=vmem, size = 0x10000, scoped, tag = 'input window, operand 0']
    #allocation6 [shape = 's32[2]{0}', space=sflag, size = 0x8, scoped, tag = 'scoped memory for retinex_loss.1']
    #allocation7 [shape = 'u8[65536]{0}', space=vmem, size = 0x10000, scoped, tag = 'input window, operand 1']
    #allocation8 [shape = 's32[2]{0}', space=sflag, size = 0x8, scoped, tag = 'scoped memory for retinex_loss.1']
    #allocation9 [shape = 'u8[65536]{0}', space=vmem, size = 0x10000, scoped, tag = 'input window, operand 2']
    #allocation10 [shape = 'u8[65536]{0}', space=vmem, size = 0x10000, scoped, tag = 'input window, operand 3']
    #allocation11 [shape = 's32[2]{0}', space=sflag, size = 0x8, scoped, tag = 'scoped memory for retinex_loss.1']
    #allocation12 [shape = 'u8[49152]{0}', space=vmem, size = 0xc000, scoped, tag = 'input window, operand 4']
    #allocation13 [shape = 'u8[49152]{0}', space=vmem, size = 0xc000, scoped, tag = 'input window, operand 5']
    #allocation14 [shape = 's32[2]{0}', space=sflag, size = 0x8, scoped, tag = 'scoped memory for retinex_loss.1']
    %11 = vsyncpa [#allocation6], 0
    %s12 = scalar_lea.sflag [#allocation6], 1
    %13 = vsyncpa %s12, 0
    %14 = vsyncpa [#allocation8], 0
    %s15 = scalar_lea.sflag [#allocation8], 1
    %16 = vsyncpa %s15, 0
    %17 = vsyncpa [#allocation11], 0
    %s18 = scalar_lea.sflag [#allocation11], 1
    %19 = vsyncpa %s18, 0
    %20 = vsyncpa [#allocation14], 0
    %s21 = scalar_lea.sflag [#allocation14], 1
    %22 = vsyncpa %s21, 0
    loop: start=0, step=1, limit=4
    $region2: #{retinex_loss.1} parent=1 // loop_pre_header
      _
    $region3: #{retinex_loss.1} parent=1 // loop_header
      %s24 = sphi 0, %s28
      %p25 = scmp.ge.s32.totalorder %s24, 4
      %s34 = sphi 0, %s36
      %s37 = sphi 0, %s34
      %s38 = sphi 0, %s37
      %s54 = sphi 0, %s38
      %s60 = sphi 0, %s62
      %s63 = sphi 0, %s60
      %s64 = sphi 0, %s63
      %s80 = sphi 0, %s64
      %s86 = sphi 0, %s88
      %s89 = sphi 0, %s86
      %s90 = sphi 0, %s89
      %s106 = sphi 0, %s90
      %s112 = sphi 0, %s114
      %s115 = sphi 0, %s112
      %s116 = sphi 0, %s115
      %s132 = sphi 0, %s116
      %s138 = sphi 0, %s140
      %s141 = sphi 0, %s138
      %s142 = sphi 0, %s141
      %s158 = sphi 0, %s142
      %s164 = sphi 0, %s166
      %s167 = sphi 0, %s164
      %s168 = sphi 0, %s167
      %s184 = sphi 0, %s168
      %s188 = sphi 0, %s188
      %s190 = sphi 0, %s188
      %s191 = sphi 0, %s190
      %s205 = sphi 0, %s191
    $region4: #{retinex_loss.1} parent=1 // loop_header_branch
      %27 = sbr.rel (%p25) target = $region8
    $region5: #{retinex_loss.1} parent=1 // loop_body
      %s29 = ssub.s32 %s24, 1
      %s30 = ssub.s32 %s24, 2
      %s31 = sadd.s32 %s24, 1
      %s32 = ssub.s32 %s24, %s31
      %p33 = scmp.eq.s32.totalorder %s32, 0
      %s35 = sadd.s32 %s34, 1
      %s36 = scalar_select %p33, %s34, %s35
      %p39 = pneg %p33
      %p40 = scmp.eq.s32.totalorder %s24, 1
      %p41 = por %p39, %p40
      %p42 = scmp.ne.s32.totalorder %s34, %s37
      %p43 = scmp.eq.s32.totalorder %s24, 0
      %p44 = por %p42, %p43
      %p45 = scmp.ne.s32.totalorder %s34, %s37
      %p46 = scmp.eq.s32.totalorder %s29, 1
      %p47 = por %p45, %p46
      %p48 = scmp.ne.s32.totalorder %s37, %s38
      %p49 = scmp.eq.s32.totalorder %s29, 0
      %p50 = por %p48, %p49
      %p51 = scmp.ne.s32.totalorder %s37, %s38
      %p52 = scmp.eq.s32.totalorder %s30, 1
      %p53 = por %p51, %p52
      %p55 = scmp.ne.s32.totalorder %s38, %s54
      %p56 = scmp.eq.s32.totalorder %s30, 0
      %p57 = por %p55, %p56
      %s58 = ssub.s32 %s24, %s31
      %p59 = scmp.eq.s32.totalorder %s58, 0
      %s61 = sadd.s32 %s60, 1
      %s62 = scalar_select %p59, %s60, %s61
      %p65 = pneg %p59
      %p66 = scmp.eq.s32.totalorder %s24, 1
      %p67 = por %p65, %p66
      %p68 = scmp.ne.s32.totalorder %s60, %s63
      %p69 = scmp.eq.s32.totalorder %s24, 0
      %p70 = por %p68, %p69
      %p71 = scmp.ne.s32.totalorder %s60, %s63
      %p72 = scmp.eq.s32.totalorder %s29, 1
      %p73 = por %p71, %p72
      %p74 = scmp.ne.s32.totalorder %s63, %s64
      %p75 = scmp.eq.s32.totalorder %s29, 0
      %p76 = por %p74, %p75
      %p77 = scmp.ne.s32.totalorder %s63, %s64
      %p78 = scmp.eq.s32.totalorder %s30, 1
      %p79 = por %p77, %p78
      %p81 = scmp.ne.s32.totalorder %s64, %s80
      %p82 = scmp.eq.s32.totalorder %s30, 0
      %p83 = por %p81, %p82
      %s84 = ssub.s32 %s24, %s31
      %p85 = scmp.eq.s32.totalorder %s84, 0
      %s87 = sadd.s32 %s86, 1
      %s88 = scalar_select %p85, %s86, %s87
      %p91 = pneg %p85
      %p92 = scmp.eq.s32.totalorder %s24, 1
      %p93 = por %p91, %p92
      %p94 = scmp.ne.s32.totalorder %s86, %s89
      %p95 = scmp.eq.s32.totalorder %s24, 0
      %p96 = por %p94, %p95
      %p97 = scmp.ne.s32.totalorder %s86, %s89
      %p98 = scmp.eq.s32.totalorder %s29, 1
      %p99 = por %p97, %p98
      %p100 = scmp.ne.s32.totalorder %s89, %s90
      %p101 = scmp.eq.s32.totalorder %s29, 0
      %p102 = por %p100, %p101
      %p103 = scmp.ne.s32.totalorder %s89, %s90
      %p104 = scmp.eq.s32.totalorder %s30, 1
      %p105 = por %p103, %p104
      %p107 = scmp.ne.s32.totalorder %s90, %s106
      %p108 = scmp.eq.s32.totalorder %s30, 0
      %p109 = por %p107, %p108
      %s110 = ssub.s32 %s24, %s31
      %p111 = scmp.eq.s32.totalorder %s110, 0
      %s113 = sadd.s32 %s112, 1
      %s114 = scalar_select %p111, %s112, %s113
      %p117 = pneg %p111
      %p118 = scmp.eq.s32.totalorder %s24, 1
      %p119 = por %p117, %p118
      %p120 = scmp.ne.s32.totalorder %s112, %s115
      %p121 = scmp.eq.s32.totalorder %s24, 0
      %p122 = por %p120, %p121
      %p123 = scmp.ne.s32.totalorder %s112, %s115
      %p124 = scmp.eq.s32.totalorder %s29, 1
      %p125 = por %p123, %p124
      %p126 = scmp.ne.s32.totalorder %s115, %s116
      %p127 = scmp.eq.s32.totalorder %s29, 0
      %p128 = por %p126, %p127
      %p129 = scmp.ne.s32.totalorder %s115, %s116
      %p130 = scmp.eq.s32.totalorder %s30, 1
      %p131 = por %p129, %p130
      %p133 = scmp.ne.s32.totalorder %s116, %s132
      %p134 = scmp.eq.s32.totalorder %s30, 0
      %p135 = por %p133, %p134
      %s136 = ssub.s32 %s24, %s31
      %p137 = scmp.eq.s32.totalorder %s136, 0
      %s139 = sadd.s32 %s138, 1
      %s140 = scalar_select %p137, %s138, %s139
      %p143 = pneg %p137
      %p144 = scmp.eq.s32.totalorder %s24, 1
      %p145 = por %p143, %p144
      %p146 = scmp.ne.s32.totalorder %s138, %s141
      %p147 = scmp.eq.s32.totalorder %s24, 0
      %p148 = por %p146, %p147
      %p149 = scmp.ne.s32.totalorder %s138, %s141
      %p150 = scmp.eq.s32.totalorder %s29, 1
      %p151 = por %p149, %p150
      %p152 = scmp.ne.s32.totalorder %s141, %s142
      %p153 = scmp.eq.s32.totalorder %s29, 0
      %p154 = por %p152, %p153
      %p155 = scmp.ne.s32.totalorder %s141, %s142
      %p156 = scmp.eq.s32.totalorder %s30, 1
      %p157 = por %p155, %p156
      %p159 = scmp.ne.s32.totalorder %s142, %s158
      %p160 = scmp.eq.s32.totalorder %s30, 0
      %p161 = por %p159, %p160
      %s162 = ssub.s32 %s24, %s31
      %p163 = scmp.eq.s32.totalorder %s162, 0
      %s165 = sadd.s32 %s164, 1
      %s166 = scalar_select %p163, %s164, %s165
      %p169 = pneg %p163
      %p170 = scmp.eq.s32.totalorder %s24, 1
      %p171 = por %p169, %p170
      %p172 = scmp.ne.s32.totalorder %s164, %s167
      %p173 = scmp.eq.s32.totalorder %s24, 0
      %p174 = por %p172, %p173
      %p175 = scmp.ne.s32.totalorder %s164, %s167
      %p176 = scmp.eq.s32.totalorder %s29, 1
      %p177 = por %p175, %p176
      %p178 = scmp.ne.s32.totalorder %s167, %s168
      %p179 = scmp.eq.s32.totalorder %s29, 0
      %p180 = por %p178, %p179
      %p181 = scmp.ne.s32.totalorder %s167, %s168
      %p182 = scmp.eq.s32.totalorder %s30, 1
      %p183 = por %p181, %p182
      %p185 = scmp.ne.s32.totalorder %s168, %s184
      %p186 = scmp.eq.s32.totalorder %s30, 0
      %p187 = por %p185, %p186
      %s189 = sadd.s32 %s188, 1
      %p192 = scmp.eq.s32.totalorder %s24, 1
      %p193 = scmp.ne.s32.totalorder %s188, %s190
      %p194 = scmp.eq.s32.totalorder %s24, 0
      %p195 = por %p193, %p194
      %p196 = scmp.ne.s32.totalorder %s188, %s190
      %p197 = scmp.eq.s32.totalorder %s29, 1
      %p198 = por %p196, %p197
      %p199 = scmp.ne.s32.totalorder %s190, %s191
      %p200 = scmp.eq.s32.totalorder %s29, 0
      %p201 = por %p199, %p200
      %p202 = scmp.ne.s32.totalorder %s190, %s191
      %p203 = scmp.eq.s32.totalorder %s30, 1
      %p204 = por %p202, %p203
      %p206 = scmp.ne.s32.totalorder %s191, %s205
      %p207 = scmp.eq.s32.totalorder %s30, 0
      %p208 = por %p206, %p207
      %p209 = scmp.le.s32.totalorder 1, %s24
      %p210 = scmp.lt.s32.totalorder %s24, 3
      %p211 = pnand %p209, %p210
      %p212 = pneg %p211
      // Predicated region
      $region9: #{retinex_loss.1} parent=5 // pred_check
        _
      $region10: #{retinex_loss.1} parent=5 // pred_check_branch
        %214 = sbr.rel (%p211) target = $region12
      $region11: #{retinex_loss.1} parent=5 // pred_region
        %s215 = ssub.s32 %s24, 1
      $region12: #{retinex_loss.1} parent=5 // pred_fallthru
        _
      %p216 = scmp.lt.s32.totalorder %s24, 2
      // Predicated region
      $region13: #{retinex_loss.1} parent=5 // pred_check
        %p217 = pneg %p216
      $region14: #{retinex_loss.1} parent=5 // pred_check_branch
        %219 = sbr.rel (%p217) target = $region16
      $region15: #{retinex_loss.1} parent=5 // pred_region
        // Predicated region
        $region17: #{retinex_loss.1} parent=15 // pred_check
          %p220 = pneg %p44
        $region18: #{retinex_loss.1} parent=15 // pred_check_branch
          %222 = sbr.rel (%p220) target = $region20
        $region19: #{retinex_loss.1} parent=15 // pred_region
          %s223 = sand.u32 %s34, 1
          %s224 = scalar_lea.sflag [#allocation6], %s223
          %s225 = sand.u32 %s34, 1
          %s226 = smul.addr %s225, 64
          %s227 = scalar_lea.vmem [#allocation5], %s226
          %s229 = ssub.s32 1024, 1024
          %230 = vsyncadd %s224, %s229
          %s231 = smul.addr %s24, 8
          %s232 = smul.addr %s231, 128
          %s233 = scalar_lea.hbm %s0, %s232
          %s234 = sshll.u32 %s227, 4
          %s235 = int_to_ptr.vmem [resolvable:$true] %s234
          %240 = dma.hbm_to_vmem [thread:$0]  %s233, 1024, %s235, %s224, 128, 128, 8
        $region20: #{retinex_loss.1} parent=15 // pred_fallthru
          _
        // Predicated region
        $region21: #{retinex_loss.1} parent=15 // pred_check
          %p241 = pneg %p70
        $region22: #{retinex_loss.1} parent=15 // pred_check_branch
          %243 = sbr.rel (%p241) target = $region24
        $region23: #{retinex_loss.1} parent=15 // pred_region
          %s244 = sand.u32 %s24, 1
          %s245 = scalar_lea.sflag [#allocation8], %s244
          %s246 = sand.u32 %s60, 1
          %s247 = smul.addr %s246, 64
          %s248 = scalar_lea.vmem [#allocation7], %s247
          %s250 = ssub.s32 1024, 1024
          %251 = vsyncadd %s245, %s250
          %s252 = smul.addr %s24, 8
          %s253 = smul.addr %s252, 128
          %s254 = scalar_lea.hbm %s1, %s253
          %s255 = sshll.u32 %s248, 4
          %s256 = int_to_ptr.vmem [resolvable:$true] %s255
          %261 = dma.hbm_to_vmem [thread:$0]  %s254, 1024, %s256, %s245, 128, 128, 8
        $region24: #{retinex_loss.1} parent=15 // pred_fallthru
          _
        // Predicated region
        $region25: #{retinex_loss.1} parent=15 // pred_check
          %p262 = pneg %p96
        $region26: #{retinex_loss.1} parent=15 // pred_check_branch
          %264 = sbr.rel (%p262) target = $region28
        $region27: #{retinex_loss.1} parent=15 // pred_region
          %s265 = sand.u32 %s24, 1
          %s266 = scalar_lea.sflag [#allocation8], %s265
          %s267 = sand.u32 %s86, 1
          %s268 = smul.addr %s267, 64
          %s269 = scalar_lea.vmem [#allocation9], %s268
          %s271 = ssub.s32 1024, 1024
          %272 = vsyncadd %s266, %s271
          %s273 = smul.addr %s24, 8
          %s274 = smul.addr %s273, 128
          %s275 = scalar_lea.hbm %s2, %s274
          %s276 = sshll.u32 %s269, 4
          %s277 = int_to_ptr.vmem [resolvable:$true] %s276
          %282 = dma.hbm_to_vmem [thread:$0]  %s275, 1024, %s277, %s266, 128, 128, 8
        $region28: #{retinex_loss.1} parent=15 // pred_fallthru
          _
        // Predicated region
        $region29: #{retinex_loss.1} parent=15 // pred_check
          %p283 = pneg %p122
        $region30: #{retinex_loss.1} parent=15 // pred_check_branch
          %285 = sbr.rel (%p283) target = $region32
        $region31: #{retinex_loss.1} parent=15 // pred_region
          %s286 = sand.u32 %s24, 1
          %s287 = scalar_lea.sflag [#allocation11], %s286
          %s288 = sand.u32 %s112, 1
          %s289 = smul.addr %s288, 64
          %s290 = scalar_lea.vmem [#allocation10], %s289
          %s292 = ssub.s32 1024, 1024
          %293 = vsyncadd %s287, %s292
          %s294 = smul.addr %s24, 8
          %s295 = smul.addr %s294, 128
          %s296 = scalar_lea.hbm %s3, %s295
          %s297 = sshll.u32 %s290, 4
          %s298 = int_to_ptr.vmem [resolvable:$true] %s297
          %303 = dma.hbm_to_vmem [thread:$0]  %s296, 1024, %s298, %s287, 128, 128, 8
        $region32: #{retinex_loss.1} parent=15 // pred_fallthru
          _
        // Predicated region
        $region33: #{retinex_loss.1} parent=15 // pred_check
          %p304 = pneg %p148
        $region34: #{retinex_loss.1} parent=15 // pred_check_branch
          %306 = sbr.rel (%p304) target = $region36
        $region35: #{retinex_loss.1} parent=15 // pred_region
          %s307 = sand.u32 %s24, 1
          %s308 = scalar_lea.sflag [#allocation11], %s307
          %s309 = sand.u32 %s138, 1
          %s310 = smul.addr %s309, 48
          %s311 = scalar_lea.vmem [#allocation12], %s310
          %s313 = ssub.s32 768, 768
          %314 = vsyncadd %s308, %s313
          %s315 = smul.addr %s24, 6
          %s316 = smul.addr %s315, 128
          %s317 = scalar_lea.hbm %s4, %s316
          %s318 = sshll.u32 %s311, 4
          %s319 = int_to_ptr.vmem [resolvable:$true] %s318
          %324 = dma.hbm_to_vmem [thread:$0]  %s317, 768, %s319, %s308, 128, 128, 8
        $region36: #{retinex_loss.1} parent=15 // pred_fallthru
          _
        // Predicated region
        $region37: #{retinex_loss.1} parent=15 // pred_check
          %p325 = pneg %p174
        $region38: #{retinex_loss.1} parent=15 // pred_check_branch
          %327 = sbr.rel (%p325) target = $region40
        $region39: #{retinex_loss.1} parent=15 // pred_region
          %s328 = sand.u32 %s164, 1
          %s329 = scalar_lea.sflag [#allocation14], %s328
          %s330 = sand.u32 %s164, 1
          %s331 = smul.addr %s330, 48
          %s332 = scalar_lea.vmem [#allocation13], %s331
          %s334 = ssub.s32 768, 768
          %335 = vsyncadd %s329, %s334
          %s336 = smul.addr %s24, 6
          %s337 = smul.addr %s336, 128
          %s338 = scalar_lea.hbm %s5, %s337
          %s339 = sshll.u32 %s332, 4
          %s340 = int_to_ptr.vmem [resolvable:$true] %s339
          %345 = dma.hbm_to_vmem [thread:$0]  %s338, 768, %s340, %s329, 128, 128, 8
        $region40: #{retinex_loss.1} parent=15 // pred_fallthru
          _
      $region16: #{retinex_loss.1} parent=5 // pred_fallthru
        _
      %p346 = scmp.le.s32.totalorder 1, %s24
      %p347 = scmp.lt.s32.totalorder %s24, 3
      %p348 = pnand %p346, %p347
      %p349 = pneg %p348
      // Predicated region
      $region41: #{retinex_loss.1} parent=5 // pred_check
        _
      $region42: #{retinex_loss.1} parent=5 // pred_check_branch
        %351 = sbr.rel (%p348) target = $region44
      $region43: #{retinex_loss.1} parent=5 // pred_region
        %s352 = ssub.s32 %s24, 1
        %s353 = sand.u32 %s37, 1
        %s354 = scalar_lea.sflag [#allocation6], %s353
        %s355 = sand.u32 %s37, 1
        %s356 = smul.addr %s355, 64
        %s357 = scalar_lea.vmem [#allocation5], %s356
        // Predicated region
        $region45: #{retinex_loss.1} parent=43 // pred_check
          %p358 = pneg %p50
        $region46: #{retinex_loss.1} parent=43 // pred_check_branch
          %360 = sbr.rel (%p358) target = $region48
        $region47: #{retinex_loss.1} parent=43 // pred_region
          %361 = dma.done %s354, 1024
        $region48: #{retinex_loss.1} parent=43 // pred_fallthru
          _
        %s362 = sand.u32 %s29, 1
        %s363 = scalar_lea.sflag [#allocation8], %s362
        %s364 = sand.u32 %s63, 1
        %s365 = smul.addr %s364, 64
        %s366 = scalar_lea.vmem [#allocation7], %s365
        // Predicated region
        $region49: #{retinex_loss.1} parent=43 // pred_check
          %p367 = pneg %p76
        $region50: #{retinex_loss.1} parent=43 // pred_check_branch
          %369 = sbr.rel (%p367) target = $region52
        $region51: #{retinex_loss.1} parent=43 // pred_region
          %370 = dma.done %s363, 1024
        $region52: #{retinex_loss.1} parent=43 // pred_fallthru
          _
        %s371 = sand.u32 %s29, 1
        %s372 = scalar_lea.sflag [#allocation8], %s371
        %s373 = sand.u32 %s89, 1
        %s374 = smul.addr %s373, 64
        %s375 = scalar_lea.vmem [#allocation9], %s374
        // Predicated region
        $region53: #{retinex_loss.1} parent=43 // pred_check
          %p376 = pneg %p102
        $region54: #{retinex_loss.1} parent=43 // pred_check_branch
          %378 = sbr.rel (%p376) target = $region56
        $region55: #{retinex_loss.1} parent=43 // pred_region
          %379 = dma.done %s372, 1024
        $region56: #{retinex_loss.1} parent=43 // pred_fallthru
          _
        %s380 = sand.u32 %s29, 1
        %s381 = scalar_lea.sflag [#allocation11], %s380
        %s382 = sand.u32 %s115, 1
        %s383 = smul.addr %s382, 64
        %s384 = scalar_lea.vmem [#allocation10], %s383
        // Predicated region
        $region57: #{retinex_loss.1} parent=43 // pred_check
          %p385 = pneg %p128
        $region58: #{retinex_loss.1} parent=43 // pred_check_branch
          %387 = sbr.rel (%p385) target = $region60
        $region59: #{retinex_loss.1} parent=43 // pred_region
          %388 = dma.done %s381, 1024
        $region60: #{retinex_loss.1} parent=43 // pred_fallthru
          _
        %s389 = sand.u32 %s29, 1
        %s390 = scalar_lea.sflag [#allocation11], %s389
        %s391 = sand.u32 %s141, 1
        %s392 = smul.addr %s391, 48
        %s393 = scalar_lea.vmem [#allocation12], %s392
        // Predicated region
        $region61: #{retinex_loss.1} parent=43 // pred_check
          %p394 = pneg %p154
        $region62: #{retinex_loss.1} parent=43 // pred_check_branch
          %396 = sbr.rel (%p394) target = $region64
        $region63: #{retinex_loss.1} parent=43 // pred_region
          %397 = dma.done %s390, 768
        $region64: #{retinex_loss.1} parent=43 // pred_fallthru
          _
        %s398 = sand.u32 %s167, 1
        %s399 = scalar_lea.sflag [#allocation14], %s398
        %s400 = sand.u32 %s167, 1
        %s401 = smul.addr %s400, 48
        %s402 = scalar_lea.vmem [#allocation13], %s401
        // Predicated region
        $region65: #{retinex_loss.1} parent=43 // pred_check
          %p403 = pneg %p180
        $region66: #{retinex_loss.1} parent=43 // pred_check_branch
          %405 = sbr.rel (%p403) target = $region68
        $region67: #{retinex_loss.1} parent=43 // pred_region
          %406 = dma.done %s399, 768
        $region68: #{retinex_loss.1} parent=43 // pred_fallthru
          _
        %s407 = sand.u32 %s37, 1
        %s408 = scalar_lea.sflag [#allocation6], %s407
        %s409 = sand.u32 %s37, 1
        %s410 = smul.addr %s409, 64
        %s411 = scalar_lea.vmem [#allocation5], %s410
        %p412 = pneg %p50
        %p413 = pneg %p47
        %s414 = sand.u32 %s29, 1
        %s415 = scalar_lea.sflag [#allocation8], %s414
        %s416 = sand.u32 %s63, 1
        %s417 = smul.addr %s416, 64
        %s418 = scalar_lea.vmem [#allocation7], %s417
        %p419 = pneg %p76
        %p420 = pneg %p73
        %s421 = sand.u32 %s29, 1
        %s422 = scalar_lea.sflag [#allocation8], %s421
        %s423 = sand.u32 %s89, 1
        %s424 = smul.addr %s423, 64
        %s425 = scalar_lea.vmem [#allocation9], %s424
        %p426 = pneg %p102
        %p427 = pneg %p99
        %s428 = sand.u32 %s29, 1
        %s429 = scalar_lea.sflag [#allocation11], %s428
        %s430 = sand.u32 %s115, 1
        %s431 = smul.addr %s430, 64
        %s432 = scalar_lea.vmem [#allocation10], %s431
        %p433 = pneg %p128
        %p434 = pneg %p125
        %s435 = sand.u32 %s29, 1
        %s436 = scalar_lea.sflag [#allocation11], %s435
        %s437 = sand.u32 %s141, 1
        %s438 = smul.addr %s437, 48
        %s439 = scalar_lea.vmem [#allocation12], %s438
        %p440 = pneg %p154
        %p441 = pneg %p151
        %s442 = sand.u32 %s167, 1
        %s443 = scalar_lea.sflag [#allocation14], %s442
        %s444 = sand.u32 %s167, 1
        %s445 = smul.addr %s444, 48
        %s446 = scalar_lea.vmem [#allocation13], %s445
        %p447 = pneg %p180
        %p448 = pneg %p177
        %p449 = pneg %p201
        %p450 = pneg %p198
        %v451 = vld [vmem:[%s357] sm:$0xff]
        %v452 = vld [vmem:[%s357 + $0x8] sm:$0xff]
        %s453 = scalar_lea.vmem %s357, 16 [#allocation5]
        %v454 = vld [vmem:[%s453] sm:$0xff]
        %v455 = vld [vmem:[%s453 + $0x8] sm:$0xff]
        %s456 = scalar_lea.vmem %s357, 32 [#allocation5]
        %v457 = vld [vmem:[%s456] sm:$0xff]
        %v458 = vld [vmem:[%s456 + $0x8] sm:$0xff]
        %s459 = scalar_lea.vmem %s357, 48 [#allocation5]
        %v460 = vld [vmem:[%s459] sm:$0xff]
        %v461 = vld [vmem:[%s459 + $0x8] sm:$0xff]
        %v462 = vld [vmem:[%s366] sm:$0xff]
        %v463 = vld [vmem:[%s366 + $0x8] sm:$0xff]
        %s464 = scalar_lea.vmem %s366, 16 [#allocation7]
        %v465 = vld [vmem:[%s464] sm:$0xff]
        %v466 = vld [vmem:[%s464 + $0x8] sm:$0xff]
        %s467 = scalar_lea.vmem %s366, 32 [#allocation7]
        %v468 = vld [vmem:[%s467] sm:$0xff]
        %v469 = vld [vmem:[%s467 + $0x8] sm:$0xff]
        %s470 = scalar_lea.vmem %s366, 48 [#allocation7]
        %v471 = vld [vmem:[%s470] sm:$0xff]
        %v472 = vld [vmem:[%s470 + $0x8] sm:$0xff]
        %v473 = vld [vmem:[%s375] sm:$0xff]
        %v474 = vld [vmem:[%s375 + $0x8] sm:$0xff]
        %s475 = scalar_lea.vmem %s375, 16 [#allocation9]
        %v476 = vld [vmem:[%s475] sm:$0xff]
        %v477 = vld [vmem:[%s475 + $0x8] sm:$0xff]
        %s478 = scalar_lea.vmem %s375, 32 [#allocation9]
        %v479 = vld [vmem:[%s478] sm:$0xff]
        %v480 = vld [vmem:[%s478 + $0x8] sm:$0xff]
        %s481 = scalar_lea.vmem %s375, 48 [#allocation9]
        %v482 = vld [vmem:[%s481] sm:$0xff]
        %v483 = vld [vmem:[%s481 + $0x8] sm:$0xff]
        %v484 = vld [vmem:[%s384] sm:$0xff]
        %v485 = vld [vmem:[%s384 + $0x8] sm:$0xff]
        %s486 = scalar_lea.vmem %s384, 16 [#allocation10]
        %v487 = vld [vmem:[%s486] sm:$0xff]
        %v488 = vld [vmem:[%s486 + $0x8] sm:$0xff]
        %s489 = scalar_lea.vmem %s384, 32 [#allocation10]
        %v490 = vld [vmem:[%s489] sm:$0xff]
        %v491 = vld [vmem:[%s489 + $0x8] sm:$0xff]
        %s492 = scalar_lea.vmem %s384, 48 [#allocation10]
        %v493 = vld [vmem:[%s492] sm:$0xff]
        %v494 = vld [vmem:[%s492 + $0x8] sm:$0xff]
        %v495 = vld [vmem:[%s393] sm:$0xff]
        %v496 = vld [vmem:[%s393 + $0x8] sm:$0xff]
        %s497 = scalar_lea.vmem %s393, 16 [#allocation12]
        %v498 = vld [vmem:[%s497] sm:$0xff]
        %v499 = vld [vmem:[%s497 + $0x8] sm:$0xff]
        %s500 = scalar_lea.vmem %s393, 32 [#allocation12]
        %v501 = vld [vmem:[%s500] sm:$0xff]
        %v502 = vld [vmem:[%s500 + $0x8] sm:$0xff]
        %v503 = vld [vmem:[%s402] sm:$0xff]
        %v504 = vld [vmem:[%s402 + $0x8] sm:$0xff]
        %s505 = scalar_lea.vmem %s402, 16 [#allocation13]
        %v506 = vld [vmem:[%s505] sm:$0xff]
        %v507 = vld [vmem:[%s505 + $0x8] sm:$0xff]
        %s508 = scalar_lea.vmem %s402, 32 [#allocation13]
        %v509 = vld [vmem:[%s508] sm:$0xff]
        %v510 = vld [vmem:[%s508 + $0x8] sm:$0xff]
        %v511 = vmul.f32 %v451, %v465
        %v512 = vmul.f32 %v452, %v466
        %v513 = vmul.f32 %v454, %v462
        %v514 = vmul.f32 %v455, %v463
        %v515 = vadd.f32 %v511, %v513
        %v516 = vadd.f32 %v512, %v514
        %v517 = vmul.f32 %v457, %v471
        %v518 = vmul.f32 %v458, %v472
        %v519 = vadd.f32 %v515, %v517
        %v520 = vadd.f32 %v516, %v518
        %v521 = vmul.f32 %v460, %v468
        %v522 = vmul.f32 %v461, %v469
        %v523 = vsub.f32 %v519, %v521
        %v524 = vsub.f32 %v520, %v522
        %v525 = vmul.f32 %v451, %v468
        %v526 = vmul.f32 %v452, %v469
        %v527 = vmul.f32 %v454, %v471
        %v528 = vmul.f32 %v455, %v472
        %v529 = vsub.f32 %v525, %v527
        %v530 = vsub.f32 %v526, %v528
        %v531 = vmul.f32 %v457, %v462
        %v532 = vmul.f32 %v458, %v463
        %v533 = vadd.f32 %v529, %v531
        %v534 = vadd.f32 %v530, %v532
        %v535 = vmul.f32 %v460, %v465
        %v536 = vmul.f32 %v461, %v466
        %v537 = vadd.f32 %v533, %v535
        %v538 = vadd.f32 %v534, %v536
        %v539 = vmul.f32 %v451, %v471
        %v540 = vmul.f32 %v452, %v472
        %v541 = vmul.f32 %v454, %v468
        %v542 = vmul.f32 %v455, %v469
        %v543 = vadd.f32 %v539, %v541
        %v544 = vadd.f32 %v540, %v542
        %v545 = vmul.f32 %v457, %v465
        %v546 = vmul.f32 %v458, %v466
        %v547 = vsub.f32 %v543, %v545
        %v548 = vsub.f32 %v544, %v546
        %v549 = vmul.f32 %v460, %v462
        %v550 = vmul.f32 %v461, %v463
        %v551 = vadd.f32 %v547, %v549
        %v552 = vadd.f32 %v548, %v550
        %v553 = vsub.f32 %v523, %v495
        %v554 = vsub.f32 %v524, %v496
        %v555 = vand.u32 2147483647, %v553
        %v556 = vand.u32 2147483647, %v554
        %v557 = vsub.f32 %v537, %v498
        %v558 = vsub.f32 %v538, %v499
        %v559 = vand.u32 2147483647, %v557
        %v560 = vand.u32 2147483647, %v558
        %v561 = vadd.f32 %v555, %v559
        %v562 = vadd.f32 %v556, %v560
        %v563 = vsub.f32 %v551, %v501
        %v564 = vsub.f32 %v552, %v502
        %v565 = vand.u32 2147483647, %v563
        %v566 = vand.u32 2147483647, %v564
        %v567 = vadd.f32 %v561, %v565
        %v568 = vadd.f32 %v562, %v566
        %vm569 = vcmask 130048
        %v570 = vsel %vm569, %v567, 0.0
        %571 = vadd.xlane.f32.xlu0 %v570
        %v572 = vpop.xlane.xlu0 %571
        %v573 = vsel %vm569, %v568, 0.0
        %574 = vadd.xlane.f32.xlu0 %v573
        %v575 = vpop.xlane.xlu0 %574
        %v576 = vadd.f32 %v572, %v575
        %v577 = vrot.slane %v576, 4
        %v578 = vadd.f32 %v576, %v577
        %v579 = vrot.slane %v578, 2
        %v580 = vadd.f32 %v578, %v579
        %v581 = vrot.slane %v580, 1
        %v582 = vadd.f32 %v580, %v581
        %v583 = vmul.f32 %v473, %v487
        %v584 = vmul.f32 %v474, %v488
        %v585 = vmul.f32 %v476, %v484
        %v586 = vmul.f32 %v477, %v485
        %v587 = vadd.f32 %v583, %v585
        %v588 = vadd.f32 %v584, %v586
        %v589 = vmul.f32 %v479, %v493
        %v590 = vmul.f32 %v480, %v494
        %v591 = vadd.f32 %v587, %v589
        %v592 = vadd.f32 %v588, %v590
        %v593 = vmul.f32 %v482, %v490
        %v594 = vmul.f32 %v483, %v491
        %v595 = vsub.f32 %v591, %v593
        %v596 = vsub.f32 %v592, %v594
        %v597 = vmul.f32 %v473, %v490
        %v598 = vmul.f32 %v474, %v491
        %v599 = vmul.f32 %v476, %v493
        %v600 = vmul.f32 %v477, %v494
        %v601 = vsub.f32 %v597, %v599
        %v602 = vsub.f32 %v598, %v600
        %v603 = vmul.f32 %v479, %v484
        %v604 = vmul.f32 %v480, %v485
        %v605 = vadd.f32 %v601, %v603
        %v606 = vadd.f32 %v602, %v604
        %v607 = vmul.f32 %v482, %v487
        %v608 = vmul.f32 %v483, %v488
        %v609 = vadd.f32 %v605, %v607
        %v610 = vadd.f32 %v606, %v608
        %v611 = vmul.f32 %v473, %v493
        %v612 = vmul.f32 %v474, %v494
        %v613 = vmul.f32 %v476, %v490
        %v614 = vmul.f32 %v477, %v491
        %v615 = vadd.f32 %v611, %v613
        %v616 = vadd.f32 %v612, %v614
        %v617 = vmul.f32 %v479, %v487
        %v618 = vmul.f32 %v480, %v488
        %v619 = vsub.f32 %v615, %v617
        %v620 = vsub.f32 %v616, %v618
        %v621 = vmul.f32 %v482, %v484
        %v622 = vmul.f32 %v483, %v485
        %v623 = vadd.f32 %v619, %v621
        %v624 = vadd.f32 %v620, %v622
        %v625 = vsub.f32 %v595, %v503
        %v626 = vsub.f32 %v596, %v504
        %v627 = vand.u32 2147483647, %v625
        %v628 = vand.u32 2147483647, %v626
        %v629 = vsub.f32 %v609, %v506
        %v630 = vsub.f32 %v610, %v507
        %v631 = vand.u32 2147483647, %v629
        %v632 = vand.u32 2147483647, %v630
        %v633 = vadd.f32 %v627, %v631
        %v634 = vadd.f32 %v628, %v632
        %v635 = vsub.f32 %v623, %v509
        %v636 = vsub.f32 %v624, %v510
        %v637 = vand.u32 2147483647, %v635
        %v638 = vand.u32 2147483647, %v636
        %v639 = vadd.f32 %v633, %v637
        %v640 = vadd.f32 %v634, %v638
        %v641 = vsel %vm569, %v639, 0.0
        %642 = vadd.xlane.f32.xlu0 %v641
        %v643 = vpop.xlane.xlu0 %642
        %v644 = vsel %vm569, %v640, 0.0
        %645 = vadd.xlane.f32.xlu0 %v644
        %v646 = vpop.xlane.xlu0 %645
        %v647 = vadd.f32 %v643, %v646
        %v648 = vrot.slane %v647, 4
        %v649 = vadd.f32 %v647, %v648
        %v650 = vrot.slane %v649, 2
        %v651 = vadd.f32 %v649, %v650
        %v652 = vrot.slane %v651, 1
        %v653 = vadd.f32 %v651, %v652
        %v654 = vmul.f32 %v473, %v465
        %v655 = vmul.f32 %v474, %v466
        %v656 = vmul.f32 %v476, %v462
        %v657 = vmul.f32 %v477, %v463
        %v658 = vadd.f32 %v654, %v656
        %v659 = vadd.f32 %v655, %v657
        %v660 = vmul.f32 %v479, %v471
        %v661 = vmul.f32 %v480, %v472
        %v662 = vadd.f32 %v658, %v660
        %v663 = vadd.f32 %v659, %v661
        %v664 = vmul.f32 %v482, %v468
        %v665 = vmul.f32 %v483, %v469
        %v666 = vsub.f32 %v662, %v664
        %v667 = vsub.f32 %v663, %v665
        %v668 = vmul.f32 %v473, %v468
        %v669 = vmul.f32 %v474, %v469
        %v670 = vmul.f32 %v476, %v471
        %v671 = vmul.f32 %v477, %v472
        %v672 = vsub.f32 %v668, %v670
        %v673 = vsub.f32 %v669, %v671
        %v674 = vmul.f32 %v479, %v462
        %v675 = vmul.f32 %v480, %v463
        %v676 = vadd.f32 %v672, %v674
        %v677 = vadd.f32 %v673, %v675
        %v678 = vmul.f32 %v482, %v465
        %v679 = vmul.f32 %v483, %v466
        %v680 = vadd.f32 %v676, %v678
        %v681 = vadd.f32 %v677, %v679
        %v682 = vmul.f32 %v473, %v471
        %v683 = vmul.f32 %v474, %v472
        %v684 = vmul.f32 %v476, %v468
        %v685 = vmul.f32 %v477, %v469
        %v686 = vadd.f32 %v682, %v684
        %v687 = vadd.f32 %v683, %v685
        %v688 = vmul.f32 %v479, %v465
        %v689 = vmul.f32 %v480, %v466
        %v690 = vsub.f32 %v686, %v688
        %v691 = vsub.f32 %v687, %v689
        %v692 = vmul.f32 %v482, %v462
        %v693 = vmul.f32 %v483, %v463
        %v694 = vadd.f32 %v690, %v692
        %v695 = vadd.f32 %v691, %v693
        %v696 = vsub.f32 %v666, %v495
        %v697 = vsub.f32 %v667, %v496
        %v698 = vand.u32 2147483647, %v696
        %v699 = vand.u32 2147483647, %v697
        %v700 = vsub.f32 %v680, %v498
        %v701 = vsub.f32 %v681, %v499
        %v702 = vand.u32 2147483647, %v700
        %v703 = vand.u32 2147483647, %v701
        %v704 = vadd.f32 %v698, %v702
        %v705 = vadd.f32 %v699, %v703
        %v706 = vsub.f32 %v694, %v501
        %v707 = vsub.f32 %v695, %v502
        %v708 = vand.u32 2147483647, %v706
        %v709 = vand.u32 2147483647, %v707
        %v710 = vadd.f32 %v704, %v708
        %v711 = vadd.f32 %v705, %v709
        %v712 = vsel %vm569, %v710, 0.0
        %713 = vadd.xlane.f32.xlu0 %v712
        %v714 = vpop.xlane.xlu0 %713
        %v715 = vsel %vm569, %v711, 0.0
        %716 = vadd.xlane.f32.xlu0 %v715
        %v717 = vpop.xlane.xlu0 %716
        %v718 = vadd.f32 %v714, %v717
        %v719 = vrot.slane %v718, 4
        %v720 = vadd.f32 %v718, %v719
        %v721 = vrot.slane %v720, 2
        %v722 = vadd.f32 %v720, %v721
        %v723 = vrot.slane %v722, 1
        %v724 = vadd.f32 %v722, %v723
        %v725 = vmul.f32 %v451, %v487
        %v726 = vmul.f32 %v452, %v488
        %v727 = vmul.f32 %v454, %v484
        %v728 = vmul.f32 %v455, %v485
        %v729 = vadd.f32 %v725, %v727
        %v730 = vadd.f32 %v726, %v728
        %v731 = vmul.f32 %v457, %v493
        %v732 = vmul.f32 %v458, %v494
        %v733 = vadd.f32 %v729, %v731
        %v734 = vadd.f32 %v730, %v732
        %v735 = vmul.f32 %v460, %v490
        %v736 = vmul.f32 %v461, %v491
        %v737 = vsub.f32 %v733, %v735
        %v738 = vsub.f32 %v734, %v736
        %v739 = vmul.f32 %v451, %v490
        %v740 = vmul.f32 %v452, %v491
        %v741 = vmul.f32 %v454, %v493
        %v742 = vmul.f32 %v455, %v494
        %v743 = vsub.f32 %v739, %v741
        %v744 = vsub.f32 %v740, %v742
        %v745 = vmul.f32 %v457, %v484
        %v746 = vmul.f32 %v458, %v485
        %v747 = vadd.f32 %v743, %v745
        %v748 = vadd.f32 %v744, %v746
        %v749 = vmul.f32 %v460, %v487
        %v750 = vmul.f32 %v461, %v488
        %v751 = vadd.f32 %v747, %v749
        %v752 = vadd.f32 %v748, %v750
        %v753 = vmul.f32 %v451, %v493
        %v754 = vmul.f32 %v452, %v494
        %v755 = vmul.f32 %v454, %v490
        %v756 = vmul.f32 %v455, %v491
        %v757 = vadd.f32 %v753, %v755
        %v758 = vadd.f32 %v754, %v756
        %v759 = vmul.f32 %v457, %v487
        %v760 = vmul.f32 %v458, %v488
        %v761 = vsub.f32 %v757, %v759
        %v762 = vsub.f32 %v758, %v760
        %v763 = vmul.f32 %v460, %v484
        %v764 = vmul.f32 %v461, %v485
        %v765 = vadd.f32 %v761, %v763
        %v766 = vadd.f32 %v762, %v764
        %v767 = vsub.f32 %v737, %v503
        %v768 = vsub.f32 %v738, %v504
        %v769 = vand.u32 2147483647, %v767
        %v770 = vand.u32 2147483647, %v768
        %v771 = vsub.f32 %v751, %v506
        %v772 = vsub.f32 %v752, %v507
        %v773 = vand.u32 2147483647, %v771
        %v774 = vand.u32 2147483647, %v772
        %v775 = vadd.f32 %v769, %v773
        %v776 = vadd.f32 %v770, %v774
        %v777 = vsub.f32 %v765, %v509
        %v778 = vsub.f32 %v766, %v510
        %v779 = vand.u32 2147483647, %v777
        %v780 = vand.u32 2147483647, %v778
        %v781 = vadd.f32 %v775, %v779
        %v782 = vadd.f32 %v776, %v780
        %v783 = vsel %vm569, %v781, 0.0
        %784 = vadd.xlane.f32.xlu0 %v783
        %v785 = vpop.xlane.xlu0 %784
        %v786 = vsel %vm569, %v782, 0.0
        %787 = vadd.xlane.f32.xlu0 %v786
        %v788 = vpop.xlane.xlu0 %787
        %v789 = vadd.f32 %v785, %v788
        %v790 = vrot.slane %v789, 4
        %v791 = vadd.f32 %v789, %v790
        %v792 = vrot.slane %v791, 2
        %v793 = vadd.f32 %v791, %v792
        %v794 = vrot.slane %v793, 1
        %v795 = vadd.f32 %v793, %v794
        %v796 = vsub.f32 %v454, %v476
        %v797 = vsub.f32 %v455, %v477
        %v798 = vand.u32 2147483647, %v796
        %v799 = vand.u32 2147483647, %v797
        %v800 = vsub.f32 %v457, %v479
        %v801 = vsub.f32 %v458, %v480
        %v802 = vand.u32 2147483647, %v800
        %v803 = vand.u32 2147483647, %v801
        %v804 = vadd.f32 %v798, %v802
        %v805 = vadd.f32 %v799, %v803
        %v806 = vsub.f32 %v460, %v482
        %v807 = vsub.f32 %v461, %v483
        %v808 = vand.u32 2147483647, %v806
        %v809 = vand.u32 2147483647, %v807
        %v810 = vadd.f32 %v804, %v808
        %v811 = vadd.f32 %v805, %v809
        %v812 = vsel %vm569, %v810, 0.0
        %813 = vadd.xlane.f32.xlu0 %v812
        %v814 = vpop.xlane.xlu0 %813
        %v815 = vsel %vm569, %v811, 0.0
        %816 = vadd.xlane.f32.xlu0 %v815
        %v817 = vpop.xlane.xlu0 %816
        %v818 = vadd.f32 %v814, %v817
        %v819 = vrot.slane %v818, 4
        %v820 = vadd.f32 %v818, %v819
        %v821 = vrot.slane %v820, 2
        %v822 = vadd.f32 %v820, %v821
        %v823 = vrot.slane %v822, 1
        %v824 = vadd.f32 %v822, %v823
        %825 = vst [vmem:[#allocation2] sm:$0xff] 0.0
        %826 = vst [vmem:[#allocation2 + $0x8] sm:$0xff] 0.0
        %827 = vst [vmem:[#allocation2 + $0x10] sm:$0xff] 0.0
        %828 = vst [vmem:[#allocation2 + $0x18] sm:$0xff] 0.0
        %829 = vst [vmem:[#allocation2 + $0x20] sm:$0xff] 0.0
        %830 = vst [vmem:[#allocation2 + $0x28] sm:$0xff] 0.0
        %831 = vst [vmem:[#allocation2 + $0x30] sm:$0xff] 0.0
        %832 = vst [vmem:[#allocation2 + $0x38] sm:$0xff] 0.0
        %833 = vst [vmem:[#allocation2 + $0x40] sm:$0xff] 0.0
        %834 = vst [vmem:[#allocation2 + $0x48] sm:$0xff] 0.0
        %835 = vst [vmem:[#allocation2 + $0x50] sm:$0xff] 0.0
        %836 = vst [vmem:[#allocation2 + $0x58] sm:$0xff] 0.0
        %837 = vst [vmem:[#allocation2 + $0x60] sm:$0xff] 0.0
        %838 = vst [vmem:[#allocation2 + $0x68] sm:$0xff] 0.0
        %839 = vst [vmem:[#allocation2 + $0x70] sm:$0xff] 0.0
        %840 = vst [vmem:[#allocation3] sm:$0xff] 0.0
        %841 = vst [vmem:[#allocation3 + $0x8] sm:$0xff] 0.0
        %842 = vst [vmem:[#allocation3 + $0x10] sm:$0xff] 0.0
        %843 = vst [vmem:[#allocation3 + $0x18] sm:$0xff] 0.0
        %844 = vst [vmem:[#allocation3 + $0x20] sm:$0xff] 0.0
        %845 = vst [vmem:[#allocation3 + $0x28] sm:$0xff] 0.0
        %846 = vst [vmem:[#allocation3 + $0x30] sm:$0xff] 0.0
        %847 = vst [vmem:[#allocation3 + $0x38] sm:$0xff] 0.0
        %848 = vst [vmem:[#allocation3 + $0x40] sm:$0xff] 0.0
        %849 = vst [vmem:[#allocation3 + $0x48] sm:$0xff] 0.0
        %850 = vst [vmem:[#allocation3 + $0x50] sm:$0xff] 0.0
        %851 = vst [vmem:[#allocation3 + $0x58] sm:$0xff] 0.0
        %852 = vst [vmem:[#allocation3 + $0x60] sm:$0xff] 0.0
        %853 = vst [vmem:[#allocation3 + $0x68] sm:$0xff] 0.0
        %854 = vst [vmem:[#allocation3 + $0x70] sm:$0xff] 0.0
        %855 = vst [vmem:[#allocation4] sm:$0xff] 0.0
        %856 = vst [vmem:[#allocation4 + $0x8] sm:$0xff] 0.0
        %857 = vst [vmem:[#allocation4 + $0x10] sm:$0xff] 0.0
        %858 = vst [vmem:[#allocation4 + $0x18] sm:$0xff] 0.0
        %859 = vst [vmem:[#allocation4 + $0x20] sm:$0xff] 0.0
        %860 = vst [vmem:[#allocation4 + $0x28] sm:$0xff] 0.0
        %861 = vst [vmem:[#allocation4 + $0x30] sm:$0xff] 0.0
        %862 = vst [vmem:[#allocation4 + $0x38] sm:$0xff] 0.0
        %863 = vst [vmem:[#allocation4 + $0x40] sm:$0xff] 0.0
        %864 = vst [vmem:[#allocation4 + $0x48] sm:$0xff] 0.0
        %865 = vst [vmem:[#allocation4 + $0x50] sm:$0xff] 0.0
        %866 = vst [vmem:[#allocation4 + $0x58] sm:$0xff] 0.0
        %867 = vst [vmem:[#allocation4 + $0x60] sm:$0xff] 0.0
        %868 = vst [vmem:[#allocation4 + $0x68] sm:$0xff] 0.0
        %869 = vst [vmem:[#allocation4 + $0x70] sm:$0xff] 0.0
        %v870 = vld [vmem:[%s464] sm:$0xff]
        %v871 = vld [vmem:[%s464 + $0x8] sm:$0xff]
        %v872 = vmul.f32 %v870, 0.299
        %v873 = vmul.f32 %v871, 0.299
        %v874 = vld [vmem:[%s467] sm:$0xff]
        %v875 = vld [vmem:[%s467 + $0x8] sm:$0xff]
        %v876 = vmul.f32 %v874, 0.587
        %v877 = vmul.f32 %v875, 0.587
        %v878 = vadd.f32 %v872, %v876
        %v879 = vadd.f32 %v873, %v877
        %v880 = vld [vmem:[%s470] sm:$0xff]
        %v881 = vld [vmem:[%s470 + $0x8] sm:$0xff]
        %v882 = vmul.f32 %v880, 0.114
        %v883 = vmul.f32 %v881, 0.114
        %v884 = vadd.f32 %v878, %v882
        %v885 = vadd.f32 %v879, %v883
        %886 = vst.msk [vmem:[#allocation2 + $0x20] sm:$0xff] %vm569, %v884
        %887 = vst.msk [vmem:[#allocation2 + $0x38] sm:$0xff] %vm569, %v885
        %v888 = vld [vmem:[%s453] sm:$0xff]
        %v889 = vld [vmem:[%s453 + $0x8] sm:$0xff]
        %v890 = vmul.f32 %v888, 0.299
        %v891 = vmul.f32 %v889, 0.299
        %v892 = vld [vmem:[%s456] sm:$0xff]
        %v893 = vld [vmem:[%s456 + $0x8] sm:$0xff]
        %v894 = vmul.f32 %v892, 0.587
        %v895 = vmul.f32 %v893, 0.587
        %v896 = vadd.f32 %v890, %v894
        %v897 = vadd.f32 %v891, %v895
        %v898 = vld [vmem:[%s459] sm:$0xff]
        %v899 = vld [vmem:[%s459 + $0x8] sm:$0xff]
        %v900 = vmul.f32 %v898, 0.114
        %v901 = vmul.f32 %v899, 0.114
        %v902 = vadd.f32 %v896, %v900
        %v903 = vadd.f32 %v897, %v901
        %904 = vst.msk [vmem:[#allocation3 + $0x20] sm:$0xff] %vm569, %v902
        %905 = vst.msk [vmem:[#allocation3 + $0x38] sm:$0xff] %vm569, %v903
        %v906 = vld [vmem:[#allocation3 + $0x20] sm:$0xff]
        %v907 = vld [vmem:[#allocation3 + $0x38] sm:$0xff]
        %v908 = vld [vmem:[#allocation3 + $0x50] sm:$0xff]
        %v909 = vld [vmem:[#allocation3 + $0x18] sm:$0xff]
        %v910 = vld [vmem:[#allocation3 + $0x30] sm:$0xff]
        %v911 = vld [vmem:[#allocation3 + $0x48] sm:$0xff]
        %918 = vrot.lane.b32.xlu0 %v909, 1
        %v919 = vpop.permute.xlu0 %918
        %920 = vrot.lane.b32.xlu0 %v906, 1
        %v921 = vpop.permute.xlu0 %920
        %922 = vrot.lane.b32.xlu0 %v910, 1
        %v923 = vpop.permute.xlu0 %922
        %924 = vrot.lane.b32.xlu0 %v907, 1
        %v925 = vpop.permute.xlu0 %924
        %926 = vrot.lane.b32.xlu0 %v911, 1
        %v927 = vpop.permute.xlu0 %926
        %928 = vrot.lane.b32.xlu0 %v908, 1
        %v929 = vpop.permute.xlu0 %928
        %vm930 = vcmask 7168
        %v931 = vsel %vm930, %v919, %v921
        %v932 = vsel %vm930, %v923, %v925
        %v933 = vsel %vm930, %v927, %v929
        %v937 = vsub.f32 %v906, %v931
        %v938 = vsub.f32 %v907, %v932
        %v939 = vsub.f32 %v908, %v933
        %v940 = vand.u32 2147483647, %v937
        %v941 = vand.u32 2147483647, %v938
        %v942 = vand.u32 2147483647, %v939
        %943 = vst [vmem:[#allocation4 + $0x20] sm:$0xff] %v940
        %944 = vst [vmem:[#allocation4 + $0x38] sm:$0xff] %v941
        %945 = vst [vmem:[#allocation4 + $0x50] sm:$0xff] %v942
        %v946 = vld [vmem:[#allocation4] sm:$0x80]
        %v947 = vld [vmem:[#allocation4 + $0x8] sm:$0x80]
        %v948 = vld [vmem:[#allocation4 + $0x18] sm:$0xff]
        %v949 = vld [vmem:[#allocation4 + $0x20] sm:$0xff]
        %v950 = vld [vmem:[#allocation4 + $0x30] sm:$0xff]
        %v951 = vld [vmem:[#allocation4 + $0x38] sm:$0xff]
        %v952 = vld [vmem:[#allocation4 + $0x48] sm:$0x7f]
        %v953 = vld [vmem:[#allocation4 + $0x50] sm:$0x7f]
        %v954 = vadd.f32 %v946, 0.0
        %v955 = vadd.f32 %v947, 0.0
        %v956 = vadd.f32 %v948, 0.0
        %v957 = vadd.f32 %v949, 0.0
        %v958 = vadd.f32 %v950, 0.0
        %v959 = vadd.f32 %v951, 0.0
        %v960 = vadd.f32 %v952, 0.0
        %v961 = vadd.f32 %v953, 0.0
        %966 = vrot.lane.b32.xlu0 %v947, 127
        %v967 = vpop.permute.xlu0 %966
        %968 = vrot.lane.b32.xlu0 %v949, 127
        %v969 = vpop.permute.xlu0 %968
        %970 = vrot.lane.b32.xlu0 %v951, 127
        %v971 = vpop.permute.xlu0 %970
        %972 = vrot.lane.b32.xlu0 %v953, 127
        %v973 = vpop.permute.xlu0 %972
        %v978 = vadd.f32 %v954, %v967
        %v979 = vadd.f32 %v955, %v967
        %v980 = vadd.f32 %v956, %v969
        %v981 = vadd.f32 %v957, %v969
        %v982 = vadd.f32 %v958, %v971
        %v983 = vadd.f32 %v959, %v971
        %v984 = vadd.f32 %v960, %v973
        %v985 = vadd.f32 %v961, %v973
        %v986 = vld [vmem:[#allocation4 + $0x10] sm:$0x80]
        %v987 = vld [vmem:[#allocation4 + $0x28] sm:$0xff]
        %v988 = vld [vmem:[#allocation4 + $0x40] sm:$0xff]
        %v989 = vld [vmem:[#allocation4 + $0x58] sm:$0x7f]
        %994 = vrot.lane.b32.xlu0 %v947, 126
        %v995 = vpop.permute.xlu0 %994
        %996 = vrot.lane.b32.xlu0 %v986, 126
        %v997 = vpop.permute.xlu0 %996
        %998 = vrot.lane.b32.xlu0 %v949, 126
        %v999 = vpop.permute.xlu0 %998
        %1000 = vrot.lane.b32.xlu0 %v987, 126
        %v1001 = vpop.permute.xlu0 %1000
        %1002 = vrot.lane.b32.xlu0 %v951, 126
        %v1003 = vpop.permute.xlu0 %1002
        %1004 = vrot.lane.b32.xlu0 %v988, 126
        %v1005 = vpop.permute.xlu0 %1004
        %1006 = vrot.lane.b32.xlu0 %v953, 126
        %v1007 = vpop.permute.xlu0 %1006
        %1008 = vrot.lane.b32.xlu0 %v989, 126
        %v1009 = vpop.permute.xlu0 %1008
        %vm1010 = vcmask 1031168
        %v1011 = vsel %vm1010, %v995, %v997
        %v1012 = vsel %vm1010, %v999, %v1001
        %v1013 = vsel %vm1010, %v1003, %v1005
        %v1014 = vsel %vm1010, %v1007, %v1009
        %v1023 = vadd.f32 %v978, %v995
        %v1024 = vadd.f32 %v979, %v1011
        %v1025 = vadd.f32 %v980, %v999
        %v1026 = vadd.f32 %v981, %v1012
        %v1027 = vadd.f32 %v982, %v1003
        %v1028 = vadd.f32 %v983, %v1013
        %v1029 = vadd.f32 %v984, %v1007
        %v1030 = vadd.f32 %v985, %v1014
        %v1031 = vld [vmem:[#allocation4 + $0x48] sm:$0xff]
        %v1032 = vld [vmem:[#allocation4 + $0x50] sm:$0xff]
        %vm1037 = vcmask 1046528
        %v1038 = vrot.slane %v948, 1
        %v1039 = vrot.slane %v949, 1
        %v1040 = vrot.slane %v950, 1
        %v1041 = vsel %vm1037, %v1038, %v1040
        %v1042 = vrot.slane %v951, 1
        %v1043 = vsel %vm1037, %v1039, %v1042
        %v1044 = vrot.slane %v1031, 1
        %v1045 = vsel %vm1037, %v1040, %v1044
        %v1046 = vrot.slane %v1032, 1
        %v1047 = vsel %vm1037, %v1042, %v1046
        %v1056 = vadd.f32 %v1023, %v1038
        %v1057 = vadd.f32 %v1024, %v1039
        %v1058 = vadd.f32 %v1025, %v1041
        %v1059 = vadd.f32 %v1026, %v1043
        %v1060 = vadd.f32 %v1027, %v1045
        %v1061 = vadd.f32 %v1028, %v1047
        %v1062 = vadd.f32 %v1029, %v1044
        %v1063 = vadd.f32 %v1030, %v1046
        %1064 = vrot.lane.b32.xlu0 %v1039, 127
        %v1065 = vpop.permute.xlu0 %1064
        %1066 = vrot.lane.b32.xlu0 %v1043, 127
        %v1067 = vpop.permute.xlu0 %1066
        %1068 = vrot.lane.b32.xlu0 %v1047, 127
        %v1069 = vpop.permute.xlu0 %1068
        %1070 = vrot.lane.b32.xlu0 %v1046, 127
        %v1071 = vpop.permute.xlu0 %1070
        %v1076 = vadd.f32 %v1056, %v1065
        %v1077 = vadd.f32 %v1057, %v1065
        %v1078 = vadd.f32 %v1058, %v1067
        %v1079 = vadd.f32 %v1059, %v1067
        %v1080 = vadd.f32 %v1060, %v1069
        %v1081 = vadd.f32 %v1061, %v1069
        %v1082 = vadd.f32 %v1062, %v1071
        %v1083 = vadd.f32 %v1063, %v1071
        %v1084 = vld [vmem:[#allocation4 + $0x58] sm:$0xff]
        %v1086 = vrot.slane %v987, 1
        %v1087 = vrot.slane %v988, 1
        %v1088 = vsel %vm1037, %v1086, %v1087
        %v1089 = vrot.slane %v1084, 1
        %v1090 = vsel %vm1037, %v1087, %v1089
        %1091 = vrot.lane.b32.xlu0 %v1039, 126
        %v1092 = vpop.permute.xlu0 %1091
        %1093 = vrot.lane.b32.xlu0 %v1086, 126
        %v1094 = vpop.permute.xlu0 %1093
        %1095 = vrot.lane.b32.xlu0 %v1043, 126
        %v1096 = vpop.permute.xlu0 %1095
        %1097 = vrot.lane.b32.xlu0 %v1088, 126
        %v1098 = vpop.permute.xlu0 %1097
        %1099 = vrot.lane.b32.xlu0 %v1047, 126
        %v1100 = vpop.permute.xlu0 %1099
        %1101 = vrot.lane.b32.xlu0 %v1090, 126
        %v1102 = vpop.permute.xlu0 %1101
        %1103 = vrot.lane.b32.xlu0 %v1046, 126
        %v1104 = vpop.permute.xlu0 %1103
        %1105 = vrot.lane.b32.xlu0 %v1089, 126
        %v1106 = vpop.permute.xlu0 %1105
        %v1107 = vsel %vm1010, %v1092, %v1094
        %v1108 = vsel %vm1010, %v1096, %v1098
        %v1109 = vsel %vm1010, %v1100, %v1102
        %v1110 = vsel %vm1010, %v1104, %v1106
        %v1119 = vadd.f32 %v1076, %v1092
        %v1120 = vadd.f32 %v1077, %v1107
        %v1121 = vadd.f32 %v1078, %v1096
        %v1122 = vadd.f32 %v1079, %v1108
        %v1123 = vadd.f32 %v1080, %v1100
        %v1124 = vadd.f32 %v1081, %v1109
        %v1125 = vadd.f32 %v1082, %v1104
        %v1126 = vadd.f32 %v1083, %v1110
        %v1127 = vld [vmem:[#allocation4 + $0x18] sm:$0xfe]
        %v1128 = vld [vmem:[#allocation4 + $0x20] sm:$0xfe]
        %v1129 = vld [vmem:[#allocation4 + $0x60] sm:$0x1]
        %v1130 = vld [vmem:[#allocation4 + $0x68] sm:$0x1]
        %vm1135 = vcmask 1045504
        %v1136 = vrot.slane %v1127, 2
        %v1137 = vrot.slane %v1128, 2
        %v1138 = vrot.slane %v950, 2
        %v1139 = vsel %vm1135, %v1136, %v1138
        %v1140 = vrot.slane %v951, 2
        %v1141 = vsel %vm1135, %v1137, %v1140
        %v1142 = vrot.slane %v1031, 2
        %v1143 = vsel %vm1135, %v1138, %v1142
        %v1144 = vrot.slane %v1032, 2
        %v1145 = vsel %vm1135, %v1140, %v1144
        %v1146 = vrot.slane %v1129, 2
        %v1147 = vsel %vm1135, %v1142, %v1146
        %v1148 = vrot.slane %v1130, 2
        %v1149 = vsel %vm1135, %v1144, %v1148
        %v1158 = vadd.f32 %v1119, %v1136
        %v1159 = vadd.f32 %v1120, %v1137
        %v1160 = vadd.f32 %v1121, %v1139
        %v1161 = vadd.f32 %v1122, %v1141
        %v1162 = vadd.f32 %v1123, %v1143
        %v1163 = vadd.f32 %v1124, %v1145
        %v1164 = vadd.f32 %v1125, %v1147
        %v1165 = vadd.f32 %v1126, %v1149
        %1166 = vrot.lane.b32.xlu0 %v1137, 127
        %v1167 = vpop.permute.xlu0 %1166
        %1168 = vrot.lane.b32.xlu0 %v1141, 127
        %v1169 = vpop.permute.xlu0 %1168
        %1170 = vrot.lane.b32.xlu0 %v1145, 127
        %v1171 = vpop.permute.xlu0 %1170
        %1172 = vrot.lane.b32.xlu0 %v1149, 127
        %v1173 = vpop.permute.xlu0 %1172
        %v1178 = vadd.f32 %v1158, %v1167
        %v1179 = vadd.f32 %v1159, %v1167
        %v1180 = vadd.f32 %v1160, %v1169
        %v1181 = vadd.f32 %v1161, %v1169
        %v1182 = vadd.f32 %v1162, %v1171
        %v1183 = vadd.f32 %v1163, %v1171
        %v1184 = vadd.f32 %v1164, %v1173
        %v1185 = vadd.f32 %v1165, %v1173
        %v1186 = vld [vmem:[#allocation4 + $0x20] sm:$0xfe]
        %v1187 = vld [vmem:[#allocation4 + $0x28] sm:$0xfe]
        %v1188 = vld [vmem:[#allocation4 + $0x38] sm:$0xff]
        %v1189 = vld [vmem:[#allocation4 + $0x40] sm:$0xff]
        %v1190 = vld [vmem:[#allocation4 + $0x50] sm:$0xff]
        %v1191 = vld [vmem:[#allocation4 + $0x58] sm:$0xff]
        %v1192 = vld [vmem:[#allocation4 + $0x68] sm:$0x1]
        %v1193 = vld [vmem:[#allocation4 + $0x70] sm:$0x1]
        %v1202 = vrot.slane %v1186, 2
        %v1203 = vrot.slane %v1187, 2
        %v1204 = vrot.slane %v1188, 2
        %v1205 = vsel %vm1135, %v1202, %v1204
        %v1206 = vrot.slane %v1189, 2
        %v1207 = vsel %vm1135, %v1203, %v1206
        %v1208 = vrot.slane %v1190, 2
        %v1209 = vsel %vm1135, %v1204, %v1208
        %v1210 = vrot.slane %v1191, 2
        %v1211 = vsel %vm1135, %v1206, %v1210
        %v1212 = vrot.slane %v1192, 2
        %v1213 = vsel %vm1135, %v1208, %v1212
        %v1214 = vrot.slane %v1193, 2
        %v1215 = vsel %vm1135, %v1210, %v1214
        %1216 = vrot.lane.b32.xlu0 %v1202, 126
        %v1217 = vpop.permute.xlu0 %1216
        %1218 = vrot.lane.b32.xlu0 %v1203, 126
        %v1219 = vpop.permute.xlu0 %1218
        %1220 = vrot.lane.b32.xlu0 %v1205, 126
        %v1221 = vpop.permute.xlu0 %1220
        %1222 = vrot.lane.b32.xlu0 %v1207, 126
        %v1223 = vpop.permute.xlu0 %1222
        %1224 = vrot.lane.b32.xlu0 %v1209, 126
        %v1225 = vpop.permute.xlu0 %1224
        %1226 = vrot.lane.b32.xlu0 %v1211, 126
        %v1227 = vpop.permute.xlu0 %1226
        %1228 = vrot.lane.b32.xlu0 %v1213, 126
        %v1229 = vpop.permute.xlu0 %1228
        %1230 = vrot.lane.b32.xlu0 %v1215, 126
        %v1231 = vpop.permute.xlu0 %1230
        %v1232 = vsel %vm1010, %v1217, %v1219
        %v1233 = vsel %vm1010, %v1221, %v1223
        %v1234 = vsel %vm1010, %v1225, %v1227
        %v1235 = vsel %vm1010, %v1229, %v1231
        %v1244 = vadd.f32 %v1178, %v1217
        %v1245 = vadd.f32 %v1179, %v1232
        %v1246 = vadd.f32 %v1180, %v1221
        %v1247 = vadd.f32 %v1181, %v1233
        %v1248 = vadd.f32 %v1182, %v1225
        %v1249 = vadd.f32 %v1183, %v1234
        %v1250 = vadd.f32 %v1184, %v1229
        %v1251 = vadd.f32 %v1185, %v1235
        %v1252 = vmul.f32 %v1244, 0.11111111
        %v1253 = vmul.f32 %v1245, 0.11111111
        %v1254 = vmul.f32 %v1246, 0.11111111
        %v1255 = vmul.f32 %v1247, 0.11111111
        %v1256 = vmul.f32 %v1248, 0.11111111
        %v1257 = vmul.f32 %v1249, 0.11111111
        %v1258 = vmul.f32 %v1250, 0.11111111
        %v1259 = vmul.f32 %v1251, 0.11111111
        %v1260 = vld [vmem:[#allocation2 + $0x20] sm:$0xff]
        %v1261 = vld [vmem:[#allocation2 + $0x38] sm:$0xff]
        %v1262 = vld [vmem:[#allocation2 + $0x50] sm:$0xff]
        %v1263 = vld [vmem:[#allocation2 + $0x18] sm:$0xff]
        %v1264 = vld [vmem:[#allocation2 + $0x30] sm:$0xff]
        %v1265 = vld [vmem:[#allocation2 + $0x48] sm:$0xff]
        %1272 = vrot.lane.b32.xlu0 %v1263, 1
        %v1273 = vpop.permute.xlu0 %1272
        %1274 = vrot.lane.b32.xlu0 %v1260, 1
        %v1275 = vpop.permute.xlu0 %1274
        %1276 = vrot.lane.b32.xlu0 %v1264, 1
        %v1277 = vpop.permute.xlu0 %1276
        %1278 = vrot.lane.b32.xlu0 %v1261, 1
        %v1279 = vpop.permute.xlu0 %1278
        %1280 = vrot.lane.b32.xlu0 %v1265, 1
        %v1281 = vpop.permute.xlu0 %1280
        %1282 = vrot.lane.b32.xlu0 %v1262, 1
        %v1283 = vpop.permute.xlu0 %1282
        %v1284 = vsel %vm930, %v1273, %v1275
        %v1285 = vsel %vm930, %v1277, %v1279
        %v1286 = vsel %vm930, %v1281, %v1283
        %v1290 = vsub.f32 %v1260, %v1284
        %v1291 = vsub.f32 %v1261, %v1285
        %v1292 = vsub.f32 %v1262, %v1286
        %v1293 = vand.u32 2147483647, %v1290
        %v1294 = vand.u32 2147483647, %v1291
        %v1295 = vand.u32 2147483647, %v1292
        %v1296 = vmul.f32 %v1252, -10.0
        %v1297 = vmul.f32 %v1253, -10.0
        %v1298 = vmul.f32 %v1254, -10.0
        %v1299 = vmul.f32 %v1255, -10.0
        %v1300 = vmul.f32 %v1256, -10.0
        %v1301 = vmul.f32 %v1257, -10.0
        %v1302 = vmul.f32 %v1258, -10.0
        %v1303 = vmul.f32 %v1259, -10.0
        %v1304 = vmul.f32 %v1296, 1.442695
        %v1305 = vpow.pop %v1304
        %v1306 = vmul.f32 %v1297, 1.442695
        %v1307 = vpow.pop %v1306
        %v1308 = vmul.f32 %v1298, 1.442695
        %v1309 = vpow.pop %v1308
        %v1310 = vmul.f32 %v1299, 1.442695
        %v1311 = vpow.pop %v1310
        %v1312 = vmul.f32 %v1300, 1.442695
        %v1313 = vpow.pop %v1312
        %v1314 = vmul.f32 %v1301, 1.442695
        %v1315 = vpow.pop %v1314
        %v1316 = vmul.f32 %v1302, 1.442695
        %v1317 = vpow.pop %v1316
        %v1318 = vmul.f32 %v1303, 1.442695
        %v1319 = vpow.pop %v1318
        %vm1328 = vcmask 1040384
        %v1329 = vrot.slane %v1305, 7
        %v1330 = vrot.slane %v1309, 7
        %v1331 = vsel %vm1328, %v1329, %v1330
        %v1332 = vrot.slane %v1307, 7
        %v1333 = vrot.slane %v1311, 7
        %v1334 = vsel %vm1328, %v1332, %v1333
        %v1335 = vrot.slane %v1313, 7
        %v1336 = vsel %vm1328, %v1330, %v1335
        %v1337 = vrot.slane %v1315, 7
        %v1338 = vsel %vm1328, %v1333, %v1337
        %v1339 = vrot.slane %v1317, 7
        %v1340 = vsel %vm1328, %v1335, %v1339
        %v1341 = vrot.slane %v1319, 7
        %v1342 = vsel %vm1328, %v1337, %v1341
        %1343 = vrot.lane.b32.xlu0 %v1331, 1
        %v1344 = vpop.permute.xlu0 %1343
        %1345 = vrot.lane.b32.xlu0 %v1334, 1
        %v1346 = vpop.permute.xlu0 %1345
        %1347 = vrot.lane.b32.xlu0 %v1336, 1
        %v1348 = vpop.permute.xlu0 %1347
        %1349 = vrot.lane.b32.xlu0 %v1338, 1
        %v1350 = vpop.permute.xlu0 %1349
        %1351 = vrot.lane.b32.xlu0 %v1340, 1
        %v1352 = vpop.permute.xlu0 %1351
        %1353 = vrot.lane.b32.xlu0 %v1342, 1
        %v1354 = vpop.permute.xlu0 %1353
        %v1355 = vsel %vm930, %v1344, %v1346
        %v1356 = vsel %vm930, %v1348, %v1350
        %v1357 = vsel %vm930, %v1352, %v1354
        %v1361 = vmul.f32 %v1293, %v1355
        %v1362 = vmul.f32 %v1294, %v1356
        %v1363 = vmul.f32 %v1295, %v1357
        %1364 = vadd.xlane.f32.xlu0 %v1361
        %v1365 = vpop.xlane.xlu0 %1364
        %1366 = vadd.xlane.f32.xlu0 %v1362
        %v1367 = vpop.xlane.xlu0 %1366
        %1368 = vadd.xlane.f32.xlu0 %v1363
        %v1369 = vpop.xlane.xlu0 %1368
        %v1370 = vadd.f32 %v1365, %v1367
        %v1371 = vadd.f32 %v1370, %v1369
        %v1372 = vrot.slane %v1371, 4
        %v1373 = vadd.f32 %v1371, %v1372
        %v1374 = vrot.slane %v1373, 2
        %v1375 = vadd.f32 %v1373, %v1374
        %v1376 = vrot.slane %v1375, 1
        %v1377 = vadd.f32 %v1375, %v1376
        %v1378 = vld [vmem:[#allocation3 + $0x20] sm:$0xff]
        %v1379 = vld [vmem:[#allocation3 + $0x38] sm:$0xff]
        %v1380 = vld [vmem:[#allocation3 + $0x50] sm:$0xff]
        %v1381 = vld [vmem:[#allocation3 + $0x8] sm:$0x80]
        %v1382 = vld [vmem:[#allocation3 + $0x50] sm:$0x7f]
        %v1387 = vrot.slane %v1381, 7
        %v1388 = vrot.slane %v1378, 7
        %v1389 = vsel %vm1328, %v1387, %v1388
        %v1390 = vrot.slane %v1379, 7
        %v1391 = vsel %vm1328, %v1388, %v1390
        %v1392 = vrot.slane %v1382, 7
        %v1393 = vsel %vm1328, %v1390, %v1392
        %v1397 = vsub.f32 %v1378, %v1389
        %v1398 = vsub.f32 %v1379, %v1391
        %v1399 = vsub.f32 %v1380, %v1393
        %v1400 = vand.u32 2147483647, %v1397
        %v1401 = vand.u32 2147483647, %v1398
        %v1402 = vand.u32 2147483647, %v1399
        %1403 = vst [vmem:[#allocation4 + $0x20] sm:$0xff] %v1400
        %1404 = vst [vmem:[#allocation4 + $0x38] sm:$0xff] %v1401
        %1405 = vst [vmem:[#allocation4 + $0x50] sm:$0xff] %v1402
        %v1406 = vld [vmem:[#allocation4] sm:$0x80]
        %v1407 = vld [vmem:[#allocation4 + $0x8] sm:$0x80]
        %v1408 = vld [vmem:[#allocation4 + $0x18] sm:$0xff]
        %v1409 = vld [vmem:[#allocation4 + $0x20] sm:$0xff]
        %v1410 = vld [vmem:[#allocation4 + $0x30] sm:$0xff]
        %v1411 = vld [vmem:[#allocation4 + $0x38] sm:$0xff]
        %v1412 = vld [vmem:[#allocation4 + $0x48] sm:$0x7f]
        %v1413 = vld [vmem:[#allocation4 + $0x50] sm:$0x7f]
        %v1414 = vadd.f32 %v1406, 0.0
        %v1415 = vadd.f32 %v1407, 0.0
        %v1416 = vadd.f32 %v1408, 0.0
        %v1417 = vadd.f32 %v1409, 0.0
        %v1418 = vadd.f32 %v1410, 0.0
        %v1419 = vadd.f32 %v1411, 0.0
        %v1420 = vadd.f32 %v1412, 0.0
        %v1421 = vadd.f32 %v1413, 0.0
        %1426 = vrot.lane.b32.xlu0 %v1407, 127
        %v1427 = vpop.permute.xlu0 %1426
        %1428 = vrot.lane.b32.xlu0 %v1409, 127
        %v1429 = vpop.permute.xlu0 %1428
        %1430 = vrot.lane.b32.xlu0 %v1411, 127
        %v1431 = vpop.permute.xlu0 %1430
        %1432 = vrot.lane.b32.xlu0 %v1413, 127
        %v1433 = vpop.permute.xlu0 %1432
        %v1438 = vadd.f32 %v1414, %v1427
        %v1439 = vadd.f32 %v1415, %v1427
        %v1440 = vadd.f32 %v1416, %v1429
        %v1441 = vadd.f32 %v1417, %v1429
        %v1442 = vadd.f32 %v1418, %v1431
        %v1443 = vadd.f32 %v1419, %v1431
        %v1444 = vadd.f32 %v1420, %v1433
        %v1445 = vadd.f32 %v1421, %v1433
        %v1446 = vld [vmem:[#allocation4 + $0x10] sm:$0x80]
        %v1447 = vld [vmem:[#allocation4 + $0x28] sm:$0xff]
        %v1448 = vld [vmem:[#allocation4 + $0x40] sm:$0xff]
        %v1449 = vld [vmem:[#allocation4 + $0x58] sm:$0x7f]
        %1454 = vrot.lane.b32.xlu0 %v1407, 126
        %v1455 = vpop.permute.xlu0 %1454
        %1456 = vrot.lane.b32.xlu0 %v1446, 126
        %v1457 = vpop.permute.xlu0 %1456
        %1458 = vrot.lane.b32.xlu0 %v1409, 126
        %v1459 = vpop.permute.xlu0 %1458
        %1460 = vrot.lane.b32.xlu0 %v1447, 126
        %v1461 = vpop.permute.xlu0 %1460
        %1462 = vrot.lane.b32.xlu0 %v1411, 126
        %v1463 = vpop.permute.xlu0 %1462
        %1464 = vrot.lane.b32.xlu0 %v1448, 126
        %v1465 = vpop.permute.xlu0 %1464
        %1466 = vrot.lane.b32.xlu0 %v1413, 126
        %v1467 = vpop.permute.xlu0 %1466
        %1468 = vrot.lane.b32.xlu0 %v1449, 126
        %v1469 = vpop.permute.xlu0 %1468
        %v1470 = vsel %vm1010, %v1455, %v1457
        %v1471 = vsel %vm1010, %v1459, %v1461
        %v1472 = vsel %vm1010, %v1463, %v1465
        %v1473 = vsel %vm1010, %v1467, %v1469
        %v1482 = vadd.f32 %v1438, %v1455
        %v1483 = vadd.f32 %v1439, %v1470
        %v1484 = vadd.f32 %v1440, %v1459
        %v1485 = vadd.f32 %v1441, %v1471
        %v1486 = vadd.f32 %v1442, %v1463
        %v1487 = vadd.f32 %v1443, %v1472
        %v1488 = vadd.f32 %v1444, %v1467
        %v1489 = vadd.f32 %v1445, %v1473
        %v1490 = vld [vmem:[#allocation4 + $0x48] sm:$0xff]
        %v1491 = vld [vmem:[#allocation4 + $0x50] sm:$0xff]
        %v1496 = vrot.slane %v1408, 1
        %v1497 = vrot.slane %v1409, 1
        %v1498 = vrot.slane %v1410, 1
        %v1499 = vsel %vm1037, %v1496, %v1498
        %v1500 = vrot.slane %v1411, 1
        %v1501 = vsel %vm1037, %v1497, %v1500
        %v1502 = vrot.slane %v1490, 1
        %v1503 = vsel %vm1037, %v1498, %v1502
        %v1504 = vrot.slane %v1491, 1
        %v1505 = vsel %vm1037, %v1500, %v1504
        %v1514 = vadd.f32 %v1482, %v1496
        %v1515 = vadd.f32 %v1483, %v1497
        %v1516 = vadd.f32 %v1484, %v1499
        %v1517 = vadd.f32 %v1485, %v1501
        %v1518 = vadd.f32 %v1486, %v1503
        %v1519 = vadd.f32 %v1487, %v1505
        %v1520 = vadd.f32 %v1488, %v1502
        %v1521 = vadd.f32 %v1489, %v1504
        %1522 = vrot.lane.b32.xlu0 %v1497, 127
        %v1523 = vpop.permute.xlu0 %1522
        %1524 = vrot.lane.b32.xlu0 %v1501, 127
        %v1525 = vpop.permute.xlu0 %1524
        %1526 = vrot.lane.b32.xlu0 %v1505, 127
        %v1527 = vpop.permute.xlu0 %1526
        %1528 = vrot.lane.b32.xlu0 %v1504, 127
        %v1529 = vpop.permute.xlu0 %1528
        %v1534 = vadd.f32 %v1514, %v1523
        %v1535 = vadd.f32 %v1515, %v1523
        %v1536 = vadd.f32 %v1516, %v1525
        %v1537 = vadd.f32 %v1517, %v1525
        %v1538 = vadd.f32 %v1518, %v1527
        %v1539 = vadd.f32 %v1519, %v1527
        %v1540 = vadd.f32 %v1520, %v1529
        %v1541 = vadd.f32 %v1521, %v1529
        %v1542 = vld [vmem:[#allocation4 + $0x58] sm:$0xff]
        %v1544 = vrot.slane %v1447, 1
        %v1545 = vrot.slane %v1448, 1
        %v1546 = vsel %vm1037, %v1544, %v1545
        %v1547 = vrot.slane %v1542, 1
        %v1548 = vsel %vm1037, %v1545, %v1547
        %1549 = vrot.lane.b32.xlu0 %v1497, 126
        %v1550 = vpop.permute.xlu0 %1549
        %1551 = vrot.lane.b32.xlu0 %v1544, 126
        %v1552 = vpop.permute.xlu0 %1551
        %1553 = vrot.lane.b32.xlu0 %v1501, 126
        %v1554 = vpop.permute.xlu0 %1553
        %1555 = vrot.lane.b32.xlu0 %v1546, 126
        %v1556 = vpop.permute.xlu0 %1555
        %1557 = vrot.lane.b32.xlu0 %v1505, 126
        %v1558 = vpop.permute.xlu0 %1557
        %1559 = vrot.lane.b32.xlu0 %v1548, 126
        %v1560 = vpop.permute.xlu0 %1559
        %1561 = vrot.lane.b32.xlu0 %v1504, 126
        %v1562 = vpop.permute.xlu0 %1561
        %1563 = vrot.lane.b32.xlu0 %v1547, 126
        %v1564 = vpop.permute.xlu0 %1563
        %v1565 = vsel %vm1010, %v1550, %v1552
        %v1566 = vsel %vm1010, %v1554, %v1556
        %v1567 = vsel %vm1010, %v1558, %v1560
        %v1568 = vsel %vm1010, %v1562, %v1564
        %v1577 = vadd.f32 %v1534, %v1550
        %v1578 = vadd.f32 %v1535, %v1565
        %v1579 = vadd.f32 %v1536, %v1554
        %v1580 = vadd.f32 %v1537, %v1566
        %v1581 = vadd.f32 %v1538, %v1558
        %v1582 = vadd.f32 %v1539, %v1567
        %v1583 = vadd.f32 %v1540, %v1562
        %v1584 = vadd.f32 %v1541, %v1568
        %v1585 = vld [vmem:[#allocation4 + $0x18] sm:$0xfe]
        %v1586 = vld [vmem:[#allocation4 + $0x20] sm:$0xfe]
        %v1587 = vld [vmem:[#allocation4 + $0x60] sm:$0x1]
        %v1588 = vld [vmem:[#allocation4 + $0x68] sm:$0x1]
        %v1593 = vrot.slane %v1585, 2
        %v1594 = vrot.slane %v1586, 2
        %v1595 = vrot.slane %v1410, 2
        %v1596 = vsel %vm1135, %v1593, %v1595
        %v1597 = vrot.slane %v1411, 2
        %v1598 = vsel %vm1135, %v1594, %v1597
        %v1599 = vrot.slane %v1490, 2
        %v1600 = vsel %vm1135, %v1595, %v1599
        %v1601 = vrot.slane %v1491, 2
        %v1602 = vsel %vm1135, %v1597, %v1601
        %v1603 = vrot.slane %v1587, 2
        %v1604 = vsel %vm1135, %v1599, %v1603
        %v1605 = vrot.slane %v1588, 2
        %v1606 = vsel %vm1135, %v1601, %v1605
        %v1615 = vadd.f32 %v1577, %v1593
        %v1616 = vadd.f32 %v1578, %v1594
        %v1617 = vadd.f32 %v1579, %v1596
        %v1618 = vadd.f32 %v1580, %v1598
        %v1619 = vadd.f32 %v1581, %v1600
        %v1620 = vadd.f32 %v1582, %v1602
        %v1621 = vadd.f32 %v1583, %v1604
        %v1622 = vadd.f32 %v1584, %v1606
        %1623 = vrot.lane.b32.xlu0 %v1594, 127
        %v1624 = vpop.permute.xlu0 %1623
        %1625 = vrot.lane.b32.xlu0 %v1598, 127
        %v1626 = vpop.permute.xlu0 %1625
        %1627 = vrot.lane.b32.xlu0 %v1602, 127
        %v1628 = vpop.permute.xlu0 %1627
        %1629 = vrot.lane.b32.xlu0 %v1606, 127
        %v1630 = vpop.permute.xlu0 %1629
        %v1635 = vadd.f32 %v1615, %v1624
        %v1636 = vadd.f32 %v1616, %v1624
        %v1637 = vadd.f32 %v1617, %v1626
        %v1638 = vadd.f32 %v1618, %v1626
        %v1639 = vadd.f32 %v1619, %v1628
        %v1640 = vadd.f32 %v1620, %v1628
        %v1641 = vadd.f32 %v1621, %v1630
        %v1642 = vadd.f32 %v1622, %v1630
        %v1643 = vld [vmem:[#allocation4 + $0x20] sm:$0xfe]
        %v1644 = vld [vmem:[#allocation4 + $0x28] sm:$0xfe]
        %v1645 = vld [vmem:[#allocation4 + $0x38] sm:$0xff]
        %v1646 = vld [vmem:[#allocation4 + $0x40] sm:$0xff]
        %v1647 = vld [vmem:[#allocation4 + $0x50] sm:$0xff]
        %v1648 = vld [vmem:[#allocation4 + $0x58] sm:$0xff]
        %v1649 = vld [vmem:[#allocation4 + $0x68] sm:$0x1]
        %v1650 = vld [vmem:[#allocation4 + $0x70] sm:$0x1]
        %v1659 = vrot.slane %v1643, 2
        %v1660 = vrot.slane %v1644, 2
        %v1661 = vrot.slane %v1645, 2
        %v1662 = vsel %vm1135, %v1659, %v1661
        %v1663 = vrot.slane %v1646, 2
        %v1664 = vsel %vm1135, %v1660, %v1663
        %v1665 = vrot.slane %v1647, 2
        %v1666 = vsel %vm1135, %v1661, %v1665
        %v1667 = vrot.slane %v1648, 2
        %v1668 = vsel %vm1135, %v1663, %v1667
        %v1669 = vrot.slane %v1649, 2
        %v1670 = vsel %vm1135, %v1665, %v1669
        %v1671 = vrot.slane %v1650, 2
        %v1672 = vsel %vm1135, %v1667, %v1671
        %1673 = vrot.lane.b32.xlu0 %v1659, 126
        %v1674 = vpop.permute.xlu0 %1673
        %1675 = vrot.lane.b32.xlu0 %v1660, 126
        %v1676 = vpop.permute.xlu0 %1675
        %1677 = vrot.lane.b32.xlu0 %v1662, 126
        %v1678 = vpop.permute.xlu0 %1677
        %1679 = vrot.lane.b32.xlu0 %v1664, 126
        %v1680 = vpop.permute.xlu0 %1679
        %1681 = vrot.lane.b32.xlu0 %v1666, 126
        %v1682 = vpop.permute.xlu0 %1681
        %1683 = vrot.lane.b32.xlu0 %v1668, 126
        %v1684 = vpop.permute.xlu0 %1683
        %1685 = vrot.lane.b32.xlu0 %v1670, 126
        %v1686 = vpop.permute.xlu0 %1685
        %1687 = vrot.lane.b32.xlu0 %v1672, 126
        %v1688 = vpop.permute.xlu0 %1687
        %v1689 = vsel %vm1010, %v1674, %v1676
        %v1690 = vsel %vm1010, %v1678, %v1680
        %v1691 = vsel %vm1010, %v1682, %v1684
        %v1692 = vsel %vm1010, %v1686, %v1688
        %v1701 = vadd.f32 %v1635, %v1674
        %v1702 = vadd.f32 %v1636, %v1689
        %v1703 = vadd.f32 %v1637, %v1678
        %v1704 = vadd.f32 %v1638, %v1690
        %v1705 = vadd.f32 %v1639, %v1682
        %v1706 = vadd.f32 %v1640, %v1691
        %v1707 = vadd.f32 %v1641, %v1686
        %v1708 = vadd.f32 %v1642, %v1692
        %v1709 = vmul.f32 %v1701, 0.11111111
        %v1710 = vmul.f32 %v1702, 0.11111111
        %v1711 = vmul.f32 %v1703, 0.11111111
        %v1712 = vmul.f32 %v1704, 0.11111111
        %v1713 = vmul.f32 %v1705, 0.11111111
        %v1714 = vmul.f32 %v1706, 0.11111111
        %v1715 = vmul.f32 %v1707, 0.11111111
        %v1716 = vmul.f32 %v1708, 0.11111111
        %v1717 = vld [vmem:[#allocation2 + $0x20] sm:$0xff]
        %v1718 = vld [vmem:[#allocation2 + $0x38] sm:$0xff]
        %v1719 = vld [vmem:[#allocation2 + $0x50] sm:$0xff]
        %v1720 = vld [vmem:[#allocation2 + $0x8] sm:$0x80]
        %v1721 = vld [vmem:[#allocation2 + $0x50] sm:$0x7f]
        %v1726 = vrot.slane %v1720, 7
        %v1727 = vrot.slane %v1717, 7
        %v1728 = vsel %vm1328, %v1726, %v1727
        %v1729 = vrot.slane %v1718, 7
        %v1730 = vsel %vm1328, %v1727, %v1729
        %v1731 = vrot.slane %v1721, 7
        %v1732 = vsel %vm1328, %v1729, %v1731
        %v1736 = vsub.f32 %v1717, %v1728
        %v1737 = vsub.f32 %v1718, %v1730
        %v1738 = vsub.f32 %v1719, %v1732
        %v1739 = vand.u32 2147483647, %v1736
        %v1740 = vand.u32 2147483647, %v1737
        %v1741 = vand.u32 2147483647, %v1738
        %v1742 = vmul.f32 %v1709, -10.0
        %v1743 = vmul.f32 %v1710, -10.0
        %v1744 = vmul.f32 %v1711, -10.0
        %v1745 = vmul.f32 %v1712, -10.0
        %v1746 = vmul.f32 %v1713, -10.0
        %v1747 = vmul.f32 %v1714, -10.0
        %v1748 = vmul.f32 %v1715, -10.0
        %v1749 = vmul.f32 %v1716, -10.0
        %v1750 = vmul.f32 %v1742, 1.442695
        %v1751 = vpow.pop %v1750
        %v1752 = vmul.f32 %v1743, 1.442695
        %v1753 = vpow.pop %v1752
        %v1754 = vmul.f32 %v1744, 1.442695
        %v1755 = vpow.pop %v1754
        %v1756 = vmul.f32 %v1745, 1.442695
        %v1757 = vpow.pop %v1756
        %v1758 = vmul.f32 %v1746, 1.442695
        %v1759 = vpow.pop %v1758
        %v1760 = vmul.f32 %v1747, 1.442695
        %v1761 = vpow.pop %v1760
        %v1762 = vmul.f32 %v1748, 1.442695
        %v1763 = vpow.pop %v1762
        %v1764 = vmul.f32 %v1749, 1.442695
        %v1765 = vpow.pop %v1764
        %v1774 = vrot.slane %v1751, 7
        %v1775 = vrot.slane %v1755, 7
        %v1776 = vsel %vm1328, %v1774, %v1775
        %v1777 = vrot.slane %v1753, 7
        %v1778 = vrot.slane %v1757, 7
        %v1779 = vsel %vm1328, %v1777, %v1778
        %v1780 = vrot.slane %v1759, 7
        %v1781 = vsel %vm1328, %v1775, %v1780
        %v1782 = vrot.slane %v1761, 7
        %v1783 = vsel %vm1328, %v1778, %v1782
        %v1784 = vrot.slane %v1763, 7
        %v1785 = vsel %vm1328, %v1780, %v1784
        %v1786 = vrot.slane %v1765, 7
        %v1787 = vsel %vm1328, %v1782, %v1786
        %1788 = vrot.lane.b32.xlu0 %v1776, 1
        %v1789 = vpop.permute.xlu0 %1788
        %1790 = vrot.lane.b32.xlu0 %v1779, 1
        %v1791 = vpop.permute.xlu0 %1790
        %1792 = vrot.lane.b32.xlu0 %v1781, 1
        %v1793 = vpop.permute.xlu0 %1792
        %1794 = vrot.lane.b32.xlu0 %v1783, 1
        %v1795 = vpop.permute.xlu0 %1794
        %1796 = vrot.lane.b32.xlu0 %v1785, 1
        %v1797 = vpop.permute.xlu0 %1796
        %1798 = vrot.lane.b32.xlu0 %v1787, 1
        %v1799 = vpop.permute.xlu0 %1798
        %v1800 = vsel %vm930, %v1789, %v1791
        %v1801 = vsel %vm930, %v1793, %v1795
        %v1802 = vsel %vm930, %v1797, %v1799
        %v1806 = vmul.f32 %v1739, %v1800
        %v1807 = vmul.f32 %v1740, %v1801
        %v1808 = vmul.f32 %v1741, %v1802
        %1809 = vadd.xlane.f32.xlu0 %v1806
        %v1810 = vpop.xlane.xlu0 %1809
        %1811 = vadd.xlane.f32.xlu0 %v1807
        %v1812 = vpop.xlane.xlu0 %1811
        %1813 = vadd.xlane.f32.xlu0 %v1808
        %v1814 = vpop.xlane.xlu0 %1813
        %v1815 = vadd.f32 %v1810, %v1812
        %v1816 = vadd.f32 %v1815, %v1814
        %v1817 = vrot.slane %v1816, 4
        %v1818 = vadd.f32 %v1816, %v1817
        %v1819 = vrot.slane %v1818, 2
        %v1820 = vadd.f32 %v1818, %v1819
        %v1821 = vrot.slane %v1820, 1
        %v1822 = vadd.f32 %v1820, %v1821
        %v1823 = vadd.f32 %v1377, %v1822
        %v1824 = vld [vmem:[%s486] sm:$0xff]
        %v1825 = vld [vmem:[%s486 + $0x8] sm:$0xff]
        %v1826 = vmul.f32 %v1824, 0.299
        %v1827 = vmul.f32 %v1825, 0.299
        %v1828 = vld [vmem:[%s489] sm:$0xff]
        %v1829 = vld [vmem:[%s489 + $0x8] sm:$0xff]
        %v1830 = vmul.f32 %v1828, 0.587
        %v1831 = vmul.f32 %v1829, 0.587
        %v1832 = vadd.f32 %v1826, %v1830
        %v1833 = vadd.f32 %v1827, %v1831
        %v1834 = vld [vmem:[%s492] sm:$0xff]
        %v1835 = vld [vmem:[%s492 + $0x8] sm:$0xff]
        %v1836 = vmul.f32 %v1834, 0.114
        %v1837 = vmul.f32 %v1835, 0.114
        %v1838 = vadd.f32 %v1832, %v1836
        %v1839 = vadd.f32 %v1833, %v1837
        %1840 = vst.msk [vmem:[#allocation2 + $0x20] sm:$0xff] %vm569, %v1838
        %1841 = vst.msk [vmem:[#allocation2 + $0x38] sm:$0xff] %vm569, %v1839
        %v1842 = vld [vmem:[%s475] sm:$0xff]
        %v1843 = vld [vmem:[%s475 + $0x8] sm:$0xff]
        %v1844 = vmul.f32 %v1842, 0.299
        %v1845 = vmul.f32 %v1843, 0.299
        %v1846 = vld [vmem:[%s478] sm:$0xff]
        %v1847 = vld [vmem:[%s478 + $0x8] sm:$0xff]
        %v1848 = vmul.f32 %v1846, 0.587
        %v1849 = vmul.f32 %v1847, 0.587
        %v1850 = vadd.f32 %v1844, %v1848
        %v1851 = vadd.f32 %v1845, %v1849
        %v1852 = vld [vmem:[%s481] sm:$0xff]
        %v1853 = vld [vmem:[%s481 + $0x8] sm:$0xff]
        %v1854 = vmul.f32 %v1852, 0.114
        %v1855 = vmul.f32 %v1853, 0.114
        %v1856 = vadd.f32 %v1850, %v1854
        %v1857 = vadd.f32 %v1851, %v1855
        %1858 = vst.msk [vmem:[#allocation3 + $0x20] sm:$0xff] %vm569, %v1856
        %1859 = vst.msk [vmem:[#allocation3 + $0x38] sm:$0xff] %vm569, %v1857
        %v1860 = vld [vmem:[#allocation3 + $0x20] sm:$0xff]
        %v1861 = vld [vmem:[#allocation3 + $0x38] sm:$0xff]
        %v1862 = vld [vmem:[#allocation3 + $0x50] sm:$0xff]
        %v1863 = vld [vmem:[#allocation3 + $0x18] sm:$0xff]
        %v1864 = vld [vmem:[#allocation3 + $0x30] sm:$0xff]
        %v1865 = vld [vmem:[#allocation3 + $0x48] sm:$0xff]
        %1872 = vrot.lane.b32.xlu0 %v1863, 1
        %v1873 = vpop.permute.xlu0 %1872
        %1874 = vrot.lane.b32.xlu0 %v1860, 1
        %v1875 = vpop.permute.xlu0 %1874
        %1876 = vrot.lane.b32.xlu0 %v1864, 1
        %v1877 = vpop.permute.xlu0 %1876
        %1878 = vrot.lane.b32.xlu0 %v1861, 1
        %v1879 = vpop.permute.xlu0 %1878
        %1880 = vrot.lane.b32.xlu0 %v1865, 1
        %v1881 = vpop.permute.xlu0 %1880
        %1882 = vrot.lane.b32.xlu0 %v1862, 1
        %v1883 = vpop.permute.xlu0 %1882
        %v1884 = vsel %vm930, %v1873, %v1875
        %v1885 = vsel %vm930, %v1877, %v1879
        %v1886 = vsel %vm930, %v1881, %v1883
        %v1890 = vsub.f32 %v1860, %v1884
        %v1891 = vsub.f32 %v1861, %v1885
        %v1892 = vsub.f32 %v1862, %v1886
        %v1893 = vand.u32 2147483647, %v1890
        %v1894 = vand.u32 2147483647, %v1891
        %v1895 = vand.u32 2147483647, %v1892
        %1896 = vst [vmem:[#allocation4 + $0x20] sm:$0xff] %v1893
        %1897 = vst [vmem:[#allocation4 + $0x38] sm:$0xff] %v1894
        %1898 = vst [vmem:[#allocation4 + $0x50] sm:$0xff] %v1895
        %v1899 = vld [vmem:[#allocation4] sm:$0x80]
        %v1900 = vld [vmem:[#allocation4 + $0x8] sm:$0x80]
        %v1901 = vld [vmem:[#allocation4 + $0x18] sm:$0xff]
        %v1902 = vld [vmem:[#allocation4 + $0x20] sm:$0xff]
        %v1903 = vld [vmem:[#allocation4 + $0x30] sm:$0xff]
        %v1904 = vld [vmem:[#allocation4 + $0x38] sm:$0xff]
        %v1905 = vld [vmem:[#allocation4 + $0x48] sm:$0x7f]
        %v1906 = vld [vmem:[#allocation4 + $0x50] sm:$0x7f]
        %v1907 = vadd.f32 %v1899, 0.0
        %v1908 = vadd.f32 %v1900, 0.0
        %v1909 = vadd.f32 %v1901, 0.0
        %v1910 = vadd.f32 %v1902, 0.0
        %v1911 = vadd.f32 %v1903, 0.0
        %v1912 = vadd.f32 %v1904, 0.0
        %v1913 = vadd.f32 %v1905, 0.0
        %v1914 = vadd.f32 %v1906, 0.0
        %1919 = vrot.lane.b32.xlu0 %v1900, 127
        %v1920 = vpop.permute.xlu0 %1919
        %1921 = vrot.lane.b32.xlu0 %v1902, 127
        %v1922 = vpop.permute.xlu0 %1921
        %1923 = vrot.lane.b32.xlu0 %v1904, 127
        %v1924 = vpop.permute.xlu0 %1923
        %1925 = vrot.lane.b32.xlu0 %v1906, 127
        %v1926 = vpop.permute.xlu0 %1925
        %v1931 = vadd.f32 %v1907, %v1920
        %v1932 = vadd.f32 %v1908, %v1920
        %v1933 = vadd.f32 %v1909, %v1922
        %v1934 = vadd.f32 %v1910, %v1922
        %v1935 = vadd.f32 %v1911, %v1924
        %v1936 = vadd.f32 %v1912, %v1924
        %v1937 = vadd.f32 %v1913, %v1926
        %v1938 = vadd.f32 %v1914, %v1926
        %v1939 = vld [vmem:[#allocation4 + $0x10] sm:$0x80]
        %v1940 = vld [vmem:[#allocation4 + $0x28] sm:$0xff]
        %v1941 = vld [vmem:[#allocation4 + $0x40] sm:$0xff]
        %v1942 = vld [vmem:[#allocation4 + $0x58] sm:$0x7f]
        %1947 = vrot.lane.b32.xlu0 %v1900, 126
        %v1948 = vpop.permute.xlu0 %1947
        %1949 = vrot.lane.b32.xlu0 %v1939, 126
        %v1950 = vpop.permute.xlu0 %1949
        %1951 = vrot.lane.b32.xlu0 %v1902, 126
        %v1952 = vpop.permute.xlu0 %1951
        %1953 = vrot.lane.b32.xlu0 %v1940, 126
        %v1954 = vpop.permute.xlu0 %1953
        %1955 = vrot.lane.b32.xlu0 %v1904, 126
        %v1956 = vpop.permute.xlu0 %1955
        %1957 = vrot.lane.b32.xlu0 %v1941, 126
        %v1958 = vpop.permute.xlu0 %1957
        %1959 = vrot.lane.b32.xlu0 %v1906, 126
        %v1960 = vpop.permute.xlu0 %1959
        %1961 = vrot.lane.b32.xlu0 %v1942, 126
        %v1962 = vpop.permute.xlu0 %1961
        %v1963 = vsel %vm1010, %v1948, %v1950
        %v1964 = vsel %vm1010, %v1952, %v1954
        %v1965 = vsel %vm1010, %v1956, %v1958
        %v1966 = vsel %vm1010, %v1960, %v1962
        %v1975 = vadd.f32 %v1931, %v1948
        %v1976 = vadd.f32 %v1932, %v1963
        %v1977 = vadd.f32 %v1933, %v1952
        %v1978 = vadd.f32 %v1934, %v1964
        %v1979 = vadd.f32 %v1935, %v1956
        %v1980 = vadd.f32 %v1936, %v1965
        %v1981 = vadd.f32 %v1937, %v1960
        %v1982 = vadd.f32 %v1938, %v1966
        %v1983 = vld [vmem:[#allocation4 + $0x48] sm:$0xff]
        %v1984 = vld [vmem:[#allocation4 + $0x50] sm:$0xff]
        %v1989 = vrot.slane %v1901, 1
        %v1990 = vrot.slane %v1902, 1
        %v1991 = vrot.slane %v1903, 1
        %v1992 = vsel %vm1037, %v1989, %v1991
        %v1993 = vrot.slane %v1904, 1
        %v1994 = vsel %vm1037, %v1990, %v1993
        %v1995 = vrot.slane %v1983, 1
        %v1996 = vsel %vm1037, %v1991, %v1995
        %v1997 = vrot.slane %v1984, 1
        %v1998 = vsel %vm1037, %v1993, %v1997
        %v2007 = vadd.f32 %v1975, %v1989
        %v2008 = vadd.f32 %v1976, %v1990
        %v2009 = vadd.f32 %v1977, %v1992
        %v2010 = vadd.f32 %v1978, %v1994
        %v2011 = vadd.f32 %v1979, %v1996
        %v2012 = vadd.f32 %v1980, %v1998
        %v2013 = vadd.f32 %v1981, %v1995
        %v2014 = vadd.f32 %v1982, %v1997
        %2015 = vrot.lane.b32.xlu0 %v1990, 127
        %v2016 = vpop.permute.xlu0 %2015
        %2017 = vrot.lane.b32.xlu0 %v1994, 127
        %v2018 = vpop.permute.xlu0 %2017
        %2019 = vrot.lane.b32.xlu0 %v1998, 127
        %v2020 = vpop.permute.xlu0 %2019
        %2021 = vrot.lane.b32.xlu0 %v1997, 127
        %v2022 = vpop.permute.xlu0 %2021
        %v2027 = vadd.f32 %v2007, %v2016
        %v2028 = vadd.f32 %v2008, %v2016
        %v2029 = vadd.f32 %v2009, %v2018
        %v2030 = vadd.f32 %v2010, %v2018
        %v2031 = vadd.f32 %v2011, %v2020
        %v2032 = vadd.f32 %v2012, %v2020
        %v2033 = vadd.f32 %v2013, %v2022
        %v2034 = vadd.f32 %v2014, %v2022
        %v2035 = vld [vmem:[#allocation4 + $0x58] sm:$0xff]
        %v2037 = vrot.slane %v1940, 1
        %v2038 = vrot.slane %v1941, 1
        %v2039 = vsel %vm1037, %v2037, %v2038
        %v2040 = vrot.slane %v2035, 1
        %v2041 = vsel %vm1037, %v2038, %v2040
        %2042 = vrot.lane.b32.xlu0 %v1990, 126
        %v2043 = vpop.permute.xlu0 %2042
        %2044 = vrot.lane.b32.xlu0 %v2037, 126
        %v2045 = vpop.permute.xlu0 %2044
        %2046 = vrot.lane.b32.xlu0 %v1994, 126
        %v2047 = vpop.permute.xlu0 %2046
        %2048 = vrot.lane.b32.xlu0 %v2039, 126
        %v2049 = vpop.permute.xlu0 %2048
        %2050 = vrot.lane.b32.xlu0 %v1998, 126
        %v2051 = vpop.permute.xlu0 %2050
        %2052 = vrot.lane.b32.xlu0 %v2041, 126
        %v2053 = vpop.permute.xlu0 %2052
        %2054 = vrot.lane.b32.xlu0 %v1997, 126
        %v2055 = vpop.permute.xlu0 %2054
        %2056 = vrot.lane.b32.xlu0 %v2040, 126
        %v2057 = vpop.permute.xlu0 %2056
        %v2058 = vsel %vm1010, %v2043, %v2045
        %v2059 = vsel %vm1010, %v2047, %v2049
        %v2060 = vsel %vm1010, %v2051, %v2053
        %v2061 = vsel %vm1010, %v2055, %v2057
        %v2070 = vadd.f32 %v2027, %v2043
        %v2071 = vadd.f32 %v2028, %v2058
        %v2072 = vadd.f32 %v2029, %v2047
        %v2073 = vadd.f32 %v2030, %v2059
        %v2074 = vadd.f32 %v2031, %v2051
        %v2075 = vadd.f32 %v2032, %v2060
        %v2076 = vadd.f32 %v2033, %v2055
        %v2077 = vadd.f32 %v2034, %v2061
        %v2078 = vld [vmem:[#allocation4 + $0x18] sm:$0xfe]
        %v2079 = vld [vmem:[#allocation4 + $0x20] sm:$0xfe]
        %v2080 = vld [vmem:[#allocation4 + $0x60] sm:$0x1]
        %v2081 = vld [vmem:[#allocation4 + $0x68] sm:$0x1]
        %v2086 = vrot.slane %v2078, 2
        %v2087 = vrot.slane %v2079, 2
        %v2088 = vrot.slane %v1903, 2
        %v2089 = vsel %vm1135, %v2086, %v2088
        %v2090 = vrot.slane %v1904, 2
        %v2091 = vsel %vm1135, %v2087, %v2090
        %v2092 = vrot.slane %v1983, 2
        %v2093 = vsel %vm1135, %v2088, %v2092
        %v2094 = vrot.slane %v1984, 2
        %v2095 = vsel %vm1135, %v2090, %v2094
        %v2096 = vrot.slane %v2080, 2
        %v2097 = vsel %vm1135, %v2092, %v2096
        %v2098 = vrot.slane %v2081, 2
        %v2099 = vsel %vm1135, %v2094, %v2098
        %v2108 = vadd.f32 %v2070, %v2086
        %v2109 = vadd.f32 %v2071, %v2087
        %v2110 = vadd.f32 %v2072, %v2089
        %v2111 = vadd.f32 %v2073, %v2091
        %v2112 = vadd.f32 %v2074, %v2093
        %v2113 = vadd.f32 %v2075, %v2095
        %v2114 = vadd.f32 %v2076, %v2097
        %v2115 = vadd.f32 %v2077, %v2099
        %2116 = vrot.lane.b32.xlu0 %v2087, 127
        %v2117 = vpop.permute.xlu0 %2116
        %2118 = vrot.lane.b32.xlu0 %v2091, 127
        %v2119 = vpop.permute.xlu0 %2118
        %2120 = vrot.lane.b32.xlu0 %v2095, 127
        %v2121 = vpop.permute.xlu0 %2120
        %2122 = vrot.lane.b32.xlu0 %v2099, 127
        %v2123 = vpop.permute.xlu0 %2122
        %v2128 = vadd.f32 %v2108, %v2117
        %v2129 = vadd.f32 %v2109, %v2117
        %v2130 = vadd.f32 %v2110, %v2119
        %v2131 = vadd.f32 %v2111, %v2119
        %v2132 = vadd.f32 %v2112, %v2121
        %v2133 = vadd.f32 %v2113, %v2121
        %v2134 = vadd.f32 %v2114, %v2123
        %v2135 = vadd.f32 %v2115, %v2123
        %v2136 = vld [vmem:[#allocation4 + $0x20] sm:$0xfe]
        %v2137 = vld [vmem:[#allocation4 + $0x28] sm:$0xfe]
        %v2138 = vld [vmem:[#allocation4 + $0x38] sm:$0xff]
        %v2139 = vld [vmem:[#allocation4 + $0x40] sm:$0xff]
        %v2140 = vld [vmem:[#allocation4 + $0x50] sm:$0xff]
        %v2141 = vld [vmem:[#allocation4 + $0x58] sm:$0xff]
        %v2142 = vld [vmem:[#allocation4 + $0x68] sm:$0x1]
        %v2143 = vld [vmem:[#allocation4 + $0x70] sm:$0x1]
        %v2152 = vrot.slane %v2136, 2
        %v2153 = vrot.slane %v2137, 2
        %v2154 = vrot.slane %v2138, 2
        %v2155 = vsel %vm1135, %v2152, %v2154
        %v2156 = vrot.slane %v2139, 2
        %v2157 = vsel %vm1135, %v2153, %v2156
        %v2158 = vrot.slane %v2140, 2
        %v2159 = vsel %vm1135, %v2154, %v2158
        %v2160 = vrot.slane %v2141, 2
        %v2161 = vsel %vm1135, %v2156, %v2160
        %v2162 = vrot.slane %v2142, 2
        %v2163 = vsel %vm1135, %v2158, %v2162
        %v2164 = vrot.slane %v2143, 2
        %v2165 = vsel %vm1135, %v2160, %v2164
        %2166 = vrot.lane.b32.xlu0 %v2152, 126
        %v2167 = vpop.permute.xlu0 %2166
        %2168 = vrot.lane.b32.xlu0 %v2153, 126
        %v2169 = vpop.permute.xlu0 %2168
        %2170 = vrot.lane.b32.xlu0 %v2155, 126
        %v2171 = vpop.permute.xlu0 %2170
        %2172 = vrot.lane.b32.xlu0 %v2157, 126
        %v2173 = vpop.permute.xlu0 %2172
        %2174 = vrot.lane.b32.xlu0 %v2159, 126
        %v2175 = vpop.permute.xlu0 %2174
        %2176 = vrot.lane.b32.xlu0 %v2161, 126
        %v2177 = vpop.permute.xlu0 %2176
        %2178 = vrot.lane.b32.xlu0 %v2163, 126
        %v2179 = vpop.permute.xlu0 %2178
        %2180 = vrot.lane.b32.xlu0 %v2165, 126
        %v2181 = vpop.permute.xlu0 %2180
        %v2182 = vsel %vm1010, %v2167, %v2169
        %v2183 = vsel %vm1010, %v2171, %v2173
        %v2184 = vsel %vm1010, %v2175, %v2177
        %v2185 = vsel %vm1010, %v2179, %v2181
        %v2194 = vadd.f32 %v2128, %v2167
        %v2195 = vadd.f32 %v2129, %v2182
        %v2196 = vadd.f32 %v2130, %v2171
        %v2197 = vadd.f32 %v2131, %v2183
        %v2198 = vadd.f32 %v2132, %v2175
        %v2199 = vadd.f32 %v2133, %v2184
        %v2200 = vadd.f32 %v2134, %v2179
        %v2201 = vadd.f32 %v2135, %v2185
        %v2202 = vmul.f32 %v2194, 0.11111111
        %v2203 = vmul.f32 %v2195, 0.11111111
        %v2204 = vmul.f32 %v2196, 0.11111111
        %v2205 = vmul.f32 %v2197, 0.11111111
        %v2206 = vmul.f32 %v2198, 0.11111111
        %v2207 = vmul.f32 %v2199, 0.11111111
        %v2208 = vmul.f32 %v2200, 0.11111111
        %v2209 = vmul.f32 %v2201, 0.11111111
        %v2210 = vld [vmem:[#allocation2 + $0x20] sm:$0xff]
        %v2211 = vld [vmem:[#allocation2 + $0x38] sm:$0xff]
        %v2212 = vld [vmem:[#allocation2 + $0x50] sm:$0xff]
        %v2213 = vld [vmem:[#allocation2 + $0x18] sm:$0xff]
        %v2214 = vld [vmem:[#allocation2 + $0x30] sm:$0xff]
        %v2215 = vld [vmem:[#allocation2 + $0x48] sm:$0xff]
        %2222 = vrot.lane.b32.xlu0 %v2213, 1
        %v2223 = vpop.permute.xlu0 %2222
        %2224 = vrot.lane.b32.xlu0 %v2210, 1
        %v2225 = vpop.permute.xlu0 %2224
        %2226 = vrot.lane.b32.xlu0 %v2214, 1
        %v2227 = vpop.permute.xlu0 %2226
        %2228 = vrot.lane.b32.xlu0 %v2211, 1
        %v2229 = vpop.permute.xlu0 %2228
        %2230 = vrot.lane.b32.xlu0 %v2215, 1
        %v2231 = vpop.permute.xlu0 %2230
        %2232 = vrot.lane.b32.xlu0 %v2212, 1
        %v2233 = vpop.permute.xlu0 %2232
        %v2234 = vsel %vm930, %v2223, %v2225
        %v2235 = vsel %vm930, %v2227, %v2229
        %v2236 = vsel %vm930, %v2231, %v2233
        %v2240 = vsub.f32 %v2210, %v2234
        %v2241 = vsub.f32 %v2211, %v2235
        %v2242 = vsub.f32 %v2212, %v2236
        %v2243 = vand.u32 2147483647, %v2240
        %v2244 = vand.u32 2147483647, %v2241
        %v2245 = vand.u32 2147483647, %v2242
        %v2246 = vmul.f32 %v2202, -10.0
        %v2247 = vmul.f32 %v2203, -10.0
        %v2248 = vmul.f32 %v2204, -10.0
        %v2249 = vmul.f32 %v2205, -10.0
        %v2250 = vmul.f32 %v2206, -10.0
        %v2251 = vmul.f32 %v2207, -10.0
        %v2252 = vmul.f32 %v2208, -10.0
        %v2253 = vmul.f32 %v2209, -10.0
        %v2254 = vmul.f32 %v2246, 1.442695
        %v2255 = vpow.pop %v2254
        %v2256 = vmul.f32 %v2247, 1.442695
        %v2257 = vpow.pop %v2256
        %v2258 = vmul.f32 %v2248, 1.442695
        %v2259 = vpow.pop %v2258
        %v2260 = vmul.f32 %v2249, 1.442695
        %v2261 = vpow.pop %v2260
        %v2262 = vmul.f32 %v2250, 1.442695
        %v2263 = vpow.pop %v2262
        %v2264 = vmul.f32 %v2251, 1.442695
        %v2265 = vpow.pop %v2264
        %v2266 = vmul.f32 %v2252, 1.442695
        %v2267 = vpow.pop %v2266
        %v2268 = vmul.f32 %v2253, 1.442695
        %v2269 = vpow.pop %v2268
        %v2278 = vrot.slane %v2255, 7
        %v2279 = vrot.slane %v2259, 7
        %v2280 = vsel %vm1328, %v2278, %v2279
        %v2281 = vrot.slane %v2257, 7
        %v2282 = vrot.slane %v2261, 7
        %v2283 = vsel %vm1328, %v2281, %v2282
        %v2284 = vrot.slane %v2263, 7
        %v2285 = vsel %vm1328, %v2279, %v2284
        %v2286 = vrot.slane %v2265, 7
        %v2287 = vsel %vm1328, %v2282, %v2286
        %v2288 = vrot.slane %v2267, 7
        %v2289 = vsel %vm1328, %v2284, %v2288
        %v2290 = vrot.slane %v2269, 7
        %v2291 = vsel %vm1328, %v2286, %v2290
        %2292 = vrot.lane.b32.xlu0 %v2280, 1
        %v2293 = vpop.permute.xlu0 %2292
        %2294 = vrot.lane.b32.xlu0 %v2283, 1
        %v2295 = vpop.permute.xlu0 %2294
        %2296 = vrot.lane.b32.xlu0 %v2285, 1
        %v2297 = vpop.permute.xlu0 %2296
        %2298 = vrot.lane.b32.xlu0 %v2287, 1
        %v2299 = vpop.permute.xlu0 %2298
        %2300 = vrot.lane.b32.xlu0 %v2289, 1
        %v2301 = vpop.permute.xlu0 %2300
        %2302 = vrot.lane.b32.xlu0 %v2291, 1
        %v2303 = vpop.permute.xlu0 %2302
        %v2304 = vsel %vm930, %v2293, %v2295
        %v2305 = vsel %vm930, %v2297, %v2299
        %v2306 = vsel %vm930, %v2301, %v2303
        %v2310 = vmul.f32 %v2243, %v2304
        %v2311 = vmul.f32 %v2244, %v2305
        %v2312 = vmul.f32 %v2245, %v2306
        %2313 = vadd.xlane.f32.xlu0 %v2310
        %v2314 = vpop.xlane.xlu0 %2313
        %2315 = vadd.xlane.f32.xlu0 %v2311
        %v2316 = vpop.xlane.xlu0 %2315
        %2317 = vadd.xlane.f32.xlu0 %v2312
        %v2318 = vpop.xlane.xlu0 %2317
        %v2319 = vadd.f32 %v2314, %v2316
        %v2320 = vadd.f32 %v2319, %v2318
        %v2321 = vrot.slane %v2320, 4
        %v2322 = vadd.f32 %v2320, %v2321
        %v2323 = vrot.slane %v2322, 2
        %v2324 = vadd.f32 %v2322, %v2323
        %v2325 = vrot.slane %v2324, 1
        %v2326 = vadd.f32 %v2324, %v2325
        %v2327 = vld [vmem:[#allocation3 + $0x20] sm:$0xff]
        %v2328 = vld [vmem:[#allocation3 + $0x38] sm:$0xff]
        %v2329 = vld [vmem:[#allocation3 + $0x50] sm:$0xff]
        %v2330 = vld [vmem:[#allocation3 + $0x8] sm:$0x80]
        %v2331 = vld [vmem:[#allocation3 + $0x50] sm:$0x7f]
        %v2336 = vrot.slane %v2330, 7
        %v2337 = vrot.slane %v2327, 7
        %v2338 = vsel %vm1328, %v2336, %v2337
        %v2339 = vrot.slane %v2328, 7
        %v2340 = vsel %vm1328, %v2337, %v2339
        %v2341 = vrot.slane %v2331, 7
        %v2342 = vsel %vm1328, %v2339, %v2341
        %v2346 = vsub.f32 %v2327, %v2338
        %v2347 = vsub.f32 %v2328, %v2340
        %v2348 = vsub.f32 %v2329, %v2342
        %v2349 = vand.u32 2147483647, %v2346
        %v2350 = vand.u32 2147483647, %v2347
        %v2351 = vand.u32 2147483647, %v2348
        %2352 = vst [vmem:[#allocation4 + $0x20] sm:$0xff] %v2349
        %2353 = vst [vmem:[#allocation4 + $0x38] sm:$0xff] %v2350
        %2354 = vst [vmem:[#allocation4 + $0x50] sm:$0xff] %v2351
        %v2355 = vld [vmem:[#allocation4] sm:$0x80]
        %v2356 = vld [vmem:[#allocation4 + $0x8] sm:$0x80]
        %v2357 = vld [vmem:[#allocation4 + $0x18] sm:$0xff]
        %v2358 = vld [vmem:[#allocation4 + $0x20] sm:$0xff]
        %v2359 = vld [vmem:[#allocation4 + $0x30] sm:$0xff]
        %v2360 = vld [vmem:[#allocation4 + $0x38] sm:$0xff]
        %v2361 = vld [vmem:[#allocation4 + $0x48] sm:$0x7f]
        %v2362 = vld [vmem:[#allocation4 + $0x50] sm:$0x7f]
        %v2363 = vadd.f32 %v2355, 0.0
        %v2364 = vadd.f32 %v2356, 0.0
        %v2365 = vadd.f32 %v2357, 0.0
        %v2366 = vadd.f32 %v2358, 0.0
        %v2367 = vadd.f32 %v2359, 0.0
        %v2368 = vadd.f32 %v2360, 0.0
        %v2369 = vadd.f32 %v2361, 0.0
        %v2370 = vadd.f32 %v2362, 0.0
        %2375 = vrot.lane.b32.xlu0 %v2356, 127
        %v2376 = vpop.permute.xlu0 %2375
        %2377 = vrot.lane.b32.xlu0 %v2358, 127
        %v2378 = vpop.permute.xlu0 %2377
        %2379 = vrot.lane.b32.xlu0 %v2360, 127
        %v2380 = vpop.permute.xlu0 %2379
        %2381 = vrot.lane.b32.xlu0 %v2362, 127
        %v2382 = vpop.permute.xlu0 %2381
        %v2387 = vadd.f32 %v2363, %v2376
        %v2388 = vadd.f32 %v2364, %v2376
        %v2389 = vadd.f32 %v2365, %v2378
        %v2390 = vadd.f32 %v2366, %v2378
        %v2391 = vadd.f32 %v2367, %v2380
        %v2392 = vadd.f32 %v2368, %v2380
        %v2393 = vadd.f32 %v2369, %v2382
        %v2394 = vadd.f32 %v2370, %v2382
        %v2395 = vld [vmem:[#allocation4 + $0x10] sm:$0x80]
        %v2396 = vld [vmem:[#allocation4 + $0x28] sm:$0xff]
        %v2397 = vld [vmem:[#allocation4 + $0x40] sm:$0xff]
        %v2398 = vld [vmem:[#allocation4 + $0x58] sm:$0x7f]
        %2403 = vrot.lane.b32.xlu0 %v2356, 126
        %v2404 = vpop.permute.xlu0 %2403
        %2405 = vrot.lane.b32.xlu0 %v2395, 126
        %v2406 = vpop.permute.xlu0 %2405
        %2407 = vrot.lane.b32.xlu0 %v2358, 126
        %v2408 = vpop.permute.xlu0 %2407
        %2409 = vrot.lane.b32.xlu0 %v2396, 126
        %v2410 = vpop.permute.xlu0 %2409
        %2411 = vrot.lane.b32.xlu0 %v2360, 126
        %v2412 = vpop.permute.xlu0 %2411
        %2413 = vrot.lane.b32.xlu0 %v2397, 126
        %v2414 = vpop.permute.xlu0 %2413
        %2415 = vrot.lane.b32.xlu0 %v2362, 126
        %v2416 = vpop.permute.xlu0 %2415
        %2417 = vrot.lane.b32.xlu0 %v2398, 126
        %v2418 = vpop.permute.xlu0 %2417
        %v2419 = vsel %vm1010, %v2404, %v2406
        %v2420 = vsel %vm1010, %v2408, %v2410
        %v2421 = vsel %vm1010, %v2412, %v2414
        %v2422 = vsel %vm1010, %v2416, %v2418
        %v2431 = vadd.f32 %v2387, %v2404
        %v2432 = vadd.f32 %v2388, %v2419
        %v2433 = vadd.f32 %v2389, %v2408
        %v2434 = vadd.f32 %v2390, %v2420
        %v2435 = vadd.f32 %v2391, %v2412
        %v2436 = vadd.f32 %v2392, %v2421
        %v2437 = vadd.f32 %v2393, %v2416
        %v2438 = vadd.f32 %v2394, %v2422
        %v2439 = vld [vmem:[#allocation4 + $0x48] sm:$0xff]
        %v2440 = vld [vmem:[#allocation4 + $0x50] sm:$0xff]
        %v2445 = vrot.slane %v2357, 1
        %v2446 = vrot.slane %v2358, 1
        %v2447 = vrot.slane %v2359, 1
        %v2448 = vsel %vm1037, %v2445, %v2447
        %v2449 = vrot.slane %v2360, 1
        %v2450 = vsel %vm1037, %v2446, %v2449
        %v2451 = vrot.slane %v2439, 1
        %v2452 = vsel %vm1037, %v2447, %v2451
        %v2453 = vrot.slane %v2440, 1
        %v2454 = vsel %vm1037, %v2449, %v2453
        %v2463 = vadd.f32 %v2431, %v2445
        %v2464 = vadd.f32 %v2432, %v2446
        %v2465 = vadd.f32 %v2433, %v2448
        %v2466 = vadd.f32 %v2434, %v2450
        %v2467 = vadd.f32 %v2435, %v2452
        %v2468 = vadd.f32 %v2436, %v2454
        %v2469 = vadd.f32 %v2437, %v2451
        %v2470 = vadd.f32 %v2438, %v2453
        %2471 = vrot.lane.b32.xlu0 %v2446, 127
        %v2472 = vpop.permute.xlu0 %2471
        %2473 = vrot.lane.b32.xlu0 %v2450, 127
        %v2474 = vpop.permute.xlu0 %2473
        %2475 = vrot.lane.b32.xlu0 %v2454, 127
        %v2476 = vpop.permute.xlu0 %2475
        %2477 = vrot.lane.b32.xlu0 %v2453, 127
        %v2478 = vpop.permute.xlu0 %2477
        %v2483 = vadd.f32 %v2463, %v2472
        %v2484 = vadd.f32 %v2464, %v2472
        %v2485 = vadd.f32 %v2465, %v2474
        %v2486 = vadd.f32 %v2466, %v2474
        %v2487 = vadd.f32 %v2467, %v2476
        %v2488 = vadd.f32 %v2468, %v2476
        %v2489 = vadd.f32 %v2469, %v2478
        %v2490 = vadd.f32 %v2470, %v2478
        %v2491 = vld [vmem:[#allocation4 + $0x58] sm:$0xff]
        %v2493 = vrot.slane %v2396, 1
        %v2494 = vrot.slane %v2397, 1
        %v2495 = vsel %vm1037, %v2493, %v2494
        %v2496 = vrot.slane %v2491, 1
        %v2497 = vsel %vm1037, %v2494, %v2496
        %2498 = vrot.lane.b32.xlu0 %v2446, 126
        %v2499 = vpop.permute.xlu0 %2498
        %2500 = vrot.lane.b32.xlu0 %v2493, 126
        %v2501 = vpop.permute.xlu0 %2500
        %2502 = vrot.lane.b32.xlu0 %v2450, 126
        %v2503 = vpop.permute.xlu0 %2502
        %2504 = vrot.lane.b32.xlu0 %v2495, 126
        %v2505 = vpop.permute.xlu0 %2504
        %2506 = vrot.lane.b32.xlu0 %v2454, 126
        %v2507 = vpop.permute.xlu0 %2506
        %2508 = vrot.lane.b32.xlu0 %v2497, 126
        %v2509 = vpop.permute.xlu0 %2508
        %2510 = vrot.lane.b32.xlu0 %v2453, 126
        %v2511 = vpop.permute.xlu0 %2510
        %2512 = vrot.lane.b32.xlu0 %v2496, 126
        %v2513 = vpop.permute.xlu0 %2512
        %v2514 = vsel %vm1010, %v2499, %v2501
        %v2515 = vsel %vm1010, %v2503, %v2505
        %v2516 = vsel %vm1010, %v2507, %v2509
        %v2517 = vsel %vm1010, %v2511, %v2513
        %v2526 = vadd.f32 %v2483, %v2499
        %v2527 = vadd.f32 %v2484, %v2514
        %v2528 = vadd.f32 %v2485, %v2503
        %v2529 = vadd.f32 %v2486, %v2515
        %v2530 = vadd.f32 %v2487, %v2507
        %v2531 = vadd.f32 %v2488, %v2516
        %v2532 = vadd.f32 %v2489, %v2511
        %v2533 = vadd.f32 %v2490, %v2517
        %v2534 = vld [vmem:[#allocation4 + $0x18] sm:$0xfe]
        %v2535 = vld [vmem:[#allocation4 + $0x20] sm:$0xfe]
        %v2536 = vld [vmem:[#allocation4 + $0x60] sm:$0x1]
        %v2537 = vld [vmem:[#allocation4 + $0x68] sm:$0x1]
        %v2542 = vrot.slane %v2534, 2
        %v2543 = vrot.slane %v2535, 2
        %v2544 = vrot.slane %v2359, 2
        %v2545 = vsel %vm1135, %v2542, %v2544
        %v2546 = vrot.slane %v2360, 2
        %v2547 = vsel %vm1135, %v2543, %v2546
        %v2548 = vrot.slane %v2439, 2
        %v2549 = vsel %vm1135, %v2544, %v2548
        %v2550 = vrot.slane %v2440, 2
        %v2551 = vsel %vm1135, %v2546, %v2550
        %v2552 = vrot.slane %v2536, 2
        %v2553 = vsel %vm1135, %v2548, %v2552
        %v2554 = vrot.slane %v2537, 2
        %v2555 = vsel %vm1135, %v2550, %v2554
        %v2564 = vadd.f32 %v2526, %v2542
        %v2565 = vadd.f32 %v2527, %v2543
        %v2566 = vadd.f32 %v2528, %v2545
        %v2567 = vadd.f32 %v2529, %v2547
        %v2568 = vadd.f32 %v2530, %v2549
        %v2569 = vadd.f32 %v2531, %v2551
        %v2570 = vadd.f32 %v2532, %v2553
        %v2571 = vadd.f32 %v2533, %v2555
        %2572 = vrot.lane.b32.xlu0 %v2543, 127
        %v2573 = vpop.permute.xlu0 %2572
        %2574 = vrot.lane.b32.xlu0 %v2547, 127
        %v2575 = vpop.permute.xlu0 %2574
        %2576 = vrot.lane.b32.xlu0 %v2551, 127
        %v2577 = vpop.permute.xlu0 %2576
        %2578 = vrot.lane.b32.xlu0 %v2555, 127
        %v2579 = vpop.permute.xlu0 %2578
        %v2584 = vadd.f32 %v2564, %v2573
        %v2585 = vadd.f32 %v2565, %v2573
        %v2586 = vadd.f32 %v2566, %v2575
        %v2587 = vadd.f32 %v2567, %v2575
        %v2588 = vadd.f32 %v2568, %v2577
        %v2589 = vadd.f32 %v2569, %v2577
        %v2590 = vadd.f32 %v2570, %v2579
        %v2591 = vadd.f32 %v2571, %v2579
        %v2592 = vld [vmem:[#allocation4 + $0x20] sm:$0xfe]
        %v2593 = vld [vmem:[#allocation4 + $0x28] sm:$0xfe]
        %v2594 = vld [vmem:[#allocation4 + $0x38] sm:$0xff]
        %v2595 = vld [vmem:[#allocation4 + $0x40] sm:$0xff]
        %v2596 = vld [vmem:[#allocation4 + $0x50] sm:$0xff]
        %v2597 = vld [vmem:[#allocation4 + $0x58] sm:$0xff]
        %v2598 = vld [vmem:[#allocation4 + $0x68] sm:$0x1]
        %v2599 = vld [vmem:[#allocation4 + $0x70] sm:$0x1]
        %v2608 = vrot.slane %v2592, 2
        %v2609 = vrot.slane %v2593, 2
        %v2610 = vrot.slane %v2594, 2
        %v2611 = vsel %vm1135, %v2608, %v2610
        %v2612 = vrot.slane %v2595, 2
        %v2613 = vsel %vm1135, %v2609, %v2612
        %v2614 = vrot.slane %v2596, 2
        %v2615 = vsel %vm1135, %v2610, %v2614
        %v2616 = vrot.slane %v2597, 2
        %v2617 = vsel %vm1135, %v2612, %v2616
        %v2618 = vrot.slane %v2598, 2
        %v2619 = vsel %vm1135, %v2614, %v2618
        %v2620 = vrot.slane %v2599, 2
        %v2621 = vsel %vm1135, %v2616, %v2620
        %2622 = vrot.lane.b32.xlu0 %v2608, 126
        %v2623 = vpop.permute.xlu0 %2622
        %2624 = vrot.lane.b32.xlu0 %v2609, 126
        %v2625 = vpop.permute.xlu0 %2624
        %2626 = vrot.lane.b32.xlu0 %v2611, 126
        %v2627 = vpop.permute.xlu0 %2626
        %2628 = vrot.lane.b32.xlu0 %v2613, 126
        %v2629 = vpop.permute.xlu0 %2628
        %2630 = vrot.lane.b32.xlu0 %v2615, 126
        %v2631 = vpop.permute.xlu0 %2630
        %2632 = vrot.lane.b32.xlu0 %v2617, 126
        %v2633 = vpop.permute.xlu0 %2632
        %2634 = vrot.lane.b32.xlu0 %v2619, 126
        %v2635 = vpop.permute.xlu0 %2634
        %2636 = vrot.lane.b32.xlu0 %v2621, 126
        %v2637 = vpop.permute.xlu0 %2636
        %v2638 = vsel %vm1010, %v2623, %v2625
        %v2639 = vsel %vm1010, %v2627, %v2629
        %v2640 = vsel %vm1010, %v2631, %v2633
        %v2641 = vsel %vm1010, %v2635, %v2637
        %v2650 = vadd.f32 %v2584, %v2623
        %v2651 = vadd.f32 %v2585, %v2638
        %v2652 = vadd.f32 %v2586, %v2627
        %v2653 = vadd.f32 %v2587, %v2639
        %v2654 = vadd.f32 %v2588, %v2631
        %v2655 = vadd.f32 %v2589, %v2640
        %v2656 = vadd.f32 %v2590, %v2635
        %v2657 = vadd.f32 %v2591, %v2641
        %v2658 = vmul.f32 %v2650, 0.11111111
        %v2659 = vmul.f32 %v2651, 0.11111111
        %v2660 = vmul.f32 %v2652, 0.11111111
        %v2661 = vmul.f32 %v2653, 0.11111111
        %v2662 = vmul.f32 %v2654, 0.11111111
        %v2663 = vmul.f32 %v2655, 0.11111111
        %v2664 = vmul.f32 %v2656, 0.11111111
        %v2665 = vmul.f32 %v2657, 0.11111111
        %v2666 = vld [vmem:[#allocation2 + $0x20] sm:$0xff]
        %v2667 = vld [vmem:[#allocation2 + $0x38] sm:$0xff]
        %v2668 = vld [vmem:[#allocation2 + $0x50] sm:$0xff]
        %v2669 = vld [vmem:[#allocation2 + $0x8] sm:$0x80]
        %v2670 = vld [vmem:[#allocation2 + $0x50] sm:$0x7f]
        %v2675 = vrot.slane %v2669, 7
        %v2676 = vrot.slane %v2666, 7
        %v2677 = vsel %vm1328, %v2675, %v2676
        %v2678 = vrot.slane %v2667, 7
        %v2679 = vsel %vm1328, %v2676, %v2678
        %v2680 = vrot.slane %v2670, 7
        %v2681 = vsel %vm1328, %v2678, %v2680
        %v2685 = vsub.f32 %v2666, %v2677
        %v2686 = vsub.f32 %v2667, %v2679
        %v2687 = vsub.f32 %v2668, %v2681
        %v2688 = vand.u32 2147483647, %v2685
        %v2689 = vand.u32 2147483647, %v2686
        %v2690 = vand.u32 2147483647, %v2687
        %v2691 = vmul.f32 %v2658, -10.0
        %v2692 = vmul.f32 %v2659, -10.0
        %v2693 = vmul.f32 %v2660, -10.0
        %v2694 = vmul.f32 %v2661, -10.0
        %v2695 = vmul.f32 %v2662, -10.0
        %v2696 = vmul.f32 %v2663, -10.0
        %v2697 = vmul.f32 %v2664, -10.0
        %v2698 = vmul.f32 %v2665, -10.0
        %v2699 = vmul.f32 %v2691, 1.442695
        %v2700 = vpow.pop %v2699
        %v2701 = vmul.f32 %v2692, 1.442695
        %v2702 = vpow.pop %v2701
        %v2703 = vmul.f32 %v2693, 1.442695
        %v2704 = vpow.pop %v2703
        %v2705 = vmul.f32 %v2694, 1.442695
        %v2706 = vpow.pop %v2705
        %v2707 = vmul.f32 %v2695, 1.442695
        %v2708 = vpow.pop %v2707
        %v2709 = vmul.f32 %v2696, 1.442695
        %v2710 = vpow.pop %v2709
        %v2711 = vmul.f32 %v2697, 1.442695
        %v2712 = vpow.pop %v2711
        %v2713 = vmul.f32 %v2698, 1.442695
        %v2714 = vpow.pop %v2713
        %v2723 = vrot.slane %v2700, 7
        %v2724 = vrot.slane %v2704, 7
        %v2725 = vsel %vm1328, %v2723, %v2724
        %v2726 = vrot.slane %v2702, 7
        %v2727 = vrot.slane %v2706, 7
        %v2728 = vsel %vm1328, %v2726, %v2727
        %v2729 = vrot.slane %v2708, 7
        %v2730 = vsel %vm1328, %v2724, %v2729
        %v2731 = vrot.slane %v2710, 7
        %v2732 = vsel %vm1328, %v2727, %v2731
        %v2733 = vrot.slane %v2712, 7
        %v2734 = vsel %vm1328, %v2729, %v2733
        %v2735 = vrot.slane %v2714, 7
        %v2736 = vsel %vm1328, %v2731, %v2735
        %2737 = vrot.lane.b32.xlu0 %v2725, 1
        %v2738 = vpop.permute.xlu0 %2737
        %2739 = vrot.lane.b32.xlu0 %v2728, 1
        %v2740 = vpop.permute.xlu0 %2739
        %2741 = vrot.lane.b32.xlu0 %v2730, 1
        %v2742 = vpop.permute.xlu0 %2741
        %2743 = vrot.lane.b32.xlu0 %v2732, 1
        %v2744 = vpop.permute.xlu0 %2743
        %2745 = vrot.lane.b32.xlu0 %v2734, 1
        %v2746 = vpop.permute.xlu0 %2745
        %2747 = vrot.lane.b32.xlu0 %v2736, 1
        %v2748 = vpop.permute.xlu0 %2747
        %v2749 = vsel %vm930, %v2738, %v2740
        %v2750 = vsel %vm930, %v2742, %v2744
        %v2751 = vsel %vm930, %v2746, %v2748
        %v2755 = vmul.f32 %v2688, %v2749
        %v2756 = vmul.f32 %v2689, %v2750
        %v2757 = vmul.f32 %v2690, %v2751
        %2758 = vadd.xlane.f32.xlu0 %v2755
        %v2759 = vpop.xlane.xlu0 %2758
        %2760 = vadd.xlane.f32.xlu0 %v2756
        %v2761 = vpop.xlane.xlu0 %2760
        %2762 = vadd.xlane.f32.xlu0 %v2757
        %v2763 = vpop.xlane.xlu0 %2762
        %v2764 = vadd.f32 %v2759, %v2761
        %v2765 = vadd.f32 %v2764, %v2763
        %v2766 = vrot.slane %v2765, 4
        %v2767 = vadd.f32 %v2765, %v2766
        %v2768 = vrot.slane %v2767, 2
        %v2769 = vadd.f32 %v2767, %v2768
        %v2770 = vrot.slane %v2769, 1
        %v2771 = vadd.f32 %v2769, %v2770
        %v2772 = vadd.f32 %v2326, %v2771
        %v2773 = vlaneseq
        %v2774 = vand.u32 %v2773, 127
        %vm2775 = vcmp.eq.s32.totalorder %v2774, 0
        %v2776 = vsel %vm2775, %v582, 0.0
        %v2777 = vadd.f32 %v2776, 0.0
        %vm2778 = vcmp.eq.s32.totalorder %v2774, 1
        %v2779 = vsel %vm2778, %v653, 0.0
        %v2780 = vadd.f32 %v2777, %v2779
        %vm2781 = vcmp.eq.s32.totalorder %v2774, 2
        %v2782 = vsel %vm2781, %v724, 0.0
        %v2783 = vadd.f32 %v2780, %v2782
        %vm2784 = vcmp.eq.s32.totalorder %v2774, 3
        %v2785 = vsel %vm2784, %v795, 0.0
        %v2786 = vadd.f32 %v2783, %v2785
        %vm2787 = vcmp.eq.s32.totalorder %v2774, 4
        %v2788 = vsel %vm2787, %v824, 0.0
        %v2789 = vadd.f32 %v2786, %v2788
        %vm2790 = vcmp.eq.s32.totalorder %v2774, 5
        %v2791 = vsel %vm2790, %v1823, 0.0
        %v2792 = vadd.f32 %v2789, %v2791
        %vm2793 = vcmp.eq.s32.totalorder %v2774, 6
        %v2794 = vsel %vm2793, %v2772, 0.0
        %v2795 = vadd.f32 %v2792, %v2794
        %p2796 = scmp.eq.s32.totalorder %s29, 0
        // Predicated region
        $region69: #{retinex_loss.1} parent=43 // pred_check
          %p2797 = pneg %p2796
        $region70: #{retinex_loss.1} parent=43 // pred_check_branch
          %2799 = sbr.rel (%p2797) target = $region72
        $region71: #{retinex_loss.1} parent=43 // pred_region
          %vm2800 = vcmask 57344
          %2801 = vst.msk [vmem:[%s6] sm:$0x1] %vm2800, 0.0
        $region72: #{retinex_loss.1} parent=43 // pred_fallthru
          _
        %v2802 = vld [vmem:[%s6] sm:$0x1]
        %v2803 = vadd.f32 %v2802, %v2795
        %vm2804 = vcmask 57344
        %2805 = vst.msk [vmem:[%s6] sm:$0x1] %vm2804, %v2803
        // Predicated region
        $region73: #{retinex_loss.1} parent=43 // pred_check
          %p2806 = pneg %p198
        $region74: #{retinex_loss.1} parent=43 // pred_check_branch
          %2808 = sbr.rel (%p2806) target = $region76
        $region75: #{retinex_loss.1} parent=43 // pred_region
          _
        $region76: #{retinex_loss.1} parent=43 // pred_fallthru
          _
        // Predicated region
        $region77: #{retinex_loss.1} parent=43 // pred_check
          %p2809 = pneg %p198
        $region78: #{retinex_loss.1} parent=43 // pred_check_branch
          %2811 = sbr.rel (%p2809) target = $region80
        $region79: #{retinex_loss.1} parent=43 // pred_region
          _
        $region80: #{retinex_loss.1} parent=43 // pred_fallthru
          _
      $region44: #{retinex_loss.1} parent=5 // pred_fallthru
        _
      %p2812 = scmp.le.s32.totalorder 2, %s24
      // Predicated region
      $region81: #{retinex_loss.1} parent=5 // pred_check
        %p2813 = pneg %p2812
      $region82: #{retinex_loss.1} parent=5 // pred_check_branch
        %2815 = sbr.rel (%p2813) target = $region84
      $region83: #{retinex_loss.1} parent=5 // pred_region
        %s2816 = ssub.s32 %s24, 2
      $region84: #{retinex_loss.1} parent=5 // pred_fallthru
        _
    $region6: #{retinex_loss.1} parent=1 // loop_footer
      %s28 = sadd.s32 1, %s24
    $region7: #{retinex_loss.1} parent=1 // loop_footer_branch
      %23 = sbr.rel target = $region3
    $region8: #{retinex_loss.1} parent=1 // loop_exit
      _
    %2817 = vsyncpa [#allocation6], 1
    %s2818 = scalar_lea.sflag [#allocation6], 1
    %2819 = vsyncpa %s2818, 1
    %2820 = vsyncpa [#allocation8], 1
    %s2821 = scalar_lea.sflag [#allocation8], 1
    %2822 = vsyncpa %s2821, 1
    %2823 = vsyncpa [#allocation11], 1
    %s2824 = scalar_lea.sflag [#allocation11], 1
    %2825 = vsyncpa %s2824, 1
    %2826 = vsyncpa [#allocation14], 1
    %s2827 = scalar_lea.sflag [#allocation14], 1
    %2828 = vsyncpa %s2827, 1

</llo_original>
